<compile_context>
chip_gen: v7x
topology: tpu7x:2x2x1
jax: 0.10.0
libtpu: 0.0.40
codegen_flags: <defaults>
</compile_context>

<pallas_src>
import functools

import numpy as np

import jax
import jax.numpy as jnp
from jax.experimental import pallas as pl
from jax.experimental.pallas import tpu as pltpu


# ----------------------------------------------------------------------------------
# Small synthetic MoViNet config (shapes follow the module's __init__ conventions)
# ----------------------------------------------------------------------------------
CFG = {
    "conv1": {"cin": 3, "cout": 8},                                   # k=(1,3,3) s=(1,2,2) p=(0,1,1)
    "blocks": [
        {"cin": 8, "cexp": 16, "cout": 8, "has_res": False},          # k=(3,3,3) s=(1,1,1) p=(1,1,1)
        {"cin": 8, "cexp": 24, "cout": 16, "has_res": True},
    ],
    "conv7": {"cin": 16, "cout": 32},                                  # k=(1,1,1)
    "hidden": 40,
    "num_classes": 10,
}


def _make_divisible(v, divisor=8, min_value=None):
    if min_value is None:
        min_value = divisor
    new_v = max(min_value, int(v + divisor / 2) // divisor * divisor)
    if new_v < 0.9 * v:
        new_v += divisor
    return new_v


def _swish(x):
    return x * jax.nn.sigmoid(x)


# ----------------------------------------------------------------------------------
# The single fused kernel
# ----------------------------------------------------------------------------------
def _movinet_kernel(*refs, S, taps, blocks, c7, hidden, ncls):
    bf16 = jnp.bfloat16
    f32 = jnp.float32

    patches_ref, masks_ref, msum_ref, mexp_ref, lt_ref, w1_ref = refs[:6]
    nb = len(blocks)
    blk_refs = refs[6:6 + 6 * nb]
    w7_ref, w8_ref, w9_ref, hb_ref = refs[6 + 6 * nb:6 + 6 * nb + 4]
    o_ref = refs[6 + 6 * nb + 4]

    # ---- conv1: one K=(9*cin+1) matmul (folded BN + bias row) + Swish, channel-major out ----
    x = jnp.dot(w1_ref[...], patches_ref[...].astype(bf16),
                preferred_element_type=f32)                       # (c1, S)
    x = _swish(x)

    msum = msum_ref[...]
    mexp = mexp_ref[...]
    lt = lt_ref[...]

    # ---- bottleneck blocks (expand -> causal depthwise -> SE -> project -> residual) ----
    for bi, meta in enumerate(blocks):
        wer_ref, dww_ref, f1w_ref, f2w_ref, pw_ref, vec_ref = blk_refs[6 * bi:6 * bi + 6]
        cexp, cout, sq, has_res = meta["cexp"], meta["cout"], meta["sq"], meta["has_res"]

        vec = vec_ref[...]                                        # (cexp, 8) packed small vectors
        # expand (and, when present, residual 1x1x1 conv) share one MXU pass.
        er = jnp.dot(wer_ref[...], x.astype(bf16), preferred_element_type=f32)
        h = _swish(er[0:cexp, :] + vec[:, 0:1])                   # expanded activations (cexp, S)
        if has_res:
            r = er[cexp:cexp + cout, :] + vec[0:cout, 5:6]
        else:
            r = x                                                 # stride 1 and cin == cout

        # causal depthwise 3x3x3: lane-dense roll + masked FMA, 27 static taps.
        dww = dww_ref[...]                                        # (cexp, 27), BN scale folded in
        acc = jnp.zeros((cexp, S), f32)
        for k, off in enumerate(taps):
            g = pltpu.roll(h, (-off) % S, 1) if off != 0 else h
            acc = acc + (g * dww[:, k:k + 1]) * masks_ref[k:k + 1, :]
        y = _swish(acc + vec[:, 1:2])                             # folded BN bias + Swish

        # causal squeeze-excitation (first-call TemporalCGAvgPool3D state == 0).
        sm = jnp.dot(y, msum, preferred_element_type=f32)         # per-frame spatial mean (cexp, T)
        cum = jnp.dot(sm, lt, preferred_element_type=f32)         # causal cumulative temporal mean
        cat = jnp.concatenate([cum, sm], axis=0)                  # (2*cexp, T), order [cum, sm]
        se = _swish(jnp.dot(f1w_ref[...], cat, preferred_element_type=f32) + vec[0:sq, 2:3])
        gate = jax.nn.sigmoid(jnp.dot(f2w_ref[...], se, preferred_element_type=f32)
                              + vec[:, 3:4])                      # (cexp, T)
        gexp = jnp.dot(gate, mexp, preferred_element_type=f32)    # broadcast gate over space

        # project (folded BN, no activation) + residual with runtime alpha.
        proj = (jnp.dot(pw_ref[...], (y * gexp).astype(bf16), preferred_element_type=f32)
                + vec[0:cout, 4:5])
        alpha = vec[0:1, 6:7]
        x = r + alpha * proj                                      # (cout, S)

    # ---- head: conv7 (+BN+Swish) -> causal global average -> classifier ----
    c7a = _swish(jnp.dot(w7_ref[...], x.astype(bf16), preferred_element_type=f32)
                 + hb_ref[0:c7, 0:1])                             # (c7, S)
    # spatial mean per frame -> TemporalCGAvgPool3D -> last step == global mean on first call.
    avg = jnp.sum(c7a, axis=1, keepdims=True) * (1.0 / S)         # (c7, 1)
    g = _swish(jnp.dot(w8_ref[...], avg, preferred_element_type=f32) + hb_ref[0:hidden, 1:2])
    # TODO(synk): nn.Dropout(p=0.2) is treated as inference-mode identity.
    logits = jnp.dot(w9_ref[...], g, preferred_element_type=f32) + hb_ref[0:ncls, 2:3]
    o_ref[...] = logits                                           # (ncls, 1)


def _const_spec(a):
    n = a.ndim
    return pl.BlockSpec(a.shape, lambda b, n=n: (0,) * n)


# ----------------------------------------------------------------------------------
# Forward wrapper: builds im2col patches / structural constants and calls the kernel once.
# ----------------------------------------------------------------------------------
def movinet_forward(x_ncdhw, params):
    B, Cin, T, H, W = x_ncdhw.shape
    Ho = (H + 2 - 3) // 2 + 1
    Wo = (W + 2 - 3) // 2 + 1
    HW = Ho * Wo
    S = T * HW

    # conv1 im2col (channel-major patches) + a ones row so the folded bias rides the matmul.
    x32 = x_ncdhw.astype(jnp.float32)
    xp = jnp.pad(x32, ((0, 0), (0, 0), (0, 0), (1, 1), (1, 1)))
    tap_views = [xp[:, :, :, dh:dh + 2 * Ho:2, dw:dw + 2 * Wo:2]
                 for dh in range(3) for dw in range(3)]            # each (B, Cin, T, Ho, Wo)
    patches = jnp.stack(tap_views, axis=1).reshape(B, 9 * Cin, S)
    patches = jnp.concatenate([patches, jnp.ones((B, 1, S), jnp.float32)], axis=1)

    # Structural constants (numpy -> baked as compile-time data, shared by both blocks).
    idx = np.arange(S)
    tt, hh, ww = idx // HW, (idx // Wo) % Ho, idx % Wo
    taps, masks = [], []
    for kt in range(3):
        for kh in range(3):
            for kw in range(3):
                dt, dh, dw = kt - 2, kh - 1, kw - 1                # causal: temporal pad = 2 zeros
                taps.append(dt * HW + dh * Wo + dw)
                valid = ((tt + dt >= 0) & (hh + dh >= 0) & (hh + dh < Ho)
                         & (ww + dw >= 0) & (ww + dw < Wo))
                masks.append(valid.astype(np.float32))
    masks = jnp.asarray(np.stack(masks, axis=0))                   # (27, S)
    msum_np = np.zeros((S, T), np.float32)
    msum_np[idx, tt] = 1.0 / HW
    mexp_np = np.zeros((T, S), np.float32)
    mexp_np[tt, idx] = 1.0
    lt_np = (np.tril(np.ones((T, T), np.float32))
             / np.arange(1, T + 1, dtype=np.float32)[:, None]).T   # causal cumulative-mean matrix
    msum, mexp, lt = jnp.asarray(msum_np), jnp.asarray(mexp_np), jnp.asarray(lt_np)

    # Static per-block metadata derived from parameter shapes.
    blocks_meta = []
    for blk in params["blocks"]:
        cexp = blk["dww"].shape[0]
        cout = blk["pw"].shape[0]
        sq = blk["f1w"].shape[0]
        has_res = blk["wer"].shape[0] > cexp
        assert has_res or blk["wer"].shape[1] == cout, "identity residual needs cin == cout"
        blocks_meta.append(dict(cexp=cexp, cout=cout, sq=sq, has_res=has_res))

    c7 = params["w7"].shape[0]
    hidden = params["w8"].shape[0]
    ncls = params["w9"].shape[0]

    args = [patches, masks, msum, mexp, lt, params["w1"]]
    in_specs = [
        pl.BlockSpec((None, 9 * Cin + 1, S), lambda b: (b, 0, 0)),
        _const_spec(masks), _const_spec(msum), _const_spec(mexp), _const_spec(lt),
        _const_spec(params["w1"]),
    ]
    for blk in params["blocks"]:
        for name in ("wer", "dww", "f1w", "f2w", "pw", "vec"):
            args.append(blk[name])
            in_specs.append(_const_spec(blk[name]))
    for name in ("w7", "w8", "w9", "hb"):
        args.append(params[name])
        in_specs.append(_const_spec(params[name]))

    kern = functools.partial(_movinet_kernel, S=S, taps=tuple(taps),
                             blocks=tuple(blocks_meta), c7=c7, hidden=hidden, ncls=ncls)
    out = pl.pallas_call(
        kern,
        out_shape=jax.ShapeDtypeStruct((B, ncls, 1), jnp.float32),
        grid=(B,),
        in_specs=in_specs,
        out_specs=pl.BlockSpec((None, ncls, 1), lambda b: (b, 0, 0)),
        compiler_params=pltpu.CompilerParams(
            dimension_semantics=("parallel",),
            vmem_limit_bytes=32 * 1024 * 1024,
        ),
    )(*args)
    return out[:, :, 0]                                            # (B, num_classes) == x.flatten(1)


# ----------------------------------------------------------------------------------
# Deterministic parameter initialization (already in fused-kernel format: channel-major,
# BN folded, MXU conv weights pre-cast to bf16, small vectors packed).
# ----------------------------------------------------------------------------------
def init_params(key):
    kit = iter(jax.random.split(key, 64))

    def rnd(shape, fan_in):
        return jax.random.normal(next(kit), shape, jnp.float32) * jnp.sqrt(2.0 / fan_in)

    def small(shape):
        return jax.random.normal(next(kit), shape, jnp.float32) * 0.01

    def bn_fold(c, eps=1e-3):  # gamma=1, beta=0, running_mean=0, running_var=1
        gamma = jnp.ones((c,), jnp.float32)
        beta = jnp.zeros((c,), jnp.float32)
        mean = jnp.zeros((c,), jnp.float32)
        var = jnp.ones((c,), jnp.float32)
        s = gamma / jnp.sqrt(var + eps)
        return s, beta - mean * s

    params = {}
    cin1, c1 = CFG["conv1"]["cin"], CFG["conv1"]["cout"]
    w = rnd((9 * cin1, c1), 9 * cin1)
    s, b = bn_fold(c1)
    w1aug = jnp.concatenate([w * s[None, :], b[None, :]], axis=0)   # (9*cin+1, c1), bias row last
    params["w1"] = w1aug.T.astype(jnp.bfloat16)                     # (c1, 9*cin+1)

    params["blocks"] = []
    for cfg in CFG["blocks"]:
        cin, cexp, cout, has_res = cfg["cin"], cfg["cexp"], cfg["cout"], cfg["has_res"]
        sq = _make_divisible(cexp // 4 * 2, 8)                      # causal -> se_multiplier = 2
        blk = {}
        ew = rnd((cin, cexp), cin)
        se_, eb = bn_fold(cexp)
        ew = ew * se_[None, :]
        if has_res:
            rw = rnd((cin, cout), cin)
            sr, rb = bn_fold(cout)
            wer = jnp.concatenate([ew, rw * sr[None, :]], axis=1)   # (cin, cexp+cout)
        else:
            rb = jnp.zeros((cout,), jnp.float32)
            wer = ew
        blk["wer"] = wer.T.astype(jnp.bfloat16)                     # (cexp[+cout], cin)

        dscale, dbias = bn_fold(cexp)
        blk["dww"] = rnd((cexp, 27), 27) * dscale[:, None]          # BN scale folded into taps

        f1w = rnd((2 * cexp, sq), 2 * cexp)
        f1b = small((sq,))
        f2w = rnd((sq, cexp), sq)
        f2b = small((cexp,))
        blk["f1w"] = f1w.T                                          # (sq, 2*cexp), cols [cum | sm]
        blk["f2w"] = f2w.T                                          # (cexp, sq)

        pw = rnd((cexp, cout), cexp)
        sp, pb = bn_fold(cout)
        blk["pw"] = (pw * sp[None, :]).T.astype(jnp.bfloat16)       # (cout, cexp)

        # Packed per-block vectors (columns): eb, dbias, f1b, f2b, pb, rb, alpha.
        vec = jnp.zeros((cexp, 8), jnp.float32)
        vec = vec.at[:, 0].set(eb)
        vec = vec.at[:, 1].set(dbias)
        vec = vec.at[:sq, 2].set(f1b)
        vec = vec.at[:, 3].set(f2b)
        vec = vec.at[:cout, 4].set(pb)
        vec = vec.at[:cout, 5].set(rb)
        vec = vec.at[0, 6].set(0.0)      # alpha: matches nn.Parameter(torch.tensor(0.0)) init,
        blk["vec"] = vec                 # runtime value -> trained alphas need no recompile.
        params["blocks"].append(blk)

    c7in, c7 = CFG["conv7"]["cin"], CFG["conv7"]["cout"]
    w7 = rnd((c7in, c7), c7in)
    s7, b7 = bn_fold(c7)
    params["w7"] = (w7 * s7[None, :]).T.astype(jnp.bfloat16)        # (c7, c7in)

    hidden, ncls = CFG["hidden"], CFG["num_classes"]
    w8 = rnd((c7, hidden), c7)
    b8 = small((hidden,))
    w9 = rnd((hidden, ncls), hidden)
    b9 = small((ncls,))
    params["w8"] = w8.T                                             # (hidden, c7)
    params["w9"] = w9.T                                             # (ncls, hidden)
    hb = jnp.zeros((max(hidden, c7, ncls), 3), jnp.float32)
    hb = hb.at[:c7, 0].set(b7)
    hb = hb.at[:hidden, 1].set(b8)
    hb = hb.at[:ncls, 2].set(b9)
    params["hb"] = hb
    return params


if __name__ == "__main__":
    key = jax.random.PRNGKey(0)
    pkey, xkey = jax.random.split(key)
    params = init_params(pkey)
    # PyTorch-style NCDHW input: (B=2, C=3, T=4, H=16, W=16)
    x = jax.random.normal(xkey, (2, 3, 4, 16, 16), jnp.float32)
    fwd = jax.jit(movinet_forward)
    out = jax.block_until_ready(fwd(x, params))
    assert out.shape == (2, CFG["num_classes"]), out.shape
    assert bool(jnp.all(jnp.isfinite(out)))
    print("KERNEL_OK")
</pallas_src>

<mosaic_0001>
module attributes {stable_mosaic.version = 11 : i64} {
  func.func @_movinet_kernel(%arg0: i32, %arg1: memref<1x28x256xf32, #tpu.memory_space<vmem>>, %arg2: memref<27x256xf32, #tpu.memory_space<vmem>>, %arg3: memref<256x4xf32, #tpu.memory_space<vmem>>, %arg4: memref<4x256xf32, #tpu.memory_space<vmem>>, %arg5: memref<4x4xf32, #tpu.memory_space<vmem>>, %arg6: memref<8x28xbf16, #tpu.memory_space<vmem>>, %arg7: memref<16x8xbf16, #tpu.memory_space<vmem>>, %arg8: memref<16x27xf32, #tpu.memory_space<vmem>>, %arg9: memref<8x32xf32, #tpu.memory_space<vmem>>, %arg10: memref<16x8xf32, #tpu.memory_space<vmem>>, %arg11: memref<8x16xbf16, #tpu.memory_space<vmem>>, %arg12: memref<16x8xf32, #tpu.memory_space<vmem>>, %arg13: memref<40x8xbf16, #tpu.memory_space<vmem>>, %arg14: memref<24x27xf32, #tpu.memory_space<vmem>>, %arg15: memref<16x48xf32, #tpu.memory_space<vmem>>, %arg16: memref<24x16xf32, #tpu.memory_space<vmem>>, %arg17: memref<16x24xbf16, #tpu.memory_space<vmem>>, %arg18: memref<24x8xf32, #tpu.memory_space<vmem>>, %arg19: memref<32x16xbf16, #tpu.memory_space<vmem>>, %arg20: memref<40x32xf32, #tpu.memory_space<vmem>>, %arg21: memref<10x40xf32, #tpu.memory_space<vmem>>, %arg22: memref<40x3xf32, #tpu.memory_space<vmem>>, %arg23: memref<1x10x1xf32, #tpu.memory_space<vmem>>) attributes {dimension_semantics = [#tpu.dimension_semantics<parallel>], iteration_bounds = array<i64: 2>, scalar_prefetch = 0 : i64, scratch_operands = 0 : i64, tpu.core_type = #tpu.core_type<tc>, window_params = [{transform_indices = @transform_0, window_bounds = array<i64: 1, 28, 256>}, {pipeline_mode = #tpu.pipeline_mode<synchronous>, transform_indices = @transform_1, window_bounds = array<i64: 27, 256>}, {pipeline_mode = #tpu.pipeline_mode<synchronous>, transform_indices = @transform_2, window_bounds = array<i64: 256, 4>}, {pipeline_mode = #tpu.pipeline_mode<synchronous>, transform_indices = @transform_3, window_bounds = array<i64: 4, 256>}, {pipeline_mode = #tpu.pipeline_mode<synchronous>, transform_indices = @transform_4, window_bounds = array<i64: 4, 4>}, {pipeline_mode = #tpu.pipeline_mode<synchronous>, transform_indices = @transform_5, window_bounds = array<i64: 8, 28>}, {pipeline_mode = #tpu.pipeline_mode<synchronous>, transform_indices = @transform_6, window_bounds = array<i64: 16, 8>}, {pipeline_mode = #tpu.pipeline_mode<synchronous>, transform_indices = @transform_7, window_bounds = array<i64: 16, 27>}, {pipeline_mode = #tpu.pipeline_mode<synchronous>, transform_indices = @transform_8, window_bounds = array<i64: 8, 32>}, {pipeline_mode = #tpu.pipeline_mode<synchronous>, transform_indices = @transform_9, window_bounds = array<i64: 16, 8>}, {pipeline_mode = #tpu.pipeline_mode<synchronous>, transform_indices = @transform_10, window_bounds = array<i64: 8, 16>}, {pipeline_mode = #tpu.pipeline_mode<synchronous>, transform_indices = @transform_11, window_bounds = array<i64: 16, 8>}, {pipeline_mode = #tpu.pipeline_mode<synchronous>, transform_indices = @transform_12, window_bounds = array<i64: 40, 8>}, {pipeline_mode = #tpu.pipeline_mode<synchronous>, transform_indices = @transform_13, window_bounds = array<i64: 24, 27>}, {pipeline_mode = #tpu.pipeline_mode<synchronous>, transform_indices = @transform_14, window_bounds = array<i64: 16, 48>}, {pipeline_mode = #tpu.pipeline_mode<synchronous>, transform_indices = @transform_15, window_bounds = array<i64: 24, 16>}, {pipeline_mode = #tpu.pipeline_mode<synchronous>, transform_indices = @transform_16, window_bounds = array<i64: 16, 24>}, {pipeline_mode = #tpu.pipeline_mode<synchronous>, transform_indices = @transform_17, window_bounds = array<i64: 24, 8>}, {pipeline_mode = #tpu.pipeline_mode<synchronous>, transform_indices = @transform_18, window_bounds = array<i64: 32, 16>}, {pipeline_mode = #tpu.pipeline_mode<synchronous>, transform_indices = @transform_19, window_bounds = array<i64: 40, 32>}, {pipeline_mode = #tpu.pipeline_mode<synchronous>, transform_indices = @transform_20, window_bounds = array<i64: 10, 40>}, {pipeline_mode = #tpu.pipeline_mode<synchronous>, transform_indices = @transform_21, window_bounds = array<i64: 40, 3>}, {transform_indices = @transform_22, window_bounds = array<i64: 1, 10, 1>}]} {
    %c0 = arith.constant 0 : index
    %c0_0 = arith.constant 0 : index
    %0 = vector.load %arg6[%c0, %c0_0] : memref<8x28xbf16, #tpu.memory_space<vmem>>, vector<8x28xbf16>
    %c0_1 = arith.constant 0 : index
    %c0_2 = arith.constant 0 : index
    %c0_3 = arith.constant 0 : index
    %1 = vector.load %arg1[%c0_1, %c0_2, %c0_3] : memref<1x28x256xf32, #tpu.memory_space<vmem>>, vector<1x28x256xf32>
    %2 = vector.shape_cast %1 : vector<1x28x256xf32> to vector<28x256xf32>
    %3 = arith.truncf %2 : vector<28x256xf32> to vector<28x256xbf16>
    %cst = arith.constant dense<0.000000e+00> : vector<8x256xf32>
    %4 = tpu.matmul %0, %3, %cst {dimension_numbers = #tpu.dot_dimension_numbers<[1], [0], [0], [1], [0, 0, 1, 1], [], []>} : vector<8x28xbf16>, vector<28x256xbf16>, vector<8x256xf32> -> vector<8x256xf32>
    %5 = arith.negf %4 : vector<8x256xf32>
    %6 = math.exp %5 : vector<8x256xf32>
    %cst_4 = arith.constant 1.000000e+00 : f32
    %7 = vector.broadcast %cst_4 : f32 to vector<8x256xf32>
    %8 = arith.addf %7, %6 : vector<8x256xf32>
    %9 = arith.divf %7, %8 : vector<8x256xf32>
    %10 = arith.mulf %4, %9 : vector<8x256xf32>
    %c0_5 = arith.constant 0 : index
    %c0_6 = arith.constant 0 : index
    %11 = vector.load %arg3[%c0_5, %c0_6] : memref<256x4xf32, #tpu.memory_space<vmem>>, vector<256x4xf32>
    %c0_7 = arith.constant 0 : index
    %c0_8 = arith.constant 0 : index
    %12 = vector.load %arg4[%c0_7, %c0_8] : memref<4x256xf32, #tpu.memory_space<vmem>>, vector<4x256xf32>
    %c0_9 = arith.constant 0 : index
    %c0_10 = arith.constant 0 : index
    %13 = vector.load %arg5[%c0_9, %c0_10] : memref<4x4xf32, #tpu.memory_space<vmem>>, vector<4x4xf32>
    %c0_11 = arith.constant 0 : index
    %c0_12 = arith.constant 0 : index
    %14 = vector.load %arg12[%c0_11, %c0_12] : memref<16x8xf32, #tpu.memory_space<vmem>>, vector<16x8xf32>
    %c0_13 = arith.constant 0 : index
    %c0_14 = arith.constant 0 : index
    %15 = vector.load %arg7[%c0_13, %c0_14] : memref<16x8xbf16, #tpu.memory_space<vmem>>, vector<16x8xbf16>
    %16 = arith.truncf %10 : vector<8x256xf32> to vector<8x256xbf16>
    %cst_15 = arith.constant dense<0.000000e+00> : vector<16x256xf32>
    %17 = tpu.matmul %15, %16, %cst_15 {dimension_numbers = #tpu.dot_dimension_numbers<[1], [0], [0], [1], [0, 0, 1, 1], [], []>} : vector<16x8xbf16>, vector<8x256xbf16>, vector<16x256xf32> -> vector<16x256xf32>
    %18 = vector.extract_strided_slice %14 {offsets = [0, 0], sizes = [16, 1], strides = [1, 1]} : vector<16x8xf32> to vector<16x1xf32>
    %19 = vector.broadcast %18 : vector<16x1xf32> to vector<16x256xf32>
    %20 = arith.addf %17, %19 : vector<16x256xf32>
    %21 = arith.negf %20 : vector<16x256xf32>
    %22 = math.exp %21 : vector<16x256xf32>
    %cst_16 = arith.constant 1.000000e+00 : f32
    %23 = vector.broadcast %cst_16 : f32 to vector<16x256xf32>
    %24 = arith.addf %23, %22 : vector<16x256xf32>
    %25 = arith.divf %23, %24 : vector<16x256xf32>
    %26 = arith.mulf %20, %25 : vector<16x256xf32>
    %c0_17 = arith.constant 0 : index
    %c0_18 = arith.constant 0 : index
    %27 = vector.load %arg8[%c0_17, %c0_18] : memref<16x27xf32, #tpu.memory_space<vmem>>, vector<16x27xf32>
    %cst_19 = arith.constant 0.000000e+00 : f32
    %28 = vector.broadcast %cst_19 : f32 to vector<16x256xf32>
    %c137_i32 = arith.constant 137 : i32
    %29 = tpu.dynamic_rotate %26 by %c137_i32 dim 1 : vector<16x256xf32>, i32 -> vector<16x256xf32>
    %30 = vector.extract_strided_slice %27 {offsets = [0, 0], sizes = [16, 1], strides = [1, 1]} : vector<16x27xf32> to vector<16x1xf32>
    %31 = vector.broadcast %30 : vector<16x1xf32> to vector<16x256xf32>
    %32 = arith.mulf %29, %31 : vector<16x256xf32>
    %c0_20 = arith.constant 0 : index
    %c0_21 = arith.constant 0 : index
    %33 = vector.load %arg2[%c0_20, %c0_21] : memref<27x256xf32, #tpu.memory_space<vmem>>, vector<1x256xf32>
    %34 = vector.broadcast %33 : vector<1x256xf32> to vector<16x256xf32>
    %35 = arith.mulf %32, %34 : vector<16x256xf32>
    %36 = arith.addf %28, %35 : vector<16x256xf32>
    %c136_i32 = arith.constant 136 : i32
    %37 = tpu.dynamic_rotate %26 by %c136_i32 dim 1 : vector<16x256xf32>, i32 -> vector<16x256xf32>
    %38 = vector.extract_strided_slice %27 {offsets = [0, 1], sizes = [16, 1], strides = [1, 1]} : vector<16x27xf32> to vector<16x1xf32>
    %39 = vector.broadcast %38 : vector<16x1xf32> to vector<16x256xf32>
    %40 = arith.mulf %37, %39 : vector<16x256xf32>
    %c1 = arith.constant 1 : index
    %c0_22 = arith.constant 0 : index
    %41 = vector.load %arg2[%c1, %c0_22] : memref<27x256xf32, #tpu.memory_space<vmem>>, vector<1x256xf32>
    %42 = vector.broadcast %41 : vector<1x256xf32> to vector<16x256xf32>
    %43 = arith.mulf %40, %42 : vector<16x256xf32>
    %44 = arith.addf %36, %43 : vector<16x256xf32>
    %c135_i32 = arith.constant 135 : i32
    %45 = tpu.dynamic_rotate %26 by %c135_i32 dim 1 : vector<16x256xf32>, i32 -> vector<16x256xf32>
    %46 = vector.extract_strided_slice %27 {offsets = [0, 2], sizes = [16, 1], strides = [1, 1]} : vector<16x27xf32> to vector<16x1xf32>
    %47 = vector.broadcast %46 : vector<16x1xf32> to vector<16x256xf32>
    %48 = arith.mulf %45, %47 : vector<16x256xf32>
    %c2 = arith.constant 2 : index
    %c0_23 = arith.constant 0 : index
    %49 = vector.load %arg2[%c2, %c0_23] : memref<27x256xf32, #tpu.memory_space<vmem>>, vector<1x256xf32>
    %50 = vector.broadcast %49 : vector<1x256xf32> to vector<16x256xf32>
    %51 = arith.mulf %48, %50 : vector<16x256xf32>
    %52 = arith.addf %44, %51 : vector<16x256xf32>
    %c129_i32 = arith.constant 129 : i32
    %53 = tpu.dynamic_rotate %26 by %c129_i32 dim 1 : vector<16x256xf32>, i32 -> vector<16x256xf32>
    %54 = vector.extract_strided_slice %27 {offsets = [0, 3], sizes = [16, 1], strides = [1, 1]} : vector<16x27xf32> to vector<16x1xf32>
    %55 = vector.broadcast %54 : vector<16x1xf32> to vector<16x256xf32>
    %56 = arith.mulf %53, %55 : vector<16x256xf32>
    %c3 = arith.constant 3 : index
    %c0_24 = arith.constant 0 : index
    %57 = vector.load %arg2[%c3, %c0_24] : memref<27x256xf32, #tpu.memory_space<vmem>>, vector<1x256xf32>
    %58 = vector.broadcast %57 : vector<1x256xf32> to vector<16x256xf32>
    %59 = arith.mulf %56, %58 : vector<16x256xf32>
    %60 = arith.addf %52, %59 : vector<16x256xf32>
    %c128_i32 = arith.constant 128 : i32
    %61 = tpu.dynamic_rotate %26 by %c128_i32 dim 1 : vector<16x256xf32>, i32 -> vector<16x256xf32>
    %62 = vector.extract_strided_slice %27 {offsets = [0, 4], sizes = [16, 1], strides = [1, 1]} : vector<16x27xf32> to vector<16x1xf32>
    %63 = vector.broadcast %62 : vector<16x1xf32> to vector<16x256xf32>
    %64 = arith.mulf %61, %63 : vector<16x256xf32>
    %c4 = arith.constant 4 : index
    %c0_25 = arith.constant 0 : index
    %65 = vector.load %arg2[%c4, %c0_25] : memref<27x256xf32, #tpu.memory_space<vmem>>, vector<1x256xf32>
    %66 = vector.broadcast %65 : vector<1x256xf32> to vector<16x256xf32>
    %67 = arith.mulf %64, %66 : vector<16x256xf32>
    %68 = arith.addf %60, %67 : vector<16x256xf32>
    %c127_i32 = arith.constant 127 : i32
    %69 = tpu.dynamic_rotate %26 by %c127_i32 dim 1 : vector<16x256xf32>, i32 -> vector<16x256xf32>
    %70 = vector.extract_strided_slice %27 {offsets = [0, 5], sizes = [16, 1], strides = [1, 1]} : vector<16x27xf32> to vector<16x1xf32>
    %71 = vector.broadcast %70 : vector<16x1xf32> to vector<16x256xf32>
    %72 = arith.mulf %69, %71 : vector<16x256xf32>
    %c5 = arith.constant 5 : index
    %c0_26 = arith.constant 0 : index
    %73 = vector.load %arg2[%c5, %c0_26] : memref<27x256xf32, #tpu.memory_space<vmem>>, vector<1x256xf32>
    %74 = vector.broadcast %73 : vector<1x256xf32> to vector<16x256xf32>
    %75 = arith.mulf %72, %74 : vector<16x256xf32>
    %76 = arith.addf %68, %75 : vector<16x256xf32>
    %c121_i32 = arith.constant 121 : i32
    %77 = tpu.dynamic_rotate %26 by %c121_i32 dim 1 : vector<16x256xf32>, i32 -> vector<16x256xf32>
    %78 = vector.extract_strided_slice %27 {offsets = [0, 6], sizes = [16, 1], strides = [1, 1]} : vector<16x27xf32> to vector<16x1xf32>
    %79 = vector.broadcast %78 : vector<16x1xf32> to vector<16x256xf32>
    %80 = arith.mulf %77, %79 : vector<16x256xf32>
    %c6 = arith.constant 6 : index
    %c0_27 = arith.constant 0 : index
    %81 = vector.load %arg2[%c6, %c0_27] : memref<27x256xf32, #tpu.memory_space<vmem>>, vector<1x256xf32>
    %82 = vector.broadcast %81 : vector<1x256xf32> to vector<16x256xf32>
    %83 = arith.mulf %80, %82 : vector<16x256xf32>
    %84 = arith.addf %76, %83 : vector<16x256xf32>
    %c120_i32 = arith.constant 120 : i32
    %85 = tpu.dynamic_rotate %26 by %c120_i32 dim 1 : vector<16x256xf32>, i32 -> vector<16x256xf32>
    %86 = vector.extract_strided_slice %27 {offsets = [0, 7], sizes = [16, 1], strides = [1, 1]} : vector<16x27xf32> to vector<16x1xf32>
    %87 = vector.broadcast %86 : vector<16x1xf32> to vector<16x256xf32>
    %88 = arith.mulf %85, %87 : vector<16x256xf32>
    %c7 = arith.constant 7 : index
    %c0_28 = arith.constant 0 : index
    %89 = vector.load %arg2[%c7, %c0_28] : memref<27x256xf32, #tpu.memory_space<vmem>>, vector<1x256xf32>
    %90 = vector.broadcast %89 : vector<1x256xf32> to vector<16x256xf32>
    %91 = arith.mulf %88, %90 : vector<16x256xf32>
    %92 = arith.addf %84, %91 : vector<16x256xf32>
    %c119_i32 = arith.constant 119 : i32
    %93 = tpu.dynamic_rotate %26 by %c119_i32 dim 1 : vector<16x256xf32>, i32 -> vector<16x256xf32>
    %94 = vector.extract_strided_slice %27 {offsets = [0, 8], sizes = [16, 1], strides = [1, 1]} : vector<16x27xf32> to vector<16x1xf32>
    %95 = vector.broadcast %94 : vector<16x1xf32> to vector<16x256xf32>
    %96 = arith.mulf %93, %95 : vector<16x256xf32>
    %c8 = arith.constant 8 : index
    %c0_29 = arith.constant 0 : index
    %97 = vector.load %arg2[%c8, %c0_29] : memref<27x256xf32, #tpu.memory_space<vmem>>, vector<1x256xf32>
    %98 = vector.broadcast %97 : vector<1x256xf32> to vector<16x256xf32>
    %99 = arith.mulf %96, %98 : vector<16x256xf32>
    %100 = arith.addf %92, %99 : vector<16x256xf32>
    %c73_i32 = arith.constant 73 : i32
    %101 = tpu.dynamic_rotate %26 by %c73_i32 dim 1 : vector<16x256xf32>, i32 -> vector<16x256xf32>
    %102 = vector.extract_strided_slice %27 {offsets = [0, 9], sizes = [16, 1], strides = [1, 1]} : vector<16x27xf32> to vector<16x1xf32>
    %103 = vector.broadcast %102 : vector<16x1xf32> to vector<16x256xf32>
    %104 = arith.mulf %101, %103 : vector<16x256xf32>
    %c9 = arith.constant 9 : index
    %c0_30 = arith.constant 0 : index
    %105 = vector.load %arg2[%c9, %c0_30] : memref<27x256xf32, #tpu.memory_space<vmem>>, vector<1x256xf32>
    %106 = vector.broadcast %105 : vector<1x256xf32> to vector<16x256xf32>
    %107 = arith.mulf %104, %106 : vector<16x256xf32>
    %108 = arith.addf %100, %107 : vector<16x256xf32>
    %c72_i32 = arith.constant 72 : i32
    %109 = tpu.dynamic_rotate %26 by %c72_i32 dim 1 : vector<16x256xf32>, i32 -> vector<16x256xf32>
    %110 = vector.extract_strided_slice %27 {offsets = [0, 10], sizes = [16, 1], strides = [1, 1]} : vector<16x27xf32> to vector<16x1xf32>
    %111 = vector.broadcast %110 : vector<16x1xf32> to vector<16x256xf32>
    %112 = arith.mulf %109, %111 : vector<16x256xf32>
    %c10 = arith.constant 10 : index
    %c0_31 = arith.constant 0 : index
    %113 = vector.load %arg2[%c10, %c0_31] : memref<27x256xf32, #tpu.memory_space<vmem>>, vector<1x256xf32>
    %114 = vector.broadcast %113 : vector<1x256xf32> to vector<16x256xf32>
    %115 = arith.mulf %112, %114 : vector<16x256xf32>
    %116 = arith.addf %108, %115 : vector<16x256xf32>
    %c71_i32 = arith.constant 71 : i32
    %117 = tpu.dynamic_rotate %26 by %c71_i32 dim 1 : vector<16x256xf32>, i32 -> vector<16x256xf32>
    %118 = vector.extract_strided_slice %27 {offsets = [0, 11], sizes = [16, 1], strides = [1, 1]} : vector<16x27xf32> to vector<16x1xf32>
    %119 = vector.broadcast %118 : vector<16x1xf32> to vector<16x256xf32>
    %120 = arith.mulf %117, %119 : vector<16x256xf32>
    %c11 = arith.constant 11 : index
    %c0_32 = arith.constant 0 : index
    %121 = vector.load %arg2[%c11, %c0_32] : memref<27x256xf32, #tpu.memory_space<vmem>>, vector<1x256xf32>
    %122 = vector.broadcast %121 : vector<1x256xf32> to vector<16x256xf32>
    %123 = arith.mulf %120, %122 : vector<16x256xf32>
    %124 = arith.addf %116, %123 : vector<16x256xf32>
    %c65_i32 = arith.constant 65 : i32
    %125 = tpu.dynamic_rotate %26 by %c65_i32 dim 1 : vector<16x256xf32>, i32 -> vector<16x256xf32>
    %126 = vector.extract_strided_slice %27 {offsets = [0, 12], sizes = [16, 1], strides = [1, 1]} : vector<16x27xf32> to vector<16x1xf32>
    %127 = vector.broadcast %126 : vector<16x1xf32> to vector<16x256xf32>
    %128 = arith.mulf %125, %127 : vector<16x256xf32>
    %c12 = arith.constant 12 : index
    %c0_33 = arith.constant 0 : index
    %129 = vector.load %arg2[%c12, %c0_33] : memref<27x256xf32, #tpu.memory_space<vmem>>, vector<1x256xf32>
    %130 = vector.broadcast %129 : vector<1x256xf32> to vector<16x256xf32>
    %131 = arith.mulf %128, %130 : vector<16x256xf32>
    %132 = arith.addf %124, %131 : vector<16x256xf32>
    %c64_i32 = arith.constant 64 : i32
    %133 = tpu.dynamic_rotate %26 by %c64_i32 dim 1 : vector<16x256xf32>, i32 -> vector<16x256xf32>
    %134 = vector.extract_strided_slice %27 {offsets = [0, 13], sizes = [16, 1], strides = [1, 1]} : vector<16x27xf32> to vector<16x1xf32>
    %135 = vector.broadcast %134 : vector<16x1xf32> to vector<16x256xf32>
    %136 = arith.mulf %133, %135 : vector<16x256xf32>
    %c13 = arith.constant 13 : index
    %c0_34 = arith.constant 0 : index
    %137 = vector.load %arg2[%c13, %c0_34] : memref<27x256xf32, #tpu.memory_space<vmem>>, vector<1x256xf32>
    %138 = vector.broadcast %137 : vector<1x256xf32> to vector<16x256xf32>
    %139 = arith.mulf %136, %138 : vector<16x256xf32>
    %140 = arith.addf %132, %139 : vector<16x256xf32>
    %c63_i32 = arith.constant 63 : i32
    %141 = tpu.dynamic_rotate %26 by %c63_i32 dim 1 : vector<16x256xf32>, i32 -> vector<16x256xf32>
    %142 = vector.extract_strided_slice %27 {offsets = [0, 14], sizes = [16, 1], strides = [1, 1]} : vector<16x27xf32> to vector<16x1xf32>
    %143 = vector.broadcast %142 : vector<16x1xf32> to vector<16x256xf32>
    %144 = arith.mulf %141, %143 : vector<16x256xf32>
    %c14 = arith.constant 14 : index
    %c0_35 = arith.constant 0 : index
    %145 = vector.load %arg2[%c14, %c0_35] : memref<27x256xf32, #tpu.memory_space<vmem>>, vector<1x256xf32>
    %146 = vector.broadcast %145 : vector<1x256xf32> to vector<16x256xf32>
    %147 = arith.mulf %144, %146 : vector<16x256xf32>
    %148 = arith.addf %140, %147 : vector<16x256xf32>
    %c57_i32 = arith.constant 57 : i32
    %149 = tpu.dynamic_rotate %26 by %c57_i32 dim 1 : vector<16x256xf32>, i32 -> vector<16x256xf32>
    %150 = vector.extract_strided_slice %27 {offsets = [0, 15], sizes = [16, 1], strides = [1, 1]} : vector<16x27xf32> to vector<16x1xf32>
    %151 = vector.broadcast %150 : vector<16x1xf32> to vector<16x256xf32>
    %152 = arith.mulf %149, %151 : vector<16x256xf32>
    %c15 = arith.constant 15 : index
    %c0_36 = arith.constant 0 : index
    %153 = vector.load %arg2[%c15, %c0_36] : memref<27x256xf32, #tpu.memory_space<vmem>>, vector<1x256xf32>
    %154 = vector.broadcast %153 : vector<1x256xf32> to vector<16x256xf32>
    %155 = arith.mulf %152, %154 : vector<16x256xf32>
    %156 = arith.addf %148, %155 : vector<16x256xf32>
    %c56_i32 = arith.constant 56 : i32
    %157 = tpu.dynamic_rotate %26 by %c56_i32 dim 1 : vector<16x256xf32>, i32 -> vector<16x256xf32>
    %158 = vector.extract_strided_slice %27 {offsets = [0, 16], sizes = [16, 1], strides = [1, 1]} : vector<16x27xf32> to vector<16x1xf32>
    %159 = vector.broadcast %158 : vector<16x1xf32> to vector<16x256xf32>
    %160 = arith.mulf %157, %159 : vector<16x256xf32>
    %c16 = arith.constant 16 : index
    %c0_37 = arith.constant 0 : index
    %161 = vector.load %arg2[%c16, %c0_37] : memref<27x256xf32, #tpu.memory_space<vmem>>, vector<1x256xf32>
    %162 = vector.broadcast %161 : vector<1x256xf32> to vector<16x256xf32>
    %163 = arith.mulf %160, %162 : vector<16x256xf32>
    %164 = arith.addf %156, %163 : vector<16x256xf32>
    %c55_i32 = arith.constant 55 : i32
    %165 = tpu.dynamic_rotate %26 by %c55_i32 dim 1 : vector<16x256xf32>, i32 -> vector<16x256xf32>
    %166 = vector.extract_strided_slice %27 {offsets = [0, 17], sizes = [16, 1], strides = [1, 1]} : vector<16x27xf32> to vector<16x1xf32>
    %167 = vector.broadcast %166 : vector<16x1xf32> to vector<16x256xf32>
    %168 = arith.mulf %165, %167 : vector<16x256xf32>
    %c17 = arith.constant 17 : index
    %c0_38 = arith.constant 0 : index
    %169 = vector.load %arg2[%c17, %c0_38] : memref<27x256xf32, #tpu.memory_space<vmem>>, vector<1x256xf32>
    %170 = vector.broadcast %169 : vector<1x256xf32> to vector<16x256xf32>
    %171 = arith.mulf %168, %170 : vector<16x256xf32>
    %172 = arith.addf %164, %171 : vector<16x256xf32>
    %c9_i32 = arith.constant 9 : i32
    %173 = tpu.dynamic_rotate %26 by %c9_i32 dim 1 : vector<16x256xf32>, i32 -> vector<16x256xf32>
    %174 = vector.extract_strided_slice %27 {offsets = [0, 18], sizes = [16, 1], strides = [1, 1]} : vector<16x27xf32> to vector<16x1xf32>
    %175 = vector.broadcast %174 : vector<16x1xf32> to vector<16x256xf32>
    %176 = arith.mulf %173, %175 : vector<16x256xf32>
    %c18 = arith.constant 18 : index
    %c0_39 = arith.constant 0 : index
    %177 = vector.load %arg2[%c18, %c0_39] : memref<27x256xf32, #tpu.memory_space<vmem>>, vector<1x256xf32>
    %178 = vector.broadcast %177 : vector<1x256xf32> to vector<16x256xf32>
    %179 = arith.mulf %176, %178 : vector<16x256xf32>
    %180 = arith.addf %172, %179 : vector<16x256xf32>
    %c8_i32 = arith.constant 8 : i32
    %181 = tpu.dynamic_rotate %26 by %c8_i32 dim 1 : vector<16x256xf32>, i32 -> vector<16x256xf32>
    %182 = vector.extract_strided_slice %27 {offsets = [0, 19], sizes = [16, 1], strides = [1, 1]} : vector<16x27xf32> to vector<16x1xf32>
    %183 = vector.broadcast %182 : vector<16x1xf32> to vector<16x256xf32>
    %184 = arith.mulf %181, %183 : vector<16x256xf32>
    %c19 = arith.constant 19 : index
    %c0_40 = arith.constant 0 : index
    %185 = vector.load %arg2[%c19, %c0_40] : memref<27x256xf32, #tpu.memory_space<vmem>>, vector<1x256xf32>
    %186 = vector.broadcast %185 : vector<1x256xf32> to vector<16x256xf32>
    %187 = arith.mulf %184, %186 : vector<16x256xf32>
    %188 = arith.addf %180, %187 : vector<16x256xf32>
    %c7_i32 = arith.constant 7 : i32
    %189 = tpu.dynamic_rotate %26 by %c7_i32 dim 1 : vector<16x256xf32>, i32 -> vector<16x256xf32>
    %190 = vector.extract_strided_slice %27 {offsets = [0, 20], sizes = [16, 1], strides = [1, 1]} : vector<16x27xf32> to vector<16x1xf32>
    %191 = vector.broadcast %190 : vector<16x1xf32> to vector<16x256xf32>
    %192 = arith.mulf %189, %191 : vector<16x256xf32>
    %c20 = arith.constant 20 : index
    %c0_41 = arith.constant 0 : index
    %193 = vector.load %arg2[%c20, %c0_41] : memref<27x256xf32, #tpu.memory_space<vmem>>, vector<1x256xf32>
    %194 = vector.broadcast %193 : vector<1x256xf32> to vector<16x256xf32>
    %195 = arith.mulf %192, %194 : vector<16x256xf32>
    %196 = arith.addf %188, %195 : vector<16x256xf32>
    %c1_i32 = arith.constant 1 : i32
    %197 = tpu.dynamic_rotate %26 by %c1_i32 dim 1 : vector<16x256xf32>, i32 -> vector<16x256xf32>
    %198 = vector.extract_strided_slice %27 {offsets = [0, 21], sizes = [16, 1], strides = [1, 1]} : vector<16x27xf32> to vector<16x1xf32>
    %199 = vector.broadcast %198 : vector<16x1xf32> to vector<16x256xf32>
    %200 = arith.mulf %197, %199 : vector<16x256xf32>
    %c21 = arith.constant 21 : index
    %c0_42 = arith.constant 0 : index
    %201 = vector.load %arg2[%c21, %c0_42] : memref<27x256xf32, #tpu.memory_space<vmem>>, vector<1x256xf32>
    %202 = vector.broadcast %201 : vector<1x256xf32> to vector<16x256xf32>
    %203 = arith.mulf %200, %202 : vector<16x256xf32>
    %204 = arith.addf %196, %203 : vector<16x256xf32>
    %205 = vector.extract_strided_slice %27 {offsets = [0, 22], sizes = [16, 1], strides = [1, 1]} : vector<16x27xf32> to vector<16x1xf32>
    %206 = vector.broadcast %205 : vector<16x1xf32> to vector<16x256xf32>
    %207 = arith.mulf %26, %206 : vector<16x256xf32>
    %c22 = arith.constant 22 : index
    %c0_43 = arith.constant 0 : index
    %208 = vector.load %arg2[%c22, %c0_43] : memref<27x256xf32, #tpu.memory_space<vmem>>, vector<1x256xf32>
    %209 = vector.broadcast %208 : vector<1x256xf32> to vector<16x256xf32>
    %210 = arith.mulf %207, %209 : vector<16x256xf32>
    %211 = arith.addf %204, %210 : vector<16x256xf32>
    %c255_i32 = arith.constant 255 : i32
    %212 = tpu.dynamic_rotate %26 by %c255_i32 dim 1 : vector<16x256xf32>, i32 -> vector<16x256xf32>
    %213 = vector.extract_strided_slice %27 {offsets = [0, 23], sizes = [16, 1], strides = [1, 1]} : vector<16x27xf32> to vector<16x1xf32>
    %214 = vector.broadcast %213 : vector<16x1xf32> to vector<16x256xf32>
    %215 = arith.mulf %212, %214 : vector<16x256xf32>
    %c23 = arith.constant 23 : index
    %c0_44 = arith.constant 0 : index
    %216 = vector.load %arg2[%c23, %c0_44] : memref<27x256xf32, #tpu.memory_space<vmem>>, vector<1x256xf32>
    %217 = vector.broadcast %216 : vector<1x256xf32> to vector<16x256xf32>
    %218 = arith.mulf %215, %217 : vector<16x256xf32>
    %219 = arith.addf %211, %218 : vector<16x256xf32>
    %c249_i32 = arith.constant 249 : i32
    %220 = tpu.dynamic_rotate %26 by %c249_i32 dim 1 : vector<16x256xf32>, i32 -> vector<16x256xf32>
    %221 = vector.extract_strided_slice %27 {offsets = [0, 24], sizes = [16, 1], strides = [1, 1]} : vector<16x27xf32> to vector<16x1xf32>
    %222 = vector.broadcast %221 : vector<16x1xf32> to vector<16x256xf32>
    %223 = arith.mulf %220, %222 : vector<16x256xf32>
    %c24 = arith.constant 24 : index
    %c0_45 = arith.constant 0 : index
    %224 = vector.load %arg2[%c24, %c0_45] : memref<27x256xf32, #tpu.memory_space<vmem>>, vector<1x256xf32>
    %225 = vector.broadcast %224 : vector<1x256xf32> to vector<16x256xf32>
    %226 = arith.mulf %223, %225 : vector<16x256xf32>
    %227 = arith.addf %219, %226 : vector<16x256xf32>
    %c248_i32 = arith.constant 248 : i32
    %228 = tpu.dynamic_rotate %26 by %c248_i32 dim 1 : vector<16x256xf32>, i32 -> vector<16x256xf32>
    %229 = vector.extract_strided_slice %27 {offsets = [0, 25], sizes = [16, 1], strides = [1, 1]} : vector<16x27xf32> to vector<16x1xf32>
    %230 = vector.broadcast %229 : vector<16x1xf32> to vector<16x256xf32>
    %231 = arith.mulf %228, %230 : vector<16x256xf32>
    %c25 = arith.constant 25 : index
    %c0_46 = arith.constant 0 : index
    %232 = vector.load %arg2[%c25, %c0_46] : memref<27x256xf32, #tpu.memory_space<vmem>>, vector<1x256xf32>
    %233 = vector.broadcast %232 : vector<1x256xf32> to vector<16x256xf32>
    %234 = arith.mulf %231, %233 : vector<16x256xf32>
    %235 = arith.addf %227, %234 : vector<16x256xf32>
    %c247_i32 = arith.constant 247 : i32
    %236 = tpu.dynamic_rotate %26 by %c247_i32 dim 1 : vector<16x256xf32>, i32 -> vector<16x256xf32>
    %237 = vector.extract_strided_slice %27 {offsets = [0, 26], sizes = [16, 1], strides = [1, 1]} : vector<16x27xf32> to vector<16x1xf32>
    %238 = vector.broadcast %237 : vector<16x1xf32> to vector<16x256xf32>
    %239 = arith.mulf %236, %238 : vector<16x256xf32>
    %c26 = arith.constant 26 : index
    %c0_47 = arith.constant 0 : index
    %240 = vector.load %arg2[%c26, %c0_47] : memref<27x256xf32, #tpu.memory_space<vmem>>, vector<1x256xf32>
    %241 = vector.broadcast %240 : vector<1x256xf32> to vector<16x256xf32>
    %242 = arith.mulf %239, %241 : vector<16x256xf32>
    %243 = arith.addf %235, %242 : vector<16x256xf32>
    %244 = vector.extract_strided_slice %14 {offsets = [0, 1], sizes = [16, 1], strides = [1, 1]} : vector<16x8xf32> to vector<16x1xf32>
    %245 = vector.broadcast %244 : vector<16x1xf32> to vector<16x256xf32>
    %246 = arith.addf %243, %245 : vector<16x256xf32>
    %247 = arith.negf %246 : vector<16x256xf32>
    %248 = math.exp %247 : vector<16x256xf32>
    %cst_48 = arith.constant 1.000000e+00 : f32
    %249 = vector.broadcast %cst_48 : f32 to vector<16x256xf32>
    %250 = arith.addf %249, %248 : vector<16x256xf32>
    %251 = arith.divf %249, %250 : vector<16x256xf32>
    %252 = arith.mulf %246, %251 : vector<16x256xf32>
    %cst_49 = arith.constant dense<0.000000e+00> : vector<16x4xf32>
    %253 = tpu.matmul %252, %11, %cst_49 {dimension_numbers = #tpu.dot_dimension_numbers<[1], [0], [0], [1], [0, 0, 1, 1], [], []>} : vector<16x256xf32>, vector<256x4xf32>, vector<16x4xf32> -> vector<16x4xf32>
    %cst_50 = arith.constant dense<0.000000e+00> : vector<16x4xf32>
    %254 = tpu.matmul %253, %13, %cst_50 {dimension_numbers = #tpu.dot_dimension_numbers<[1], [0], [0], [1], [0, 0, 1, 1], [], []>} : vector<16x4xf32>, vector<4x4xf32>, vector<16x4xf32> -> vector<16x4xf32>
    %255 = tpu.concatenate %254, %253 in 0 : vector<16x4xf32>, vector<16x4xf32> -> vector<32x4xf32>
    %c0_51 = arith.constant 0 : index
    %c0_52 = arith.constant 0 : index
    %256 = vector.load %arg9[%c0_51, %c0_52] : memref<8x32xf32, #tpu.memory_space<vmem>>, vector<8x32xf32>
    %cst_53 = arith.constant dense<0.000000e+00> : vector<8x4xf32>
    %257 = tpu.matmul %256, %255, %cst_53 {dimension_numbers = #tpu.dot_dimension_numbers<[1], [0], [0], [1], [0, 0, 1, 1], [], []>} : vector<8x32xf32>, vector<32x4xf32>, vector<8x4xf32> -> vector<8x4xf32>
    %258 = vector.extract_strided_slice %14 {offsets = [0, 2], sizes = [8, 1], strides = [1, 1]} : vector<16x8xf32> to vector<8x1xf32>
    %259 = vector.broadcast %258 : vector<8x1xf32> to vector<8x4xf32>
    %260 = arith.addf %257, %259 : vector<8x4xf32>
    %261 = arith.negf %260 : vector<8x4xf32>
    %262 = math.exp %261 : vector<8x4xf32>
    %cst_54 = arith.constant 1.000000e+00 : f32
    %263 = vector.broadcast %cst_54 : f32 to vector<8x4xf32>
    %264 = arith.addf %263, %262 : vector<8x4xf32>
    %265 = arith.divf %263, %264 : vector<8x4xf32>
    %266 = arith.mulf %260, %265 : vector<8x4xf32>
    %c0_55 = arith.constant 0 : index
    %c0_56 = arith.constant 0 : index
    %267 = vector.load %arg10[%c0_55, %c0_56] : memref<16x8xf32, #tpu.memory_space<vmem>>, vector<16x8xf32>
    %cst_57 = arith.constant dense<0.000000e+00> : vector<16x4xf32>
    %268 = tpu.matmul %267, %266, %cst_57 {dimension_numbers = #tpu.dot_dimension_numbers<[1], [0], [0], [1], [0, 0, 1, 1], [], []>} : vector<16x8xf32>, vector<8x4xf32>, vector<16x4xf32> -> vector<16x4xf32>
    %269 = vector.extract_strided_slice %14 {offsets = [0, 3], sizes = [16, 1], strides = [1, 1]} : vector<16x8xf32> to vector<16x1xf32>
    %270 = vector.broadcast %269 : vector<16x1xf32> to vector<16x4xf32>
    %271 = arith.addf %268, %270 : vector<16x4xf32>
    %272 = arith.negf %271 : vector<16x4xf32>
    %273 = math.exp %272 : vector<16x4xf32>
    %cst_58 = arith.constant 1.000000e+00 : f32
    %274 = vector.broadcast %cst_58 : f32 to vector<16x4xf32>
    %275 = arith.addf %274, %273 : vector<16x4xf32>
    %276 = arith.divf %274, %275 : vector<16x4xf32>
    %cst_59 = arith.constant dense<0.000000e+00> : vector<16x256xf32>
    %277 = tpu.matmul %276, %12, %cst_59 {dimension_numbers = #tpu.dot_dimension_numbers<[1], [0], [0], [1], [0, 0, 1, 1], [], []>} : vector<16x4xf32>, vector<4x256xf32>, vector<16x256xf32> -> vector<16x256xf32>
    %c0_60 = arith.constant 0 : index
    %c0_61 = arith.constant 0 : index
    %278 = vector.load %arg11[%c0_60, %c0_61] : memref<8x16xbf16, #tpu.memory_space<vmem>>, vector<8x16xbf16>
    %279 = arith.mulf %252, %277 : vector<16x256xf32>
    %280 = arith.truncf %279 : vector<16x256xf32> to vector<16x256xbf16>
    %cst_62 = arith.constant dense<0.000000e+00> : vector<8x256xf32>
    %281 = tpu.matmul %278, %280, %cst_62 {dimension_numbers = #tpu.dot_dimension_numbers<[1], [0], [0], [1], [0, 0, 1, 1], [], []>} : vector<8x16xbf16>, vector<16x256xbf16>, vector<8x256xf32> -> vector<8x256xf32>
    %282 = vector.extract_strided_slice %14 {offsets = [0, 4], sizes = [8, 1], strides = [1, 1]} : vector<16x8xf32> to vector<8x1xf32>
    %283 = vector.broadcast %282 : vector<8x1xf32> to vector<8x256xf32>
    %284 = arith.addf %281, %283 : vector<8x256xf32>
    %285 = vector.extract_strided_slice %14 {offsets = [0, 6], sizes = [1, 1], strides = [1, 1]} : vector<16x8xf32> to vector<1x1xf32>
    %286 = vector.broadcast %285 : vector<1x1xf32> to vector<8x256xf32>
    %287 = arith.mulf %286, %284 : vector<8x256xf32>
    %288 = arith.addf %10, %287 : vector<8x256xf32>
    %c0_63 = arith.constant 0 : index
    %c0_64 = arith.constant 0 : index
    %289 = vector.load %arg18[%c0_63, %c0_64] : memref<24x8xf32, #tpu.memory_space<vmem>>, vector<24x8xf32>
    %c0_65 = arith.constant 0 : index
    %c0_66 = arith.constant 0 : index
    %290 = vector.load %arg13[%c0_65, %c0_66] : memref<40x8xbf16, #tpu.memory_space<vmem>>, vector<40x8xbf16>
    %291 = arith.truncf %288 : vector<8x256xf32> to vector<8x256xbf16>
    %cst_67 = arith.constant dense<0.000000e+00> : vector<40x256xf32>
    %292 = tpu.matmul %290, %291, %cst_67 {dimension_numbers = #tpu.dot_dimension_numbers<[1], [0], [0], [1], [0, 0, 1, 1], [], []>} : vector<40x8xbf16>, vector<8x256xbf16>, vector<40x256xf32> -> vector<40x256xf32>
    %293 = vector.extract_strided_slice %292 {offsets = [0, 0], sizes = [24, 256], strides = [1, 1]} : vector<40x256xf32> to vector<24x256xf32>
    %294 = vector.extract_strided_slice %289 {offsets = [0, 0], sizes = [24, 1], strides = [1, 1]} : vector<24x8xf32> to vector<24x1xf32>
    %295 = vector.broadcast %294 : vector<24x1xf32> to vector<24x256xf32>
    %296 = arith.addf %293, %295 : vector<24x256xf32>
    %297 = arith.negf %296 : vector<24x256xf32>
    %298 = math.exp %297 : vector<24x256xf32>
    %cst_68 = arith.constant 1.000000e+00 : f32
    %299 = vector.broadcast %cst_68 : f32 to vector<24x256xf32>
    %300 = arith.addf %299, %298 : vector<24x256xf32>
    %301 = arith.divf %299, %300 : vector<24x256xf32>
    %302 = arith.mulf %296, %301 : vector<24x256xf32>
    %303 = vector.extract_strided_slice %292 {offsets = [24, 0], sizes = [16, 256], strides = [1, 1]} : vector<40x256xf32> to vector<16x256xf32>
    %304 = vector.extract_strided_slice %289 {offsets = [0, 5], sizes = [16, 1], strides = [1, 1]} : vector<24x8xf32> to vector<16x1xf32>
    %305 = vector.broadcast %304 : vector<16x1xf32> to vector<16x256xf32>
    %306 = arith.addf %303, %305 : vector<16x256xf32>
    %c0_69 = arith.constant 0 : index
    %c0_70 = arith.constant 0 : index
    %307 = vector.load %arg14[%c0_69, %c0_70] : memref<24x27xf32, #tpu.memory_space<vmem>>, vector<24x27xf32>
    %cst_71 = arith.constant 0.000000e+00 : f32
    %308 = vector.broadcast %cst_71 : f32 to vector<24x256xf32>
    %c137_i32_72 = arith.constant 137 : i32
    %309 = tpu.dynamic_rotate %302 by %c137_i32_72 dim 1 : vector<24x256xf32>, i32 -> vector<24x256xf32>
    %310 = vector.extract_strided_slice %307 {offsets = [0, 0], sizes = [24, 1], strides = [1, 1]} : vector<24x27xf32> to vector<24x1xf32>
    %311 = vector.broadcast %310 : vector<24x1xf32> to vector<24x256xf32>
    %312 = arith.mulf %309, %311 : vector<24x256xf32>
    %c0_73 = arith.constant 0 : index
    %c0_74 = arith.constant 0 : index
    %313 = vector.load %arg2[%c0_73, %c0_74] : memref<27x256xf32, #tpu.memory_space<vmem>>, vector<1x256xf32>
    %314 = vector.broadcast %313 : vector<1x256xf32> to vector<24x256xf32>
    %315 = arith.mulf %312, %314 : vector<24x256xf32>
    %316 = arith.addf %308, %315 : vector<24x256xf32>
    %c136_i32_75 = arith.constant 136 : i32
    %317 = tpu.dynamic_rotate %302 by %c136_i32_75 dim 1 : vector<24x256xf32>, i32 -> vector<24x256xf32>
    %318 = vector.extract_strided_slice %307 {offsets = [0, 1], sizes = [24, 1], strides = [1, 1]} : vector<24x27xf32> to vector<24x1xf32>
    %319 = vector.broadcast %318 : vector<24x1xf32> to vector<24x256xf32>
    %320 = arith.mulf %317, %319 : vector<24x256xf32>
    %c1_76 = arith.constant 1 : index
    %c0_77 = arith.constant 0 : index
    %321 = vector.load %arg2[%c1_76, %c0_77] : memref<27x256xf32, #tpu.memory_space<vmem>>, vector<1x256xf32>
    %322 = vector.broadcast %321 : vector<1x256xf32> to vector<24x256xf32>
    %323 = arith.mulf %320, %322 : vector<24x256xf32>
    %324 = arith.addf %316, %323 : vector<24x256xf32>
    %c135_i32_78 = arith.constant 135 : i32
    %325 = tpu.dynamic_rotate %302 by %c135_i32_78 dim 1 : vector<24x256xf32>, i32 -> vector<24x256xf32>
    %326 = vector.extract_strided_slice %307 {offsets = [0, 2], sizes = [24, 1], strides = [1, 1]} : vector<24x27xf32> to vector<24x1xf32>
    %327 = vector.broadcast %326 : vector<24x1xf32> to vector<24x256xf32>
    %328 = arith.mulf %325, %327 : vector<24x256xf32>
    %c2_79 = arith.constant 2 : index
    %c0_80 = arith.constant 0 : index
    %329 = vector.load %arg2[%c2_79, %c0_80] : memref<27x256xf32, #tpu.memory_space<vmem>>, vector<1x256xf32>
    %330 = vector.broadcast %329 : vector<1x256xf32> to vector<24x256xf32>
    %331 = arith.mulf %328, %330 : vector<24x256xf32>
    %332 = arith.addf %324, %331 : vector<24x256xf32>
    %c129_i32_81 = arith.constant 129 : i32
    %333 = tpu.dynamic_rotate %302 by %c129_i32_81 dim 1 : vector<24x256xf32>, i32 -> vector<24x256xf32>
    %334 = vector.extract_strided_slice %307 {offsets = [0, 3], sizes = [24, 1], strides = [1, 1]} : vector<24x27xf32> to vector<24x1xf32>
    %335 = vector.broadcast %334 : vector<24x1xf32> to vector<24x256xf32>
    %336 = arith.mulf %333, %335 : vector<24x256xf32>
    %c3_82 = arith.constant 3 : index
    %c0_83 = arith.constant 0 : index
    %337 = vector.load %arg2[%c3_82, %c0_83] : memref<27x256xf32, #tpu.memory_space<vmem>>, vector<1x256xf32>
    %338 = vector.broadcast %337 : vector<1x256xf32> to vector<24x256xf32>
    %339 = arith.mulf %336, %338 : vector<24x256xf32>
    %340 = arith.addf %332, %339 : vector<24x256xf32>
    %c128_i32_84 = arith.constant 128 : i32
    %341 = tpu.dynamic_rotate %302 by %c128_i32_84 dim 1 : vector<24x256xf32>, i32 -> vector<24x256xf32>
    %342 = vector.extract_strided_slice %307 {offsets = [0, 4], sizes = [24, 1], strides = [1, 1]} : vector<24x27xf32> to vector<24x1xf32>
    %343 = vector.broadcast %342 : vector<24x1xf32> to vector<24x256xf32>
    %344 = arith.mulf %341, %343 : vector<24x256xf32>
    %c4_85 = arith.constant 4 : index
    %c0_86 = arith.constant 0 : index
    %345 = vector.load %arg2[%c4_85, %c0_86] : memref<27x256xf32, #tpu.memory_space<vmem>>, vector<1x256xf32>
    %346 = vector.broadcast %345 : vector<1x256xf32> to vector<24x256xf32>
    %347 = arith.mulf %344, %346 : vector<24x256xf32>
    %348 = arith.addf %340, %347 : vector<24x256xf32>
    %c127_i32_87 = arith.constant 127 : i32
    %349 = tpu.dynamic_rotate %302 by %c127_i32_87 dim 1 : vector<24x256xf32>, i32 -> vector<24x256xf32>
    %350 = vector.extract_strided_slice %307 {offsets = [0, 5], sizes = [24, 1], strides = [1, 1]} : vector<24x27xf32> to vector<24x1xf32>
    %351 = vector.broadcast %350 : vector<24x1xf32> to vector<24x256xf32>
    %352 = arith.mulf %349, %351 : vector<24x256xf32>
    %c5_88 = arith.constant 5 : index
    %c0_89 = arith.constant 0 : index
    %353 = vector.load %arg2[%c5_88, %c0_89] : memref<27x256xf32, #tpu.memory_space<vmem>>, vector<1x256xf32>
    %354 = vector.broadcast %353 : vector<1x256xf32> to vector<24x256xf32>
    %355 = arith.mulf %352, %354 : vector<24x256xf32>
    %356 = arith.addf %348, %355 : vector<24x256xf32>
    %c121_i32_90 = arith.constant 121 : i32
    %357 = tpu.dynamic_rotate %302 by %c121_i32_90 dim 1 : vector<24x256xf32>, i32 -> vector<24x256xf32>
    %358 = vector.extract_strided_slice %307 {offsets = [0, 6], sizes = [24, 1], strides = [1, 1]} : vector<24x27xf32> to vector<24x1xf32>
    %359 = vector.broadcast %358 : vector<24x1xf32> to vector<24x256xf32>
    %360 = arith.mulf %357, %359 : vector<24x256xf32>
    %c6_91 = arith.constant 6 : index
    %c0_92 = arith.constant 0 : index
    %361 = vector.load %arg2[%c6_91, %c0_92] : memref<27x256xf32, #tpu.memory_space<vmem>>, vector<1x256xf32>
    %362 = vector.broadcast %361 : vector<1x256xf32> to vector<24x256xf32>
    %363 = arith.mulf %360, %362 : vector<24x256xf32>
    %364 = arith.addf %356, %363 : vector<24x256xf32>
    %c120_i32_93 = arith.constant 120 : i32
    %365 = tpu.dynamic_rotate %302 by %c120_i32_93 dim 1 : vector<24x256xf32>, i32 -> vector<24x256xf32>
    %366 = vector.extract_strided_slice %307 {offsets = [0, 7], sizes = [24, 1], strides = [1, 1]} : vector<24x27xf32> to vector<24x1xf32>
    %367 = vector.broadcast %366 : vector<24x1xf32> to vector<24x256xf32>
    %368 = arith.mulf %365, %367 : vector<24x256xf32>
    %c7_94 = arith.constant 7 : index
    %c0_95 = arith.constant 0 : index
    %369 = vector.load %arg2[%c7_94, %c0_95] : memref<27x256xf32, #tpu.memory_space<vmem>>, vector<1x256xf32>
    %370 = vector.broadcast %369 : vector<1x256xf32> to vector<24x256xf32>
    %371 = arith.mulf %368, %370 : vector<24x256xf32>
    %372 = arith.addf %364, %371 : vector<24x256xf32>
    %c119_i32_96 = arith.constant 119 : i32
    %373 = tpu.dynamic_rotate %302 by %c119_i32_96 dim 1 : vector<24x256xf32>, i32 -> vector<24x256xf32>
    %374 = vector.extract_strided_slice %307 {offsets = [0, 8], sizes = [24, 1], strides = [1, 1]} : vector<24x27xf32> to vector<24x1xf32>
    %375 = vector.broadcast %374 : vector<24x1xf32> to vector<24x256xf32>
    %376 = arith.mulf %373, %375 : vector<24x256xf32>
    %c8_97 = arith.constant 8 : index
    %c0_98 = arith.constant 0 : index
    %377 = vector.load %arg2[%c8_97, %c0_98] : memref<27x256xf32, #tpu.memory_space<vmem>>, vector<1x256xf32>
    %378 = vector.broadcast %377 : vector<1x256xf32> to vector<24x256xf32>
    %379 = arith.mulf %376, %378 : vector<24x256xf32>
    %380 = arith.addf %372, %379 : vector<24x256xf32>
    %c73_i32_99 = arith.constant 73 : i32
    %381 = tpu.dynamic_rotate %302 by %c73_i32_99 dim 1 : vector<24x256xf32>, i32 -> vector<24x256xf32>
    %382 = vector.extract_strided_slice %307 {offsets = [0, 9], sizes = [24, 1], strides = [1, 1]} : vector<24x27xf32> to vector<24x1xf32>
    %383 = vector.broadcast %382 : vector<24x1xf32> to vector<24x256xf32>
    %384 = arith.mulf %381, %383 : vector<24x256xf32>
    %c9_100 = arith.constant 9 : index
    %c0_101 = arith.constant 0 : index
    %385 = vector.load %arg2[%c9_100, %c0_101] : memref<27x256xf32, #tpu.memory_space<vmem>>, vector<1x256xf32>
    %386 = vector.broadcast %385 : vector<1x256xf32> to vector<24x256xf32>
    %387 = arith.mulf %384, %386 : vector<24x256xf32>
    %388 = arith.addf %380, %387 : vector<24x256xf32>
    %c72_i32_102 = arith.constant 72 : i32
    %389 = tpu.dynamic_rotate %302 by %c72_i32_102 dim 1 : vector<24x256xf32>, i32 -> vector<24x256xf32>
    %390 = vector.extract_strided_slice %307 {offsets = [0, 10], sizes = [24, 1], strides = [1, 1]} : vector<24x27xf32> to vector<24x1xf32>
    %391 = vector.broadcast %390 : vector<24x1xf32> to vector<24x256xf32>
    %392 = arith.mulf %389, %391 : vector<24x256xf32>
    %c10_103 = arith.constant 10 : index
    %c0_104 = arith.constant 0 : index
    %393 = vector.load %arg2[%c10_103, %c0_104] : memref<27x256xf32, #tpu.memory_space<vmem>>, vector<1x256xf32>
    %394 = vector.broadcast %393 : vector<1x256xf32> to vector<24x256xf32>
    %395 = arith.mulf %392, %394 : vector<24x256xf32>
    %396 = arith.addf %388, %395 : vector<24x256xf32>
    %c71_i32_105 = arith.constant 71 : i32
    %397 = tpu.dynamic_rotate %302 by %c71_i32_105 dim 1 : vector<24x256xf32>, i32 -> vector<24x256xf32>
    %398 = vector.extract_strided_slice %307 {offsets = [0, 11], sizes = [24, 1], strides = [1, 1]} : vector<24x27xf32> to vector<24x1xf32>
    %399 = vector.broadcast %398 : vector<24x1xf32> to vector<24x256xf32>
    %400 = arith.mulf %397, %399 : vector<24x256xf32>
    %c11_106 = arith.constant 11 : index
    %c0_107 = arith.constant 0 : index
    %401 = vector.load %arg2[%c11_106, %c0_107] : memref<27x256xf32, #tpu.memory_space<vmem>>, vector<1x256xf32>
    %402 = vector.broadcast %401 : vector<1x256xf32> to vector<24x256xf32>
    %403 = arith.mulf %400, %402 : vector<24x256xf32>
    %404 = arith.addf %396, %403 : vector<24x256xf32>
    %c65_i32_108 = arith.constant 65 : i32
    %405 = tpu.dynamic_rotate %302 by %c65_i32_108 dim 1 : vector<24x256xf32>, i32 -> vector<24x256xf32>
    %406 = vector.extract_strided_slice %307 {offsets = [0, 12], sizes = [24, 1], strides = [1, 1]} : vector<24x27xf32> to vector<24x1xf32>
    %407 = vector.broadcast %406 : vector<24x1xf32> to vector<24x256xf32>
    %408 = arith.mulf %405, %407 : vector<24x256xf32>
    %c12_109 = arith.constant 12 : index
    %c0_110 = arith.constant 0 : index
    %409 = vector.load %arg2[%c12_109, %c0_110] : memref<27x256xf32, #tpu.memory_space<vmem>>, vector<1x256xf32>
    %410 = vector.broadcast %409 : vector<1x256xf32> to vector<24x256xf32>
    %411 = arith.mulf %408, %410 : vector<24x256xf32>
    %412 = arith.addf %404, %411 : vector<24x256xf32>
    %c64_i32_111 = arith.constant 64 : i32
    %413 = tpu.dynamic_rotate %302 by %c64_i32_111 dim 1 : vector<24x256xf32>, i32 -> vector<24x256xf32>
    %414 = vector.extract_strided_slice %307 {offsets = [0, 13], sizes = [24, 1], strides = [1, 1]} : vector<24x27xf32> to vector<24x1xf32>
    %415 = vector.broadcast %414 : vector<24x1xf32> to vector<24x256xf32>
    %416 = arith.mulf %413, %415 : vector<24x256xf32>
    %c13_112 = arith.constant 13 : index
    %c0_113 = arith.constant 0 : index
    %417 = vector.load %arg2[%c13_112, %c0_113] : memref<27x256xf32, #tpu.memory_space<vmem>>, vector<1x256xf32>
    %418 = vector.broadcast %417 : vector<1x256xf32> to vector<24x256xf32>
    %419 = arith.mulf %416, %418 : vector<24x256xf32>
    %420 = arith.addf %412, %419 : vector<24x256xf32>
    %c63_i32_114 = arith.constant 63 : i32
    %421 = tpu.dynamic_rotate %302 by %c63_i32_114 dim 1 : vector<24x256xf32>, i32 -> vector<24x256xf32>
    %422 = vector.extract_strided_slice %307 {offsets = [0, 14], sizes = [24, 1], strides = [1, 1]} : vector<24x27xf32> to vector<24x1xf32>
    %423 = vector.broadcast %422 : vector<24x1xf32> to vector<24x256xf32>
    %424 = arith.mulf %421, %423 : vector<24x256xf32>
    %c14_115 = arith.constant 14 : index
    %c0_116 = arith.constant 0 : index
    %425 = vector.load %arg2[%c14_115, %c0_116] : memref<27x256xf32, #tpu.memory_space<vmem>>, vector<1x256xf32>
    %426 = vector.broadcast %425 : vector<1x256xf32> to vector<24x256xf32>
    %427 = arith.mulf %424, %426 : vector<24x256xf32>
    %428 = arith.addf %420, %427 : vector<24x256xf32>
    %c57_i32_117 = arith.constant 57 : i32
    %429 = tpu.dynamic_rotate %302 by %c57_i32_117 dim 1 : vector<24x256xf32>, i32 -> vector<24x256xf32>
    %430 = vector.extract_strided_slice %307 {offsets = [0, 15], sizes = [24, 1], strides = [1, 1]} : vector<24x27xf32> to vector<24x1xf32>
    %431 = vector.broadcast %430 : vector<24x1xf32> to vector<24x256xf32>
    %432 = arith.mulf %429, %431 : vector<24x256xf32>
    %c15_118 = arith.constant 15 : index
    %c0_119 = arith.constant 0 : index
    %433 = vector.load %arg2[%c15_118, %c0_119] : memref<27x256xf32, #tpu.memory_space<vmem>>, vector<1x256xf32>
    %434 = vector.broadcast %433 : vector<1x256xf32> to vector<24x256xf32>
    %435 = arith.mulf %432, %434 : vector<24x256xf32>
    %436 = arith.addf %428, %435 : vector<24x256xf32>
    %c56_i32_120 = arith.constant 56 : i32
    %437 = tpu.dynamic_rotate %302 by %c56_i32_120 dim 1 : vector<24x256xf32>, i32 -> vector<24x256xf32>
    %438 = vector.extract_strided_slice %307 {offsets = [0, 16], sizes = [24, 1], strides = [1, 1]} : vector<24x27xf32> to vector<24x1xf32>
    %439 = vector.broadcast %438 : vector<24x1xf32> to vector<24x256xf32>
    %440 = arith.mulf %437, %439 : vector<24x256xf32>
    %c16_121 = arith.constant 16 : index
    %c0_122 = arith.constant 0 : index
    %441 = vector.load %arg2[%c16_121, %c0_122] : memref<27x256xf32, #tpu.memory_space<vmem>>, vector<1x256xf32>
    %442 = vector.broadcast %441 : vector<1x256xf32> to vector<24x256xf32>
    %443 = arith.mulf %440, %442 : vector<24x256xf32>
    %444 = arith.addf %436, %443 : vector<24x256xf32>
    %c55_i32_123 = arith.constant 55 : i32
    %445 = tpu.dynamic_rotate %302 by %c55_i32_123 dim 1 : vector<24x256xf32>, i32 -> vector<24x256xf32>
    %446 = vector.extract_strided_slice %307 {offsets = [0, 17], sizes = [24, 1], strides = [1, 1]} : vector<24x27xf32> to vector<24x1xf32>
    %447 = vector.broadcast %446 : vector<24x1xf32> to vector<24x256xf32>
    %448 = arith.mulf %445, %447 : vector<24x256xf32>
    %c17_124 = arith.constant 17 : index
    %c0_125 = arith.constant 0 : index
    %449 = vector.load %arg2[%c17_124, %c0_125] : memref<27x256xf32, #tpu.memory_space<vmem>>, vector<1x256xf32>
    %450 = vector.broadcast %449 : vector<1x256xf32> to vector<24x256xf32>
    %451 = arith.mulf %448, %450 : vector<24x256xf32>
    %452 = arith.addf %444, %451 : vector<24x256xf32>
    %c9_i32_126 = arith.constant 9 : i32
    %453 = tpu.dynamic_rotate %302 by %c9_i32_126 dim 1 : vector<24x256xf32>, i32 -> vector<24x256xf32>
    %454 = vector.extract_strided_slice %307 {offsets = [0, 18], sizes = [24, 1], strides = [1, 1]} : vector<24x27xf32> to vector<24x1xf32>
    %455 = vector.broadcast %454 : vector<24x1xf32> to vector<24x256xf32>
    %456 = arith.mulf %453, %455 : vector<24x256xf32>
    %c18_127 = arith.constant 18 : index
    %c0_128 = arith.constant 0 : index
    %457 = vector.load %arg2[%c18_127, %c0_128] : memref<27x256xf32, #tpu.memory_space<vmem>>, vector<1x256xf32>
    %458 = vector.broadcast %457 : vector<1x256xf32> to vector<24x256xf32>
    %459 = arith.mulf %456, %458 : vector<24x256xf32>
    %460 = arith.addf %452, %459 : vector<24x256xf32>
    %c8_i32_129 = arith.constant 8 : i32
    %461 = tpu.dynamic_rotate %302 by %c8_i32_129 dim 1 : vector<24x256xf32>, i32 -> vector<24x256xf32>
    %462 = vector.extract_strided_slice %307 {offsets = [0, 19], sizes = [24, 1], strides = [1, 1]} : vector<24x27xf32> to vector<24x1xf32>
    %463 = vector.broadcast %462 : vector<24x1xf32> to vector<24x256xf32>
    %464 = arith.mulf %461, %463 : vector<24x256xf32>
    %c19_130 = arith.constant 19 : index
    %c0_131 = arith.constant 0 : index
    %465 = vector.load %arg2[%c19_130, %c0_131] : memref<27x256xf32, #tpu.memory_space<vmem>>, vector<1x256xf32>
    %466 = vector.broadcast %465 : vector<1x256xf32> to vector<24x256xf32>
    %467 = arith.mulf %464, %466 : vector<24x256xf32>
    %468 = arith.addf %460, %467 : vector<24x256xf32>
    %c7_i32_132 = arith.constant 7 : i32
    %469 = tpu.dynamic_rotate %302 by %c7_i32_132 dim 1 : vector<24x256xf32>, i32 -> vector<24x256xf32>
    %470 = vector.extract_strided_slice %307 {offsets = [0, 20], sizes = [24, 1], strides = [1, 1]} : vector<24x27xf32> to vector<24x1xf32>
    %471 = vector.broadcast %470 : vector<24x1xf32> to vector<24x256xf32>
    %472 = arith.mulf %469, %471 : vector<24x256xf32>
    %c20_133 = arith.constant 20 : index
    %c0_134 = arith.constant 0 : index
    %473 = vector.load %arg2[%c20_133, %c0_134] : memref<27x256xf32, #tpu.memory_space<vmem>>, vector<1x256xf32>
    %474 = vector.broadcast %473 : vector<1x256xf32> to vector<24x256xf32>
    %475 = arith.mulf %472, %474 : vector<24x256xf32>
    %476 = arith.addf %468, %475 : vector<24x256xf32>
    %c1_i32_135 = arith.constant 1 : i32
    %477 = tpu.dynamic_rotate %302 by %c1_i32_135 dim 1 : vector<24x256xf32>, i32 -> vector<24x256xf32>
    %478 = vector.extract_strided_slice %307 {offsets = [0, 21], sizes = [24, 1], strides = [1, 1]} : vector<24x27xf32> to vector<24x1xf32>
    %479 = vector.broadcast %478 : vector<24x1xf32> to vector<24x256xf32>
    %480 = arith.mulf %477, %479 : vector<24x256xf32>
    %c21_136 = arith.constant 21 : index
    %c0_137 = arith.constant 0 : index
    %481 = vector.load %arg2[%c21_136, %c0_137] : memref<27x256xf32, #tpu.memory_space<vmem>>, vector<1x256xf32>
    %482 = vector.broadcast %481 : vector<1x256xf32> to vector<24x256xf32>
    %483 = arith.mulf %480, %482 : vector<24x256xf32>
    %484 = arith.addf %476, %483 : vector<24x256xf32>
    %485 = vector.extract_strided_slice %307 {offsets = [0, 22], sizes = [24, 1], strides = [1, 1]} : vector<24x27xf32> to vector<24x1xf32>
    %486 = vector.broadcast %485 : vector<24x1xf32> to vector<24x256xf32>
    %487 = arith.mulf %302, %486 : vector<24x256xf32>
    %c22_138 = arith.constant 22 : index
    %c0_139 = arith.constant 0 : index
    %488 = vector.load %arg2[%c22_138, %c0_139] : memref<27x256xf32, #tpu.memory_space<vmem>>, vector<1x256xf32>
    %489 = vector.broadcast %488 : vector<1x256xf32> to vector<24x256xf32>
    %490 = arith.mulf %487, %489 : vector<24x256xf32>
    %491 = arith.addf %484, %490 : vector<24x256xf32>
    %c255_i32_140 = arith.constant 255 : i32
    %492 = tpu.dynamic_rotate %302 by %c255_i32_140 dim 1 : vector<24x256xf32>, i32 -> vector<24x256xf32>
    %493 = vector.extract_strided_slice %307 {offsets = [0, 23], sizes = [24, 1], strides = [1, 1]} : vector<24x27xf32> to vector<24x1xf32>
    %494 = vector.broadcast %493 : vector<24x1xf32> to vector<24x256xf32>
    %495 = arith.mulf %492, %494 : vector<24x256xf32>
    %c23_141 = arith.constant 23 : index
    %c0_142 = arith.constant 0 : index
    %496 = vector.load %arg2[%c23_141, %c0_142] : memref<27x256xf32, #tpu.memory_space<vmem>>, vector<1x256xf32>
    %497 = vector.broadcast %496 : vector<1x256xf32> to vector<24x256xf32>
    %498 = arith.mulf %495, %497 : vector<24x256xf32>
    %499 = arith.addf %491, %498 : vector<24x256xf32>
    %c249_i32_143 = arith.constant 249 : i32
    %500 = tpu.dynamic_rotate %302 by %c249_i32_143 dim 1 : vector<24x256xf32>, i32 -> vector<24x256xf32>
    %501 = vector.extract_strided_slice %307 {offsets = [0, 24], sizes = [24, 1], strides = [1, 1]} : vector<24x27xf32> to vector<24x1xf32>
    %502 = vector.broadcast %501 : vector<24x1xf32> to vector<24x256xf32>
    %503 = arith.mulf %500, %502 : vector<24x256xf32>
    %c24_144 = arith.constant 24 : index
    %c0_145 = arith.constant 0 : index
    %504 = vector.load %arg2[%c24_144, %c0_145] : memref<27x256xf32, #tpu.memory_space<vmem>>, vector<1x256xf32>
    %505 = vector.broadcast %504 : vector<1x256xf32> to vector<24x256xf32>
    %506 = arith.mulf %503, %505 : vector<24x256xf32>
    %507 = arith.addf %499, %506 : vector<24x256xf32>
    %c248_i32_146 = arith.constant 248 : i32
    %508 = tpu.dynamic_rotate %302 by %c248_i32_146 dim 1 : vector<24x256xf32>, i32 -> vector<24x256xf32>
    %509 = vector.extract_strided_slice %307 {offsets = [0, 25], sizes = [24, 1], strides = [1, 1]} : vector<24x27xf32> to vector<24x1xf32>
    %510 = vector.broadcast %509 : vector<24x1xf32> to vector<24x256xf32>
    %511 = arith.mulf %508, %510 : vector<24x256xf32>
    %c25_147 = arith.constant 25 : index
    %c0_148 = arith.constant 0 : index
    %512 = vector.load %arg2[%c25_147, %c0_148] : memref<27x256xf32, #tpu.memory_space<vmem>>, vector<1x256xf32>
    %513 = vector.broadcast %512 : vector<1x256xf32> to vector<24x256xf32>
    %514 = arith.mulf %511, %513 : vector<24x256xf32>
    %515 = arith.addf %507, %514 : vector<24x256xf32>
    %c247_i32_149 = arith.constant 247 : i32
    %516 = tpu.dynamic_rotate %302 by %c247_i32_149 dim 1 : vector<24x256xf32>, i32 -> vector<24x256xf32>
    %517 = vector.extract_strided_slice %307 {offsets = [0, 26], sizes = [24, 1], strides = [1, 1]} : vector<24x27xf32> to vector<24x1xf32>
    %518 = vector.broadcast %517 : vector<24x1xf32> to vector<24x256xf32>
    %519 = arith.mulf %516, %518 : vector<24x256xf32>
    %c26_150 = arith.constant 26 : index
    %c0_151 = arith.constant 0 : index
    %520 = vector.load %arg2[%c26_150, %c0_151] : memref<27x256xf32, #tpu.memory_space<vmem>>, vector<1x256xf32>
    %521 = vector.broadcast %520 : vector<1x256xf32> to vector<24x256xf32>
    %522 = arith.mulf %519, %521 : vector<24x256xf32>
    %523 = arith.addf %515, %522 : vector<24x256xf32>
    %524 = vector.extract_strided_slice %289 {offsets = [0, 1], sizes = [24, 1], strides = [1, 1]} : vector<24x8xf32> to vector<24x1xf32>
    %525 = vector.broadcast %524 : vector<24x1xf32> to vector<24x256xf32>
    %526 = arith.addf %523, %525 : vector<24x256xf32>
    %527 = arith.negf %526 : vector<24x256xf32>
    %528 = math.exp %527 : vector<24x256xf32>
    %cst_152 = arith.constant 1.000000e+00 : f32
    %529 = vector.broadcast %cst_152 : f32 to vector<24x256xf32>
    %530 = arith.addf %529, %528 : vector<24x256xf32>
    %531 = arith.divf %529, %530 : vector<24x256xf32>
    %532 = arith.mulf %526, %531 : vector<24x256xf32>
    %cst_153 = arith.constant dense<0.000000e+00> : vector<24x4xf32>
    %533 = tpu.matmul %532, %11, %cst_153 {dimension_numbers = #tpu.dot_dimension_numbers<[1], [0], [0], [1], [0, 0, 1, 1], [], []>} : vector<24x256xf32>, vector<256x4xf32>, vector<24x4xf32> -> vector<24x4xf32>
    %cst_154 = arith.constant dense<0.000000e+00> : vector<24x4xf32>
    %534 = tpu.matmul %533, %13, %cst_154 {dimension_numbers = #tpu.dot_dimension_numbers<[1], [0], [0], [1], [0, 0, 1, 1], [], []>} : vector<24x4xf32>, vector<4x4xf32>, vector<24x4xf32> -> vector<24x4xf32>
    %535 = tpu.concatenate %534, %533 in 0 : vector<24x4xf32>, vector<24x4xf32> -> vector<48x4xf32>
    %c0_155 = arith.constant 0 : index
    %c0_156 = arith.constant 0 : index
    %536 = vector.load %arg15[%c0_155, %c0_156] : memref<16x48xf32, #tpu.memory_space<vmem>>, vector<16x48xf32>
    %cst_157 = arith.constant dense<0.000000e+00> : vector<16x4xf32>
    %537 = tpu.matmul %536, %535, %cst_157 {dimension_numbers = #tpu.dot_dimension_numbers<[1], [0], [0], [1], [0, 0, 1, 1], [], []>} : vector<16x48xf32>, vector<48x4xf32>, vector<16x4xf32> -> vector<16x4xf32>
    %538 = vector.extract_strided_slice %289 {offsets = [0, 2], sizes = [16, 1], strides = [1, 1]} : vector<24x8xf32> to vector<16x1xf32>
    %539 = vector.broadcast %538 : vector<16x1xf32> to vector<16x4xf32>
    %540 = arith.addf %537, %539 : vector<16x4xf32>
    %541 = arith.negf %540 : vector<16x4xf32>
    %542 = math.exp %541 : vector<16x4xf32>
    %cst_158 = arith.constant 1.000000e+00 : f32
    %543 = vector.broadcast %cst_158 : f32 to vector<16x4xf32>
    %544 = arith.addf %543, %542 : vector<16x4xf32>
    %545 = arith.divf %543, %544 : vector<16x4xf32>
    %546 = arith.mulf %540, %545 : vector<16x4xf32>
    %c0_159 = arith.constant 0 : index
    %c0_160 = arith.constant 0 : index
    %547 = vector.load %arg16[%c0_159, %c0_160] : memref<24x16xf32, #tpu.memory_space<vmem>>, vector<24x16xf32>
    %cst_161 = arith.constant dense<0.000000e+00> : vector<24x4xf32>
    %548 = tpu.matmul %547, %546, %cst_161 {dimension_numbers = #tpu.dot_dimension_numbers<[1], [0], [0], [1], [0, 0, 1, 1], [], []>} : vector<24x16xf32>, vector<16x4xf32>, vector<24x4xf32> -> vector<24x4xf32>
    %549 = vector.extract_strided_slice %289 {offsets = [0, 3], sizes = [24, 1], strides = [1, 1]} : vector<24x8xf32> to vector<24x1xf32>
    %550 = vector.broadcast %549 : vector<24x1xf32> to vector<24x4xf32>
    %551 = arith.addf %548, %550 : vector<24x4xf32>
    %552 = arith.negf %551 : vector<24x4xf32>
    %553 = math.exp %552 : vector<24x4xf32>
    %cst_162 = arith.constant 1.000000e+00 : f32
    %554 = vector.broadcast %cst_162 : f32 to vector<24x4xf32>
    %555 = arith.addf %554, %553 : vector<24x4xf32>
    %556 = arith.divf %554, %555 : vector<24x4xf32>
    %cst_163 = arith.constant dense<0.000000e+00> : vector<24x256xf32>
    %557 = tpu.matmul %556, %12, %cst_163 {dimension_numbers = #tpu.dot_dimension_numbers<[1], [0], [0], [1], [0, 0, 1, 1], [], []>} : vector<24x4xf32>, vector<4x256xf32>, vector<24x256xf32> -> vector<24x256xf32>
    %c0_164 = arith.constant 0 : index
    %c0_165 = arith.constant 0 : index
    %558 = vector.load %arg17[%c0_164, %c0_165] : memref<16x24xbf16, #tpu.memory_space<vmem>>, vector<16x24xbf16>
    %559 = arith.mulf %532, %557 : vector<24x256xf32>
    %560 = arith.truncf %559 : vector<24x256xf32> to vector<24x256xbf16>
    %cst_166 = arith.constant dense<0.000000e+00> : vector<16x256xf32>
    %561 = tpu.matmul %558, %560, %cst_166 {dimension_numbers = #tpu.dot_dimension_numbers<[1], [0], [0], [1], [0, 0, 1, 1], [], []>} : vector<16x24xbf16>, vector<24x256xbf16>, vector<16x256xf32> -> vector<16x256xf32>
    %562 = vector.extract_strided_slice %289 {offsets = [0, 4], sizes = [16, 1], strides = [1, 1]} : vector<24x8xf32> to vector<16x1xf32>
    %563 = vector.broadcast %562 : vector<16x1xf32> to vector<16x256xf32>
    %564 = arith.addf %561, %563 : vector<16x256xf32>
    %565 = vector.extract_strided_slice %289 {offsets = [0, 6], sizes = [1, 1], strides = [1, 1]} : vector<24x8xf32> to vector<1x1xf32>
    %566 = vector.broadcast %565 : vector<1x1xf32> to vector<16x256xf32>
    %567 = arith.mulf %566, %564 : vector<16x256xf32>
    %568 = arith.addf %306, %567 : vector<16x256xf32>
    %c0_167 = arith.constant 0 : index
    %c0_168 = arith.constant 0 : index
    %569 = vector.load %arg19[%c0_167, %c0_168] : memref<32x16xbf16, #tpu.memory_space<vmem>>, vector<32x16xbf16>
    %570 = arith.truncf %568 : vector<16x256xf32> to vector<16x256xbf16>
    %cst_169 = arith.constant dense<0.000000e+00> : vector<32x256xf32>
    %571 = tpu.matmul %569, %570, %cst_169 {dimension_numbers = #tpu.dot_dimension_numbers<[1], [0], [0], [1], [0, 0, 1, 1], [], []>} : vector<32x16xbf16>, vector<16x256xbf16>, vector<32x256xf32> -> vector<32x256xf32>
    %c0_170 = arith.constant 0 : index
    %c0_171 = arith.constant 0 : index
    %572 = vector.load %arg22[%c0_170, %c0_171] : memref<40x3xf32, #tpu.memory_space<vmem>>, vector<32x1xf32>
    %573 = vector.broadcast %572 : vector<32x1xf32> to vector<32x256xf32>
    %574 = arith.addf %571, %573 : vector<32x256xf32>
    %575 = arith.negf %574 : vector<32x256xf32>
    %576 = math.exp %575 : vector<32x256xf32>
    %cst_172 = arith.constant 1.000000e+00 : f32
    %577 = vector.broadcast %cst_172 : f32 to vector<32x256xf32>
    %578 = arith.addf %577, %576 : vector<32x256xf32>
    %579 = arith.divf %577, %578 : vector<32x256xf32>
    %580 = arith.mulf %574, %579 : vector<32x256xf32>
    %cst_173 = arith.constant dense<0.000000e+00> : vector<32xf32>
    %581 = vector.multi_reduction <add>, %580, %cst_173 [1] : vector<32x256xf32> to vector<32xf32>
    %582 = vector.shape_cast %581 : vector<32xf32> to vector<32x1xf32>
    %cst_174 = arith.constant 3.906250e-03 : f32
    %583 = vector.broadcast %cst_174 : f32 to vector<32x1xf32>
    %584 = arith.mulf %582, %583 : vector<32x1xf32>
    %c0_175 = arith.constant 0 : index
    %c0_176 = arith.constant 0 : index
    %585 = vector.load %arg20[%c0_175, %c0_176] : memref<40x32xf32, #tpu.memory_space<vmem>>, vector<40x32xf32>
    %cst_177 = arith.constant dense<0.000000e+00> : vector<40x1xf32>
    %586 = tpu.matmul %585, %584, %cst_177 {dimension_numbers = #tpu.dot_dimension_numbers<[1], [0], [0], [1], [0, 0, 1, 1], [], []>} : vector<40x32xf32>, vector<32x1xf32>, vector<40x1xf32> -> vector<40x1xf32>
    %c0_178 = arith.constant 0 : index
    %c1_179 = arith.constant 1 : index
    %587 = vector.load %arg22[%c0_178, %c1_179] : memref<40x3xf32, #tpu.memory_space<vmem>>, vector<40x1xf32>
    %588 = arith.addf %586, %587 : vector<40x1xf32>
    %589 = arith.negf %588 : vector<40x1xf32>
    %590 = math.exp %589 : vector<40x1xf32>
    %cst_180 = arith.constant 1.000000e+00 : f32
    %591 = vector.broadcast %cst_180 : f32 to vector<40x1xf32>
    %592 = arith.addf %591, %590 : vector<40x1xf32>
    %593 = arith.divf %591, %592 : vector<40x1xf32>
    %594 = arith.mulf %588, %593 : vector<40x1xf32>
    %c0_181 = arith.constant 0 : index
    %c0_182 = arith.constant 0 : index
    %595 = vector.load %arg21[%c0_181, %c0_182] : memref<10x40xf32, #tpu.memory_space<vmem>>, vector<10x40xf32>
    %cst_183 = arith.constant dense<0.000000e+00> : vector<10x1xf32>
    %596 = tpu.matmul %595, %594, %cst_183 {dimension_numbers = #tpu.dot_dimension_numbers<[1], [0], [0], [1], [0, 0, 1, 1], [], []>} : vector<10x40xf32>, vector<40x1xf32>, vector<10x1xf32> -> vector<10x1xf32>
    %c0_184 = arith.constant 0 : index
    %c2_185 = arith.constant 2 : index
    %597 = vector.load %arg22[%c0_184, %c2_185] : memref<40x3xf32, #tpu.memory_space<vmem>>, vector<10x1xf32>
    %598 = arith.addf %596, %597 : vector<10x1xf32>
    %c0_186 = arith.constant 0 : index
    %c0_187 = arith.constant 0 : index
    %c0_188 = arith.constant 0 : index
    %599 = vector.load %arg23[%c0_186, %c0_187, %c0_188] : memref<1x10x1xf32, #tpu.memory_space<vmem>>, vector<1x10x1xf32>
    %600 = vector.shape_cast %599 : vector<1x10x1xf32> to vector<10x1xf32>
    %601 = vector.shape_cast %598 : vector<10x1xf32> to vector<1x10x1xf32>
    tpu.vector_store %arg23[%c0_186, %c0_187, %c0_188], %601 {strides = array<i32>} : memref<1x10x1xf32, #tpu.memory_space<vmem>>, vector<1x10x1xf32>,
    return
  }
  func.func @transform_0(%arg0: i32) -> (i32, i32, i32) {
    %c0_i32 = arith.constant 0 : i32
    %c0_i32_0 = arith.constant 0 : i32
    %c0_i32_1 = arith.constant 0 : i32
    return %arg0, %c0_i32, %c0_i32_0 : i32, i32, i32
  }
  func.func @transform_1(%arg0: i32) -> (i32, i32) {
    %c0_i32 = arith.constant 0 : i32
    %c0_i32_0 = arith.constant 0 : i32
    %c0_i32_1 = arith.constant 0 : i32
    return %c0_i32, %c0_i32_0 : i32, i32
  }
  func.func @transform_2(%arg0: i32) -> (i32, i32) {
    %c0_i32 = arith.constant 0 : i32
    %c0_i32_0 = arith.constant 0 : i32
    %c0_i32_1 = arith.constant 0 : i32
    return %c0_i32, %c0_i32_0 : i32, i32
  }
  func.func @transform_3(%arg0: i32) -> (i32, i32) {
    %c0_i32 = arith.constant 0 : i32
    %c0_i32_0 = arith.constant 0 : i32
    %c0_i32_1 = arith.constant 0 : i32
    return %c0_i32, %c0_i32_0 : i32, i32
  }
  func.func @transform_4(%arg0: i32) -> (i32, i32) {
    %c0_i32 = arith.constant 0 : i32
    %c0_i32_0 = arith.constant 0 : i32
    %c0_i32_1 = arith.constant 0 : i32
    return %c0_i32, %c0_i32_0 : i32, i32
  }
  func.func @transform_5(%arg0: i32) -> (i32, i32) {
    %c0_i32 = arith.constant 0 : i32
    %c0_i32_0 = arith.constant 0 : i32
    %c0_i32_1 = arith.constant 0 : i32
    return %c0_i32, %c0_i32_0 : i32, i32
  }
  func.func @transform_6(%arg0: i32) -> (i32, i32) {
    %c0_i32 = arith.constant 0 : i32
    %c0_i32_0 = arith.constant 0 : i32
    %c0_i32_1 = arith.constant 0 : i32
    return %c0_i32, %c0_i32_0 : i32, i32
  }
  func.func @transform_7(%arg0: i32) -> (i32, i32) {
    %c0_i32 = arith.constant 0 : i32
    %c0_i32_0 = arith.constant 0 : i32
    %c0_i32_1 = arith.constant 0 : i32
    return %c0_i32, %c0_i32_0 : i32, i32
  }
  func.func @transform_8(%arg0: i32) -> (i32, i32) {
    %c0_i32 = arith.constant 0 : i32
    %c0_i32_0 = arith.constant 0 : i32
    %c0_i32_1 = arith.constant 0 : i32
    return %c0_i32, %c0_i32_0 : i32, i32
  }
  func.func @transform_9(%arg0: i32) -> (i32, i32) {
    %c0_i32 = arith.constant 0 : i32
    %c0_i32_0 = arith.constant 0 : i32
    %c0_i32_1 = arith.constant 0 : i32
    return %c0_i32, %c0_i32_0 : i32, i32
  }
  func.func @transform_10(%arg0: i32) -> (i32, i32) {
    %c0_i32 = arith.constant 0 : i32
    %c0_i32_0 = arith.constant 0 : i32
    %c0_i32_1 = arith.constant 0 : i32
    return %c0_i32, %c0_i32_0 : i32, i32
  }
  func.func @transform_11(%arg0: i32) -> (i32, i32) {
    %c0_i32 = arith.constant 0 : i32
    %c0_i32_0 = arith.constant 0 : i32
    %c0_i32_1 = arith.constant 0 : i32
    return %c0_i32, %c0_i32_0 : i32, i32
  }
  func.func @transform_12(%arg0: i32) -> (i32, i32) {
    %c0_i32 = arith.constant 0 : i32
    %c0_i32_0 = arith.constant 0 : i32
    %c0_i32_1 = arith.constant 0 : i32
    return %c0_i32, %c0_i32_0 : i32, i32
  }
  func.func @transform_13(%arg0: i32) -> (i32, i32) {
    %c0_i32 = arith.constant 0 : i32
    %c0_i32_0 = arith.constant 0 : i32
    %c0_i32_1 = arith.constant 0 : i32
    return %c0_i32, %c0_i32_0 : i32, i32
  }
  func.func @transform_14(%arg0: i32) -> (i32, i32) {
    %c0_i32 = arith.constant 0 : i32
    %c0_i32_0 = arith.constant 0 : i32
    %c0_i32_1 = arith.constant 0 : i32
    return %c0_i32, %c0_i32_0 : i32, i32
  }
  func.func @transform_15(%arg0: i32) -> (i32, i32) {
    %c0_i32 = arith.constant 0 : i32
    %c0_i32_0 = arith.constant 0 : i32
    %c0_i32_1 = arith.constant 0 : i32
    return %c0_i32, %c0_i32_0 : i32, i32
  }
  func.func @transform_16(%arg0: i32) -> (i32, i32) {
    %c0_i32 = arith.constant 0 : i32
    %c0_i32_0 = arith.constant 0 : i32
    %c0_i32_1 = arith.constant 0 : i32
    return %c0_i32, %c0_i32_0 : i32, i32
  }
  func.func @transform_17(%arg0: i32) -> (i32, i32) {
    %c0_i32 = arith.constant 0 : i32
    %c0_i32_0 = arith.constant 0 : i32
    %c0_i32_1 = arith.constant 0 : i32
    return %c0_i32, %c0_i32_0 : i32, i32
  }
  func.func @transform_18(%arg0: i32) -> (i32, i32) {
    %c0_i32 = arith.constant 0 : i32
    %c0_i32_0 = arith.constant 0 : i32
    %c0_i32_1 = arith.constant 0 : i32
    return %c0_i32, %c0_i32_0 : i32, i32
  }
  func.func @transform_19(%arg0: i32) -> (i32, i32) {
    %c0_i32 = arith.constant 0 : i32
    %c0_i32_0 = arith.constant 0 : i32
    %c0_i32_1 = arith.constant 0 : i32
    return %c0_i32, %c0_i32_0 : i32, i32
  }
  func.func @transform_20(%arg0: i32) -> (i32, i32) {
    %c0_i32 = arith.constant 0 : i32
    %c0_i32_0 = arith.constant 0 : i32
    %c0_i32_1 = arith.constant 0 : i32
    return %c0_i32, %c0_i32_0 : i32, i32
  }
  func.func @transform_21(%arg0: i32) -> (i32, i32) {
    %c0_i32 = arith.constant 0 : i32
    %c0_i32_0 = arith.constant 0 : i32
    %c0_i32_1 = arith.constant 0 : i32
    return %c0_i32, %c0_i32_0 : i32, i32
  }
  func.func @transform_22(%arg0: i32) -> (i32, i32, i32) {
    %c0_i32 = arith.constant 0 : i32
    %c0_i32_0 = arith.constant 0 : i32
    %c0_i32_1 = arith.constant 0 : i32
    return %arg0, %c0_i32, %c0_i32_0 : i32, i32, i32
  }
}

</mosaic_0001>

<llo_original>
// kernel: movinet_forward.1
$region0: #{movinet_forward.1}
  #allocation0 [shape = 'u32[]', space=smem, size = 0x4, offset = 0x4, fixed_abs, tag = 'smem constant byte address 0x4 - core index']
  #allocation1 [shape = 'u32[144,128]{1,0:T(1,128)}', space=vmem, size = 0x12000, scoped, tag = 'internal scratch']
  %s0 = inlined_call_operand.vmem [shape: f32[2,28,256], index: 0, kind: input, shape index: {}]
  %s1 = inlined_call_operand.vmem [shape: f32[27,256], index: 1, kind: input, shape index: {}]
  %s2 = inlined_call_operand.vmem [shape: f32[256,4], index: 2, kind: input, shape index: {}]
  %s3 = inlined_call_operand.vmem [shape: f32[4,256], index: 3, kind: input, shape index: {}]
  %s4 = inlined_call_operand.vmem [shape: f32[4,4], index: 4, kind: input, shape index: {}]
  %s5 = inlined_call_operand.vmem [shape: bf16[8,28], index: 5, kind: input, shape index: {}]
  %s6 = inlined_call_operand.vmem [shape: bf16[16,8], index: 6, kind: input, shape index: {}]
  %s7 = inlined_call_operand.vmem [shape: f32[16,27], index: 7, kind: input, shape index: {}]
  %s8 = inlined_call_operand.vmem [shape: f32[8,32], index: 8, kind: input, shape index: {}]
  %s9 = inlined_call_operand.vmem [shape: f32[16,8], index: 9, kind: input, shape index: {}]
  %s10 = inlined_call_operand.vmem [shape: bf16[8,16], index: 10, kind: input, shape index: {}]
  %s11 = inlined_call_operand.vmem [shape: f32[16,8], index: 11, kind: input, shape index: {}]
  %s12 = inlined_call_operand.vmem [shape: bf16[40,8], index: 12, kind: input, shape index: {}]
  %s13 = inlined_call_operand.vmem [shape: f32[24,27], index: 13, kind: input, shape index: {}]
  %s14 = inlined_call_operand.vmem [shape: f32[16,48], index: 14, kind: input, shape index: {}]
  %s15 = inlined_call_operand.vmem [shape: f32[24,16], index: 15, kind: input, shape index: {}]
  %s16 = inlined_call_operand.vmem [shape: bf16[16,24], index: 16, kind: input, shape index: {}]
  %s17 = inlined_call_operand.vmem [shape: f32[24,8], index: 17, kind: input, shape index: {}]
  %s18 = inlined_call_operand.vmem [shape: bf16[32,16], index: 18, kind: input, shape index: {}]
  %s19 = inlined_call_operand.vmem [shape: f32[40,32], index: 19, kind: input, shape index: {}]
  %s20 = inlined_call_operand.vmem [shape: f32[10,40], index: 20, kind: input, shape index: {}]
  %s21 = inlined_call_operand.vmem [shape: f32[40,3], index: 21, kind: input, shape index: {}]
  %s22 = inlined_call_operand.vmem [shape: f32[2,10,1], index: 22, kind: output, shape index: {}]
  %s23 = sld [smem:[#allocation0]]
  $region121: #{movinet_forward.1} parent=0
    _
  %s25 = ssub.s32 1, %s23
  %s26 = scalar_select 0, %s25, %s23
  loop: start=0, step=1, limit=4
  $region2: #{movinet_forward.1} parent=0 // loop_pre_header
    _
  $region3: #{movinet_forward.1} parent=0 // loop_header
    %s28 = sphi 0, %s32
    %p29 = scmp.ge.s32.totalorder %s28, 4
    %s38 = sphi 0, %s40
    %s41 = sphi 0, %s38
    %s42 = sphi 0, %s41
    %s58 = sphi 0, %s42
    %s62 = sphi 0, %s62
    %s64 = sphi 0, %s62
    %s65 = sphi 0, %s64
    %s79 = sphi 0, %s65
    %s83 = sphi 0, %s83
    %s85 = sphi 0, %s83
    %s86 = sphi 0, %s85
    %s100 = sphi 0, %s86
    %s104 = sphi 0, %s104
    %s106 = sphi 0, %s104
    %s107 = sphi 0, %s106
    %s121 = sphi 0, %s107
    %s125 = sphi 0, %s125
    %s127 = sphi 0, %s125
    %s128 = sphi 0, %s127
    %s142 = sphi 0, %s128
    %s146 = sphi 0, %s146
    %s148 = sphi 0, %s146
    %s149 = sphi 0, %s148
    %s163 = sphi 0, %s149
    %s167 = sphi 0, %s167
    %s169 = sphi 0, %s167
    %s170 = sphi 0, %s169
    %s184 = sphi 0, %s170
    %s188 = sphi 0, %s188
    %s190 = sphi 0, %s188
    %s191 = sphi 0, %s190
    %s205 = sphi 0, %s191
    %s209 = sphi 0, %s209
    %s211 = sphi 0, %s209
    %s212 = sphi 0, %s211
    %s226 = sphi 0, %s212
    %s230 = sphi 0, %s230
    %s232 = sphi 0, %s230
    %s233 = sphi 0, %s232
    %s247 = sphi 0, %s233
    %s251 = sphi 0, %s251
    %s253 = sphi 0, %s251
    %s254 = sphi 0, %s253
    %s268 = sphi 0, %s254
    %s272 = sphi 0, %s272
    %s274 = sphi 0, %s272
    %s275 = sphi 0, %s274
    %s289 = sphi 0, %s275
    %s293 = sphi 0, %s293
    %s295 = sphi 0, %s293
    %s296 = sphi 0, %s295
    %s310 = sphi 0, %s296
    %s314 = sphi 0, %s314
    %s316 = sphi 0, %s314
    %s317 = sphi 0, %s316
    %s331 = sphi 0, %s317
    %s335 = sphi 0, %s335
    %s337 = sphi 0, %s335
    %s338 = sphi 0, %s337
    %s352 = sphi 0, %s338
    %s356 = sphi 0, %s356
    %s358 = sphi 0, %s356
    %s359 = sphi 0, %s358
    %s373 = sphi 0, %s359
    %s377 = sphi 0, %s377
    %s379 = sphi 0, %s377
    %s380 = sphi 0, %s379
    %s394 = sphi 0, %s380
    %s398 = sphi 0, %s398
    %s400 = sphi 0, %s398
    %s401 = sphi 0, %s400
    %s415 = sphi 0, %s401
    %s419 = sphi 0, %s419
    %s421 = sphi 0, %s419
    %s422 = sphi 0, %s421
    %s436 = sphi 0, %s422
    %s440 = sphi 0, %s440
    %s442 = sphi 0, %s440
    %s443 = sphi 0, %s442
    %s457 = sphi 0, %s443
    %s461 = sphi 0, %s461
    %s463 = sphi 0, %s461
    %s464 = sphi 0, %s463
    %s478 = sphi 0, %s464
    %s482 = sphi 0, %s482
    %s484 = sphi 0, %s482
    %s485 = sphi 0, %s484
    %s499 = sphi 0, %s485
    %s505 = sphi 0, %s507
    %s508 = sphi 0, %s505
    %s509 = sphi 0, %s508
    %s525 = sphi 0, %s509
  $region4: #{movinet_forward.1} parent=0 // loop_header_branch
    %31 = sbr.rel (%p29) target = $region8
  $region5: #{movinet_forward.1} parent=0 // loop_body
    %s33 = ssub.s32 %s28, 1
    %s34 = ssub.s32 %s28, 2
    %s35 = sadd.s32 %s28, 1
    %s36 = ssub.s32 %s28, %s35
    %p37 = scmp.eq.s32.totalorder %s36, 0
    %s39 = sadd.s32 %s38, 1
    %s40 = scalar_select %p37, %s38, %s39
    %p43 = pneg %p37
    %p44 = scmp.eq.s32.totalorder %s28, 1
    %p45 = por %p43, %p44
    %p46 = scmp.ne.s32.totalorder %s38, %s41
    %p47 = scmp.eq.s32.totalorder %s28, 0
    %p48 = por %p46, %p47
    %p49 = scmp.ne.s32.totalorder %s38, %s41
    %p50 = scmp.eq.s32.totalorder %s33, 1
    %p51 = por %p49, %p50
    %p52 = scmp.ne.s32.totalorder %s41, %s42
    %p53 = scmp.eq.s32.totalorder %s33, 0
    %p54 = por %p52, %p53
    %p55 = scmp.ne.s32.totalorder %s41, %s42
    %p56 = scmp.eq.s32.totalorder %s34, 1
    %p57 = por %p55, %p56
    %p59 = scmp.ne.s32.totalorder %s42, %s58
    %p60 = scmp.eq.s32.totalorder %s34, 0
    %p61 = por %p59, %p60
    %s63 = sadd.s32 %s62, 1
    %p66 = scmp.eq.s32.totalorder %s28, 1
    %p67 = scmp.ne.s32.totalorder %s62, %s64
    %p68 = scmp.eq.s32.totalorder %s28, 0
    %p69 = por %p67, %p68
    %p70 = scmp.ne.s32.totalorder %s62, %s64
    %p71 = scmp.eq.s32.totalorder %s33, 1
    %p72 = por %p70, %p71
    %p73 = scmp.ne.s32.totalorder %s64, %s65
    %p74 = scmp.eq.s32.totalorder %s33, 0
    %p75 = por %p73, %p74
    %p76 = scmp.ne.s32.totalorder %s64, %s65
    %p77 = scmp.eq.s32.totalorder %s34, 1
    %p78 = por %p76, %p77
    %p80 = scmp.ne.s32.totalorder %s65, %s79
    %p81 = scmp.eq.s32.totalorder %s34, 0
    %p82 = por %p80, %p81
    %s84 = sadd.s32 %s83, 1
    %p87 = scmp.eq.s32.totalorder %s28, 1
    %p88 = scmp.ne.s32.totalorder %s83, %s85
    %p89 = scmp.eq.s32.totalorder %s28, 0
    %p90 = por %p88, %p89
    %p91 = scmp.ne.s32.totalorder %s83, %s85
    %p92 = scmp.eq.s32.totalorder %s33, 1
    %p93 = por %p91, %p92
    %p94 = scmp.ne.s32.totalorder %s85, %s86
    %p95 = scmp.eq.s32.totalorder %s33, 0
    %p96 = por %p94, %p95
    %p97 = scmp.ne.s32.totalorder %s85, %s86
    %p98 = scmp.eq.s32.totalorder %s34, 1
    %p99 = por %p97, %p98
    %p101 = scmp.ne.s32.totalorder %s86, %s100
    %p102 = scmp.eq.s32.totalorder %s34, 0
    %p103 = por %p101, %p102
    %s105 = sadd.s32 %s104, 1
    %p108 = scmp.eq.s32.totalorder %s28, 1
    %p109 = scmp.ne.s32.totalorder %s104, %s106
    %p110 = scmp.eq.s32.totalorder %s28, 0
    %p111 = por %p109, %p110
    %p112 = scmp.ne.s32.totalorder %s104, %s106
    %p113 = scmp.eq.s32.totalorder %s33, 1
    %p114 = por %p112, %p113
    %p115 = scmp.ne.s32.totalorder %s106, %s107
    %p116 = scmp.eq.s32.totalorder %s33, 0
    %p117 = por %p115, %p116
    %p118 = scmp.ne.s32.totalorder %s106, %s107
    %p119 = scmp.eq.s32.totalorder %s34, 1
    %p120 = por %p118, %p119
    %p122 = scmp.ne.s32.totalorder %s107, %s121
    %p123 = scmp.eq.s32.totalorder %s34, 0
    %p124 = por %p122, %p123
    %s126 = sadd.s32 %s125, 1
    %p129 = scmp.eq.s32.totalorder %s28, 1
    %p130 = scmp.ne.s32.totalorder %s125, %s127
    %p131 = scmp.eq.s32.totalorder %s28, 0
    %p132 = por %p130, %p131
    %p133 = scmp.ne.s32.totalorder %s125, %s127
    %p134 = scmp.eq.s32.totalorder %s33, 1
    %p135 = por %p133, %p134
    %p136 = scmp.ne.s32.totalorder %s127, %s128
    %p137 = scmp.eq.s32.totalorder %s33, 0
    %p138 = por %p136, %p137
    %p139 = scmp.ne.s32.totalorder %s127, %s128
    %p140 = scmp.eq.s32.totalorder %s34, 1
    %p141 = por %p139, %p140
    %p143 = scmp.ne.s32.totalorder %s128, %s142
    %p144 = scmp.eq.s32.totalorder %s34, 0
    %p145 = por %p143, %p144
    %s147 = sadd.s32 %s146, 1
    %p150 = scmp.eq.s32.totalorder %s28, 1
    %p151 = scmp.ne.s32.totalorder %s146, %s148
    %p152 = scmp.eq.s32.totalorder %s28, 0
    %p153 = por %p151, %p152
    %p154 = scmp.ne.s32.totalorder %s146, %s148
    %p155 = scmp.eq.s32.totalorder %s33, 1
    %p156 = por %p154, %p155
    %p157 = scmp.ne.s32.totalorder %s148, %s149
    %p158 = scmp.eq.s32.totalorder %s33, 0
    %p159 = por %p157, %p158
    %p160 = scmp.ne.s32.totalorder %s148, %s149
    %p161 = scmp.eq.s32.totalorder %s34, 1
    %p162 = por %p160, %p161
    %p164 = scmp.ne.s32.totalorder %s149, %s163
    %p165 = scmp.eq.s32.totalorder %s34, 0
    %p166 = por %p164, %p165
    %s168 = sadd.s32 %s167, 1
    %p171 = scmp.eq.s32.totalorder %s28, 1
    %p172 = scmp.ne.s32.totalorder %s167, %s169
    %p173 = scmp.eq.s32.totalorder %s28, 0
    %p174 = por %p172, %p173
    %p175 = scmp.ne.s32.totalorder %s167, %s169
    %p176 = scmp.eq.s32.totalorder %s33, 1
    %p177 = por %p175, %p176
    %p178 = scmp.ne.s32.totalorder %s169, %s170
    %p179 = scmp.eq.s32.totalorder %s33, 0
    %p180 = por %p178, %p179
    %p181 = scmp.ne.s32.totalorder %s169, %s170
    %p182 = scmp.eq.s32.totalorder %s34, 1
    %p183 = por %p181, %p182
    %p185 = scmp.ne.s32.totalorder %s170, %s184
    %p186 = scmp.eq.s32.totalorder %s34, 0
    %p187 = por %p185, %p186
    %s189 = sadd.s32 %s188, 1
    %p192 = scmp.eq.s32.totalorder %s28, 1
    %p193 = scmp.ne.s32.totalorder %s188, %s190
    %p194 = scmp.eq.s32.totalorder %s28, 0
    %p195 = por %p193, %p194
    %p196 = scmp.ne.s32.totalorder %s188, %s190
    %p197 = scmp.eq.s32.totalorder %s33, 1
    %p198 = por %p196, %p197
    %p199 = scmp.ne.s32.totalorder %s190, %s191
    %p200 = scmp.eq.s32.totalorder %s33, 0
    %p201 = por %p199, %p200
    %p202 = scmp.ne.s32.totalorder %s190, %s191
    %p203 = scmp.eq.s32.totalorder %s34, 1
    %p204 = por %p202, %p203
    %p206 = scmp.ne.s32.totalorder %s191, %s205
    %p207 = scmp.eq.s32.totalorder %s34, 0
    %p208 = por %p206, %p207
    %s210 = sadd.s32 %s209, 1
    %p213 = scmp.eq.s32.totalorder %s28, 1
    %p214 = scmp.ne.s32.totalorder %s209, %s211
    %p215 = scmp.eq.s32.totalorder %s28, 0
    %p216 = por %p214, %p215
    %p217 = scmp.ne.s32.totalorder %s209, %s211
    %p218 = scmp.eq.s32.totalorder %s33, 1
    %p219 = por %p217, %p218
    %p220 = scmp.ne.s32.totalorder %s211, %s212
    %p221 = scmp.eq.s32.totalorder %s33, 0
    %p222 = por %p220, %p221
    %p223 = scmp.ne.s32.totalorder %s211, %s212
    %p224 = scmp.eq.s32.totalorder %s34, 1
    %p225 = por %p223, %p224
    %p227 = scmp.ne.s32.totalorder %s212, %s226
    %p228 = scmp.eq.s32.totalorder %s34, 0
    %p229 = por %p227, %p228
    %s231 = sadd.s32 %s230, 1
    %p234 = scmp.eq.s32.totalorder %s28, 1
    %p235 = scmp.ne.s32.totalorder %s230, %s232
    %p236 = scmp.eq.s32.totalorder %s28, 0
    %p237 = por %p235, %p236
    %p238 = scmp.ne.s32.totalorder %s230, %s232
    %p239 = scmp.eq.s32.totalorder %s33, 1
    %p240 = por %p238, %p239
    %p241 = scmp.ne.s32.totalorder %s232, %s233
    %p242 = scmp.eq.s32.totalorder %s33, 0
    %p243 = por %p241, %p242
    %p244 = scmp.ne.s32.totalorder %s232, %s233
    %p245 = scmp.eq.s32.totalorder %s34, 1
    %p246 = por %p244, %p245
    %p248 = scmp.ne.s32.totalorder %s233, %s247
    %p249 = scmp.eq.s32.totalorder %s34, 0
    %p250 = por %p248, %p249
    %s252 = sadd.s32 %s251, 1
    %p255 = scmp.eq.s32.totalorder %s28, 1
    %p256 = scmp.ne.s32.totalorder %s251, %s253
    %p257 = scmp.eq.s32.totalorder %s28, 0
    %p258 = por %p256, %p257
    %p259 = scmp.ne.s32.totalorder %s251, %s253
    %p260 = scmp.eq.s32.totalorder %s33, 1
    %p261 = por %p259, %p260
    %p262 = scmp.ne.s32.totalorder %s253, %s254
    %p263 = scmp.eq.s32.totalorder %s33, 0
    %p264 = por %p262, %p263
    %p265 = scmp.ne.s32.totalorder %s253, %s254
    %p266 = scmp.eq.s32.totalorder %s34, 1
    %p267 = por %p265, %p266
    %p269 = scmp.ne.s32.totalorder %s254, %s268
    %p270 = scmp.eq.s32.totalorder %s34, 0
    %p271 = por %p269, %p270
    %s273 = sadd.s32 %s272, 1
    %p276 = scmp.eq.s32.totalorder %s28, 1
    %p277 = scmp.ne.s32.totalorder %s272, %s274
    %p278 = scmp.eq.s32.totalorder %s28, 0
    %p279 = por %p277, %p278
    %p280 = scmp.ne.s32.totalorder %s272, %s274
    %p281 = scmp.eq.s32.totalorder %s33, 1
    %p282 = por %p280, %p281
    %p283 = scmp.ne.s32.totalorder %s274, %s275
    %p284 = scmp.eq.s32.totalorder %s33, 0
    %p285 = por %p283, %p284
    %p286 = scmp.ne.s32.totalorder %s274, %s275
    %p287 = scmp.eq.s32.totalorder %s34, 1
    %p288 = por %p286, %p287
    %p290 = scmp.ne.s32.totalorder %s275, %s289
    %p291 = scmp.eq.s32.totalorder %s34, 0
    %p292 = por %p290, %p291
    %s294 = sadd.s32 %s293, 1
    %p297 = scmp.eq.s32.totalorder %s28, 1
    %p298 = scmp.ne.s32.totalorder %s293, %s295
    %p299 = scmp.eq.s32.totalorder %s28, 0
    %p300 = por %p298, %p299
    %p301 = scmp.ne.s32.totalorder %s293, %s295
    %p302 = scmp.eq.s32.totalorder %s33, 1
    %p303 = por %p301, %p302
    %p304 = scmp.ne.s32.totalorder %s295, %s296
    %p305 = scmp.eq.s32.totalorder %s33, 0
    %p306 = por %p304, %p305
    %p307 = scmp.ne.s32.totalorder %s295, %s296
    %p308 = scmp.eq.s32.totalorder %s34, 1
    %p309 = por %p307, %p308
    %p311 = scmp.ne.s32.totalorder %s296, %s310
    %p312 = scmp.eq.s32.totalorder %s34, 0
    %p313 = por %p311, %p312
    %s315 = sadd.s32 %s314, 1
    %p318 = scmp.eq.s32.totalorder %s28, 1
    %p319 = scmp.ne.s32.totalorder %s314, %s316
    %p320 = scmp.eq.s32.totalorder %s28, 0
    %p321 = por %p319, %p320
    %p322 = scmp.ne.s32.totalorder %s314, %s316
    %p323 = scmp.eq.s32.totalorder %s33, 1
    %p324 = por %p322, %p323
    %p325 = scmp.ne.s32.totalorder %s316, %s317
    %p326 = scmp.eq.s32.totalorder %s33, 0
    %p327 = por %p325, %p326
    %p328 = scmp.ne.s32.totalorder %s316, %s317
    %p329 = scmp.eq.s32.totalorder %s34, 1
    %p330 = por %p328, %p329
    %p332 = scmp.ne.s32.totalorder %s317, %s331
    %p333 = scmp.eq.s32.totalorder %s34, 0
    %p334 = por %p332, %p333
    %s336 = sadd.s32 %s335, 1
    %p339 = scmp.eq.s32.totalorder %s28, 1
    %p340 = scmp.ne.s32.totalorder %s335, %s337
    %p341 = scmp.eq.s32.totalorder %s28, 0
    %p342 = por %p340, %p341
    %p343 = scmp.ne.s32.totalorder %s335, %s337
    %p344 = scmp.eq.s32.totalorder %s33, 1
    %p345 = por %p343, %p344
    %p346 = scmp.ne.s32.totalorder %s337, %s338
    %p347 = scmp.eq.s32.totalorder %s33, 0
    %p348 = por %p346, %p347
    %p349 = scmp.ne.s32.totalorder %s337, %s338
    %p350 = scmp.eq.s32.totalorder %s34, 1
    %p351 = por %p349, %p350
    %p353 = scmp.ne.s32.totalorder %s338, %s352
    %p354 = scmp.eq.s32.totalorder %s34, 0
    %p355 = por %p353, %p354
    %s357 = sadd.s32 %s356, 1
    %p360 = scmp.eq.s32.totalorder %s28, 1
    %p361 = scmp.ne.s32.totalorder %s356, %s358
    %p362 = scmp.eq.s32.totalorder %s28, 0
    %p363 = por %p361, %p362
    %p364 = scmp.ne.s32.totalorder %s356, %s358
    %p365 = scmp.eq.s32.totalorder %s33, 1
    %p366 = por %p364, %p365
    %p367 = scmp.ne.s32.totalorder %s358, %s359
    %p368 = scmp.eq.s32.totalorder %s33, 0
    %p369 = por %p367, %p368
    %p370 = scmp.ne.s32.totalorder %s358, %s359
    %p371 = scmp.eq.s32.totalorder %s34, 1
    %p372 = por %p370, %p371
    %p374 = scmp.ne.s32.totalorder %s359, %s373
    %p375 = scmp.eq.s32.totalorder %s34, 0
    %p376 = por %p374, %p375
    %s378 = sadd.s32 %s377, 1
    %p381 = scmp.eq.s32.totalorder %s28, 1
    %p382 = scmp.ne.s32.totalorder %s377, %s379
    %p383 = scmp.eq.s32.totalorder %s28, 0
    %p384 = por %p382, %p383
    %p385 = scmp.ne.s32.totalorder %s377, %s379
    %p386 = scmp.eq.s32.totalorder %s33, 1
    %p387 = por %p385, %p386
    %p388 = scmp.ne.s32.totalorder %s379, %s380
    %p389 = scmp.eq.s32.totalorder %s33, 0
    %p390 = por %p388, %p389
    %p391 = scmp.ne.s32.totalorder %s379, %s380
    %p392 = scmp.eq.s32.totalorder %s34, 1
    %p393 = por %p391, %p392
    %p395 = scmp.ne.s32.totalorder %s380, %s394
    %p396 = scmp.eq.s32.totalorder %s34, 0
    %p397 = por %p395, %p396
    %s399 = sadd.s32 %s398, 1
    %p402 = scmp.eq.s32.totalorder %s28, 1
    %p403 = scmp.ne.s32.totalorder %s398, %s400
    %p404 = scmp.eq.s32.totalorder %s28, 0
    %p405 = por %p403, %p404
    %p406 = scmp.ne.s32.totalorder %s398, %s400
    %p407 = scmp.eq.s32.totalorder %s33, 1
    %p408 = por %p406, %p407
    %p409 = scmp.ne.s32.totalorder %s400, %s401
    %p410 = scmp.eq.s32.totalorder %s33, 0
    %p411 = por %p409, %p410
    %p412 = scmp.ne.s32.totalorder %s400, %s401
    %p413 = scmp.eq.s32.totalorder %s34, 1
    %p414 = por %p412, %p413
    %p416 = scmp.ne.s32.totalorder %s401, %s415
    %p417 = scmp.eq.s32.totalorder %s34, 0
    %p418 = por %p416, %p417
    %s420 = sadd.s32 %s419, 1
    %p423 = scmp.eq.s32.totalorder %s28, 1
    %p424 = scmp.ne.s32.totalorder %s419, %s421
    %p425 = scmp.eq.s32.totalorder %s28, 0
    %p426 = por %p424, %p425
    %p427 = scmp.ne.s32.totalorder %s419, %s421
    %p428 = scmp.eq.s32.totalorder %s33, 1
    %p429 = por %p427, %p428
    %p430 = scmp.ne.s32.totalorder %s421, %s422
    %p431 = scmp.eq.s32.totalorder %s33, 0
    %p432 = por %p430, %p431
    %p433 = scmp.ne.s32.totalorder %s421, %s422
    %p434 = scmp.eq.s32.totalorder %s34, 1
    %p435 = por %p433, %p434
    %p437 = scmp.ne.s32.totalorder %s422, %s436
    %p438 = scmp.eq.s32.totalorder %s34, 0
    %p439 = por %p437, %p438
    %s441 = sadd.s32 %s440, 1
    %p444 = scmp.eq.s32.totalorder %s28, 1
    %p445 = scmp.ne.s32.totalorder %s440, %s442
    %p446 = scmp.eq.s32.totalorder %s28, 0
    %p447 = por %p445, %p446
    %p448 = scmp.ne.s32.totalorder %s440, %s442
    %p449 = scmp.eq.s32.totalorder %s33, 1
    %p450 = por %p448, %p449
    %p451 = scmp.ne.s32.totalorder %s442, %s443
    %p452 = scmp.eq.s32.totalorder %s33, 0
    %p453 = por %p451, %p452
    %p454 = scmp.ne.s32.totalorder %s442, %s443
    %p455 = scmp.eq.s32.totalorder %s34, 1
    %p456 = por %p454, %p455
    %p458 = scmp.ne.s32.totalorder %s443, %s457
    %p459 = scmp.eq.s32.totalorder %s34, 0
    %p460 = por %p458, %p459
    %s462 = sadd.s32 %s461, 1
    %p465 = scmp.eq.s32.totalorder %s28, 1
    %p466 = scmp.ne.s32.totalorder %s461, %s463
    %p467 = scmp.eq.s32.totalorder %s28, 0
    %p468 = por %p466, %p467
    %p469 = scmp.ne.s32.totalorder %s461, %s463
    %p470 = scmp.eq.s32.totalorder %s33, 1
    %p471 = por %p469, %p470
    %p472 = scmp.ne.s32.totalorder %s463, %s464
    %p473 = scmp.eq.s32.totalorder %s33, 0
    %p474 = por %p472, %p473
    %p475 = scmp.ne.s32.totalorder %s463, %s464
    %p476 = scmp.eq.s32.totalorder %s34, 1
    %p477 = por %p475, %p476
    %p479 = scmp.ne.s32.totalorder %s464, %s478
    %p480 = scmp.eq.s32.totalorder %s34, 0
    %p481 = por %p479, %p480
    %s483 = sadd.s32 %s482, 1
    %p486 = scmp.eq.s32.totalorder %s28, 1
    %p487 = scmp.ne.s32.totalorder %s482, %s484
    %p488 = scmp.eq.s32.totalorder %s28, 0
    %p489 = por %p487, %p488
    %p490 = scmp.ne.s32.totalorder %s482, %s484
    %p491 = scmp.eq.s32.totalorder %s33, 1
    %p492 = por %p490, %p491
    %p493 = scmp.ne.s32.totalorder %s484, %s485
    %p494 = scmp.eq.s32.totalorder %s33, 0
    %p495 = por %p493, %p494
    %p496 = scmp.ne.s32.totalorder %s484, %s485
    %p497 = scmp.eq.s32.totalorder %s34, 1
    %p498 = por %p496, %p497
    %p500 = scmp.ne.s32.totalorder %s485, %s499
    %p501 = scmp.eq.s32.totalorder %s34, 0
    %p502 = por %p500, %p501
    %s503 = ssub.s32 %s28, %s35
    %p504 = scmp.eq.s32.totalorder %s503, 0
    %s506 = sadd.s32 %s505, 1
    %s507 = scalar_select %p504, %s505, %s506
    %p510 = pneg %p504
    %p511 = scmp.eq.s32.totalorder %s28, 1
    %p512 = por %p510, %p511
    %p513 = scmp.ne.s32.totalorder %s505, %s508
    %p514 = scmp.eq.s32.totalorder %s28, 0
    %p515 = por %p513, %p514
    %p516 = scmp.ne.s32.totalorder %s505, %s508
    %p517 = scmp.eq.s32.totalorder %s33, 1
    %p518 = por %p516, %p517
    %p519 = scmp.ne.s32.totalorder %s508, %s509
    %p520 = scmp.eq.s32.totalorder %s33, 0
    %p521 = por %p519, %p520
    %p522 = scmp.ne.s32.totalorder %s508, %s509
    %p523 = scmp.eq.s32.totalorder %s34, 1
    %p524 = por %p522, %p523
    %p526 = scmp.ne.s32.totalorder %s509, %s525
    %p527 = scmp.eq.s32.totalorder %s34, 0
    %p528 = por %p526, %p527
    %p529 = scmp.le.s32.totalorder 1, %s28
    %p530 = scmp.lt.s32.totalorder %s28, 3
    %p531 = pnand %p529, %p530
    %p532 = pneg %p531
    // Predicated region
    $region9: #{movinet_forward.1} parent=5 // pred_check
      _
    $region10: #{movinet_forward.1} parent=5 // pred_check_branch
      %534 = sbr.rel (%p531) target = $region12
    $region11: #{movinet_forward.1} parent=5 // pred_region
      %s535 = ssub.s32 %s28, 1
      // Predicated region
      $region13: #{movinet_forward.1} parent=11 // pred_check
        %p536 = pneg %p75
      $region14: #{movinet_forward.1} parent=11 // pred_check_branch
        %538 = sbr.rel (%p536) target = $region16
      $region15: #{movinet_forward.1} parent=11 // pred_region
        _
      $region16: #{movinet_forward.1} parent=11 // pred_fallthru
        _
      // Predicated region
      $region17: #{movinet_forward.1} parent=11 // pred_check
        %p539 = pneg %p96
      $region18: #{movinet_forward.1} parent=11 // pred_check_branch
        %541 = sbr.rel (%p539) target = $region20
      $region19: #{movinet_forward.1} parent=11 // pred_region
        _
      $region20: #{movinet_forward.1} parent=11 // pred_fallthru
        _
      // Predicated region
      $region21: #{movinet_forward.1} parent=11 // pred_check
        %p542 = pneg %p117
      $region22: #{movinet_forward.1} parent=11 // pred_check_branch
        %544 = sbr.rel (%p542) target = $region24
      $region23: #{movinet_forward.1} parent=11 // pred_region
        _
      $region24: #{movinet_forward.1} parent=11 // pred_fallthru
        _
      // Predicated region
      $region25: #{movinet_forward.1} parent=11 // pred_check
        %p545 = pneg %p138
      $region26: #{movinet_forward.1} parent=11 // pred_check_branch
        %547 = sbr.rel (%p545) target = $region28
      $region27: #{movinet_forward.1} parent=11 // pred_region
        _
      $region28: #{movinet_forward.1} parent=11 // pred_fallthru
        _
      // Predicated region
      $region29: #{movinet_forward.1} parent=11 // pred_check
        %p548 = pneg %p159
      $region30: #{movinet_forward.1} parent=11 // pred_check_branch
        %550 = sbr.rel (%p548) target = $region32
      $region31: #{movinet_forward.1} parent=11 // pred_region
        _
      $region32: #{movinet_forward.1} parent=11 // pred_fallthru
        _
      // Predicated region
      $region33: #{movinet_forward.1} parent=11 // pred_check
        %p551 = pneg %p180
      $region34: #{movinet_forward.1} parent=11 // pred_check_branch
        %553 = sbr.rel (%p551) target = $region36
      $region35: #{movinet_forward.1} parent=11 // pred_region
        _
      $region36: #{movinet_forward.1} parent=11 // pred_fallthru
        _
      // Predicated region
      $region37: #{movinet_forward.1} parent=11 // pred_check
        %p554 = pneg %p201
      $region38: #{movinet_forward.1} parent=11 // pred_check_branch
        %556 = sbr.rel (%p554) target = $region40
      $region39: #{movinet_forward.1} parent=11 // pred_region
        _
      $region40: #{movinet_forward.1} parent=11 // pred_fallthru
        _
      // Predicated region
      $region41: #{movinet_forward.1} parent=11 // pred_check
        %p557 = pneg %p222
      $region42: #{movinet_forward.1} parent=11 // pred_check_branch
        %559 = sbr.rel (%p557) target = $region44
      $region43: #{movinet_forward.1} parent=11 // pred_region
        _
      $region44: #{movinet_forward.1} parent=11 // pred_fallthru
        _
      // Predicated region
      $region45: #{movinet_forward.1} parent=11 // pred_check
        %p560 = pneg %p243
      $region46: #{movinet_forward.1} parent=11 // pred_check_branch
        %562 = sbr.rel (%p560) target = $region48
      $region47: #{movinet_forward.1} parent=11 // pred_region
        _
      $region48: #{movinet_forward.1} parent=11 // pred_fallthru
        _
      // Predicated region
      $region49: #{movinet_forward.1} parent=11 // pred_check
        %p563 = pneg %p264
      $region50: #{movinet_forward.1} parent=11 // pred_check_branch
        %565 = sbr.rel (%p563) target = $region52
      $region51: #{movinet_forward.1} parent=11 // pred_region
        _
      $region52: #{movinet_forward.1} parent=11 // pred_fallthru
        _
      // Predicated region
      $region53: #{movinet_forward.1} parent=11 // pred_check
        %p566 = pneg %p285
      $region54: #{movinet_forward.1} parent=11 // pred_check_branch
        %568 = sbr.rel (%p566) target = $region56
      $region55: #{movinet_forward.1} parent=11 // pred_region
        _
      $region56: #{movinet_forward.1} parent=11 // pred_fallthru
        _
      // Predicated region
      $region57: #{movinet_forward.1} parent=11 // pred_check
        %p569 = pneg %p306
      $region58: #{movinet_forward.1} parent=11 // pred_check_branch
        %571 = sbr.rel (%p569) target = $region60
      $region59: #{movinet_forward.1} parent=11 // pred_region
        _
      $region60: #{movinet_forward.1} parent=11 // pred_fallthru
        _
      // Predicated region
      $region61: #{movinet_forward.1} parent=11 // pred_check
        %p572 = pneg %p327
      $region62: #{movinet_forward.1} parent=11 // pred_check_branch
        %574 = sbr.rel (%p572) target = $region64
      $region63: #{movinet_forward.1} parent=11 // pred_region
        _
      $region64: #{movinet_forward.1} parent=11 // pred_fallthru
        _
      // Predicated region
      $region65: #{movinet_forward.1} parent=11 // pred_check
        %p575 = pneg %p348
      $region66: #{movinet_forward.1} parent=11 // pred_check_branch
        %577 = sbr.rel (%p575) target = $region68
      $region67: #{movinet_forward.1} parent=11 // pred_region
        _
      $region68: #{movinet_forward.1} parent=11 // pred_fallthru
        _
      // Predicated region
      $region69: #{movinet_forward.1} parent=11 // pred_check
        %p578 = pneg %p369
      $region70: #{movinet_forward.1} parent=11 // pred_check_branch
        %580 = sbr.rel (%p578) target = $region72
      $region71: #{movinet_forward.1} parent=11 // pred_region
        _
      $region72: #{movinet_forward.1} parent=11 // pred_fallthru
        _
      // Predicated region
      $region73: #{movinet_forward.1} parent=11 // pred_check
        %p581 = pneg %p390
      $region74: #{movinet_forward.1} parent=11 // pred_check_branch
        %583 = sbr.rel (%p581) target = $region76
      $region75: #{movinet_forward.1} parent=11 // pred_region
        _
      $region76: #{movinet_forward.1} parent=11 // pred_fallthru
        _
      // Predicated region
      $region77: #{movinet_forward.1} parent=11 // pred_check
        %p584 = pneg %p411
      $region78: #{movinet_forward.1} parent=11 // pred_check_branch
        %586 = sbr.rel (%p584) target = $region80
      $region79: #{movinet_forward.1} parent=11 // pred_region
        _
      $region80: #{movinet_forward.1} parent=11 // pred_fallthru
        _
      // Predicated region
      $region81: #{movinet_forward.1} parent=11 // pred_check
        %p587 = pneg %p432
      $region82: #{movinet_forward.1} parent=11 // pred_check_branch
        %589 = sbr.rel (%p587) target = $region84
      $region83: #{movinet_forward.1} parent=11 // pred_region
        _
      $region84: #{movinet_forward.1} parent=11 // pred_fallthru
        _
      // Predicated region
      $region85: #{movinet_forward.1} parent=11 // pred_check
        %p590 = pneg %p453
      $region86: #{movinet_forward.1} parent=11 // pred_check_branch
        %592 = sbr.rel (%p590) target = $region88
      $region87: #{movinet_forward.1} parent=11 // pred_region
        _
      $region88: #{movinet_forward.1} parent=11 // pred_fallthru
        _
      // Predicated region
      $region89: #{movinet_forward.1} parent=11 // pred_check
        %p593 = pneg %p474
      $region90: #{movinet_forward.1} parent=11 // pred_check_branch
        %595 = sbr.rel (%p593) target = $region92
      $region91: #{movinet_forward.1} parent=11 // pred_region
        _
      $region92: #{movinet_forward.1} parent=11 // pred_fallthru
        _
      // Predicated region
      $region93: #{movinet_forward.1} parent=11 // pred_check
        %p596 = pneg %p495
      $region94: #{movinet_forward.1} parent=11 // pred_check_branch
        %598 = sbr.rel (%p596) target = $region96
      $region95: #{movinet_forward.1} parent=11 // pred_region
        _
      $region96: #{movinet_forward.1} parent=11 // pred_fallthru
        _
    $region12: #{movinet_forward.1} parent=5 // pred_fallthru
      _
    %p599 = scmp.lt.s32.totalorder %s28, 2
    // Predicated region
    $region97: #{movinet_forward.1} parent=5 // pred_check
      %p600 = pneg %p599
    $region98: #{movinet_forward.1} parent=5 // pred_check_branch
      %602 = sbr.rel (%p600) target = $region100
    $region99: #{movinet_forward.1} parent=5 // pred_region
      // Predicated region
      $region101: #{movinet_forward.1} parent=99 // pred_check
        %p603 = pneg %p48
      $region102: #{movinet_forward.1} parent=99 // pred_check_branch
        %605 = sbr.rel (%p603) target = $region104
      $region103: #{movinet_forward.1} parent=99 // pred_region
        %p606 = scmp.lt.s32.totalorder %s28, 1
        %s607 = scalar_select %p606, %s28, 1
        %s608 = smul.addr %s607, 8
        %s609 = smul.addr %s608, 8
        %s610 = scalar_lea.vmem %s0, %s609
      $region104: #{movinet_forward.1} parent=99 // pred_fallthru
        _
    $region100: #{movinet_forward.1} parent=5 // pred_fallthru
      _
    %p611 = scmp.le.s32.totalorder 1, %s28
    %p612 = scmp.lt.s32.totalorder %s28, 3
    %p613 = pnand %p611, %p612
    %p614 = pneg %p613
    // Predicated region
    $region105: #{movinet_forward.1} parent=5 // pred_check
      _
    $region106: #{movinet_forward.1} parent=5 // pred_check_branch
      %616 = sbr.rel (%p613) target = $region108
    $region107: #{movinet_forward.1} parent=5 // pred_region
      %s617 = ssub.s32 %s28, 1
      %p618 = scmp.lt.s32.totalorder %s33, 1
      %s619 = scalar_select %p618, %s33, 1
      %s620 = smul.addr %s619, 8
      %s621 = smul.addr %s620, 8
      %s622 = scalar_lea.vmem %s0, %s621
      %p623 = pneg %p54
      %p624 = pneg %p51
      %p625 = pneg %p75
      %p626 = pneg %p72
      %p627 = pneg %p96
      %p628 = pneg %p93
      %p629 = pneg %p117
      %p630 = pneg %p114
      %p631 = pneg %p138
      %p632 = pneg %p135
      %p633 = pneg %p159
      %p634 = pneg %p156
      %p635 = pneg %p180
      %p636 = pneg %p177
      %p637 = pneg %p201
      %p638 = pneg %p198
      %p639 = pneg %p222
      %p640 = pneg %p219
      %p641 = pneg %p243
      %p642 = pneg %p240
      %p643 = pneg %p264
      %p644 = pneg %p261
      %p645 = pneg %p285
      %p646 = pneg %p282
      %p647 = pneg %p306
      %p648 = pneg %p303
      %p649 = pneg %p327
      %p650 = pneg %p324
      %p651 = pneg %p348
      %p652 = pneg %p345
      %p653 = pneg %p369
      %p654 = pneg %p366
      %p655 = pneg %p390
      %p656 = pneg %p387
      %p657 = pneg %p411
      %p658 = pneg %p408
      %p659 = pneg %p432
      %p660 = pneg %p429
      %p661 = pneg %p453
      %p662 = pneg %p450
      %p663 = pneg %p474
      %p664 = pneg %p471
      %p665 = pneg %p495
      %p666 = pneg %p492
      %p667 = pneg %p521
      %p668 = pneg %p518
      %p669 = scmp.lt.s32.totalorder %s33, 1
      %s670 = scalar_select %p669, %s33, 1
      %s671 = smul.addr %s670, 2
      %s672 = smul.addr %s671, 8
      %s673 = scalar_lea.vmem %s22, %s672
      %p674 = scmp.lt.s32.totalorder %s33, 1
      %s675 = scalar_select %p674, %s33, 1
      %s676 = smul.addr %s675, 8
      %s677 = smul.addr %s676, 8
      %s678 = scalar_lea.vmem %s0, %s677
      %p679 = scmp.lt.s32.totalorder %s33, 1
      %s680 = scalar_select %p679, %s33, 1
      %s681 = smul.addr %s680, 2
      %s682 = smul.addr %s681, 8
      %s683 = scalar_lea.vmem %s22, %s682
      %v685 = vld [vmem:[%s5] sm:$0xf]
      %v686 = vld [vmem:[%s678] sm:$0xff]
      %v687 = vld [vmem:[%s678 + $0x8] sm:$0xff]
      %v688 = vld [vmem:[%s678 + $0x10] sm:$0xff]
      %v689 = vld [vmem:[%s678 + $0x18] sm:$0xff]
      %v690 = vld [vmem:[%s678 + $0x20] sm:$0xff]
      %v691 = vld [vmem:[%s678 + $0x28] sm:$0xff]
      %v692 = vld [vmem:[%s678 + $0x30] sm:$0xf]
      %v693 = vld [vmem:[%s678 + $0x38] sm:$0xf]
      %v694 = vpack.c.bf16 %v688, %v686
      %v695 = vpack.c.bf16 %v689, %v687
      %v696 = vpack.c.bf16 %v692, %v690
      %v697 = vpack.c.bf16 %v693, %v691
      %vm698 = vcmask 228352
      %v700 = vsel %vm698, %v685, 0
      %vm702 = vcmask 1045504
      %v704 = vsel %vm702, %v696, 0
      %v707 = vsel %vm702, %v697, 0
      %709 = vmatprep.subr.bf16.mxu0 %v695
      %710 = vmatpush1.bf16.msra.mxu0 %v694
      %711 = vmatprep.subr.bf16.mxu0 %v707
      %712 = vmatpush1.bf16.msra.mxu0 %v704
      %713 = vmatprep.subr.bf16.mxu0 0
      %714 = vmatpush1.bf16.msra.mxu0 0
      %715 = vmatprep.subr.bf16.mxu0 0
      %716 = vmatpush1.bf16.msra.mxu0 0
      %717 = vmatprep.subr.bf16.mxu0 0
      %718 = vmatpush1.bf16.msra.mxu0 0
      %719 = vmatprep.subr.bf16.mxu0 0
      %720 = vmatpush1.bf16.msra.mxu0 0
      %721 = vmatprep.subr.bf16.mxu0 0
      %722 = vmatpush1.bf16.msra.mxu0 0
      %723 = vmatprep.subr.bf16.mxu0 0
      %724 = vmatpush1.bf16.msra.mxu0 0
      %725 = vmatprep.subr.bf16.mxu0 0
      %726 = vmatpush1.bf16.msra.mxu0 0
      %727 = vmatprep.subr.bf16.mxu0 0
      %728 = vmatpush1.bf16.msra.mxu0 0
      %729 = vmatprep.subr.bf16.mxu0 0
      %730 = vmatpush1.bf16.msra.mxu0 0
      %731 = vmatprep.subr.bf16.mxu0 0
      %732 = vmatpush1.bf16.msra.mxu0 0
      %733 = vmatprep.subr.bf16.mxu0 0
      %734 = vmatpush1.bf16.msra.mxu0 0
      %735 = vmatprep.subr.bf16.mxu0 0
      %736 = vmatpush1.bf16.msra.mxu0 0
      %737 = vmatprep.subr.bf16.mxu0 0
      %738 = vmatpush1.bf16.msra.mxu0 0
      %739 = vmatprep.subr.bf16.mxu0 0
      %740 = vmatpush1.bf16.msra.mxu0 0
      %741 = vmatprep.mubr.bf16.mxu0 0
      %742 = vmatmul.mubr.bf16.gmra.mrb[0].mxu0 %v700
      %v743 = vpop.f32.mrb[0].mxu0
      %v744 = vadd.f32 0.0, %v743
      %v745 = vpop.f32.mrb[0].mxu0
      %v746 = vadd.f32 0.0, %v745
      %v747 = vpop.f32.mrb[0].mxu0
      %v748 = vpop.f32.mrb[0].mxu0
      %749 = vdwg.mxu0
      %v750 = vxor.u32 %v744, 2147483648
      %v751 = vxor.u32 %v746, 2147483648
      %v752 = vmul.f32 %v750, 1.442695
      %v753 = vpow.pop %v752
      %v754 = vmul.f32 %v751, 1.442695
      %v755 = vpow.pop %v754
      %v756 = vadd.f32 %v753, 1.0
      %v757 = vadd.f32 %v755, 1.0
      %v758 = vrcp.pop %v756
      %v759 = vmul.f32 1.0, %v758
      %v760 = vrcp.pop %v757
      %v761 = vmul.f32 1.0, %v760
      %v762 = vmul.f32 %v744, %v759
      %v763 = vmul.f32 %v746, %v761
      %v764 = vld [vmem:[%s2] sm:$0xff]
      %v765 = vld [vmem:[%s2 + $0x8] sm:$0xff]
      %v766 = vld [vmem:[%s2 + $0x10] sm:$0xff]
      %v767 = vld [vmem:[%s2 + $0x18] sm:$0xff]
      %v768 = vld [vmem:[%s2 + $0x20] sm:$0xff]
      %v769 = vld [vmem:[%s2 + $0x28] sm:$0xff]
      %v770 = vld [vmem:[%s2 + $0x30] sm:$0xff]
      %v771 = vld [vmem:[%s2 + $0x38] sm:$0xff]
      %v772 = vld [vmem:[%s2 + $0x40] sm:$0xff]
      %v773 = vld [vmem:[%s2 + $0x48] sm:$0xff]
      %v774 = vld [vmem:[%s2 + $0x50] sm:$0xff]
      %v775 = vld [vmem:[%s2 + $0x58] sm:$0xff]
      %v776 = vld [vmem:[%s2 + $0x60] sm:$0xff]
      %v777 = vld [vmem:[%s2 + $0x68] sm:$0xff]
      %v778 = vld [vmem:[%s2 + $0x70] sm:$0xff]
      %v779 = vld [vmem:[%s2 + $0x78] sm:$0xff]
      %v780 = vld [vmem:[%s2 + $0x80] sm:$0xff]
      %v781 = vld [vmem:[%s2 + $0x88] sm:$0xff]
      %v782 = vld [vmem:[%s2 + $0x90] sm:$0xff]
      %v783 = vld [vmem:[%s2 + $0x98] sm:$0xff]
      %v784 = vld [vmem:[%s2 + $0xa0] sm:$0xff]
      %v785 = vld [vmem:[%s2 + $0xa8] sm:$0xff]
      %v786 = vld [vmem:[%s2 + $0xb0] sm:$0xff]
      %v787 = vld [vmem:[%s2 + $0xb8] sm:$0xff]
      %v788 = vld [vmem:[%s2 + $0xc0] sm:$0xff]
      %v789 = vld [vmem:[%s2 + $0xc8] sm:$0xff]
      %v790 = vld [vmem:[%s2 + $0xd0] sm:$0xff]
      %v791 = vld [vmem:[%s2 + $0xd8] sm:$0xff]
      %v792 = vld [vmem:[%s2 + $0xe0] sm:$0xff]
      %v793 = vld [vmem:[%s2 + $0xe8] sm:$0xff]
      %v794 = vld [vmem:[%s2 + $0xf0] sm:$0xff]
      %v795 = vld [vmem:[%s2 + $0xf8] sm:$0xff]
      %v796 = vld [vmem:[%s3] sm:$0xff]
      %v797 = vld [vmem:[%s4] sm:$0xf]
      %v798 = vld [vmem:[%s11] sm:$0xff]
      %v799 = vld [vmem:[%s11 + $0x8] sm:$0xff]
      %v800 = vld [vmem:[%s6] sm:$0xf]
      %v801 = vld [vmem:[%s6 + $0x4] sm:$0xf]
      %v802 = vpack.c.bf16 %v762, %v762
      %v803 = vpack.c.bf16 %v763, %v763
      %805 = vset.pattern.permute.xlu0 0
      %806 = vperm.xlu0 %805, %v798
      %v807 = vpop.permute.xlu0 %806
      %810 = vset.pattern.permute.xlu0 0
      %811 = vperm.xlu0 %810, %v799
      %v812 = vpop.permute.xlu0 %811
      %v816 = vunpack.c.l.b16 %v800
      %v817 = vunpack.c.l.b16 %v801
      %v818 = vpack.c.b16 %v817, %v816
      %vm819 = vcmask 64512
      %v821 = vsel %vm819, %v818, 0
      %vm823 = vcmask 1043456
      %v825 = vsel %vm823, %v802, 0
      %v828 = vsel %vm823, %v803, 0
      %830 = vmatprep.subr.bf16.mxu0 %v828
      %831 = vmatpush1.bf16.msra.mxu0 %v825
      %832 = vmatprep.subr.bf16.mxu0 0
      %833 = vmatpush1.bf16.msra.mxu0 0
      %834 = vmatprep.subr.bf16.mxu0 0
      %835 = vmatpush1.bf16.msra.mxu0 0
      %836 = vmatprep.subr.bf16.mxu0 0
      %837 = vmatpush1.bf16.msra.mxu0 0
      %838 = vmatprep.subr.bf16.mxu0 0
      %839 = vmatpush1.bf16.msra.mxu0 0
      %840 = vmatprep.subr.bf16.mxu0 0
      %841 = vmatpush1.bf16.msra.mxu0 0
      %842 = vmatprep.subr.bf16.mxu0 0
      %843 = vmatpush1.bf16.msra.mxu0 0
      %844 = vmatprep.subr.bf16.mxu0 0
      %845 = vmatpush1.bf16.msra.mxu0 0
      %846 = vmatprep.subr.bf16.mxu0 0
      %847 = vmatpush1.bf16.msra.mxu0 0
      %848 = vmatprep.subr.bf16.mxu0 0
      %849 = vmatpush1.bf16.msra.mxu0 0
      %850 = vmatprep.subr.bf16.mxu0 0
      %851 = vmatpush1.bf16.msra.mxu0 0
      %852 = vmatprep.subr.bf16.mxu0 0
      %853 = vmatpush1.bf16.msra.mxu0 0
      %854 = vmatprep.subr.bf16.mxu0 0
      %855 = vmatpush1.bf16.msra.mxu0 0
      %856 = vmatprep.subr.bf16.mxu0 0
      %857 = vmatpush1.bf16.msra.mxu0 0
      %858 = vmatprep.subr.bf16.mxu0 0
      %859 = vmatpush1.bf16.msra.mxu0 0
      %860 = vmatprep.subr.bf16.mxu0 0
      %861 = vmatpush1.bf16.msra.mxu0 0
      %862 = vmatprep.mubr.bf16.mxu0 0
      %863 = vmatmul.mubr.bf16.gmra.mrb[0].mxu0 %v821
      %v864 = vpop.f32.mrb[0].mxu0
      %v865 = vadd.f32 %v807, %v864
      %v866 = vpop.f32.mrb[0].mxu0
      %v867 = vadd.f32 %v807, %v866
      %v868 = vpop.f32.mrb[0].mxu0
      %v869 = vadd.f32 %v812, %v868
      %v870 = vpop.f32.mrb[0].mxu0
      %v871 = vadd.f32 %v812, %v870
      %872 = vdwg.mxu0
      %v873 = vxor.u32 %v865, 2147483648
      %v874 = vxor.u32 %v867, 2147483648
      %v875 = vxor.u32 %v869, 2147483648
      %v876 = vxor.u32 %v871, 2147483648
      %v877 = vmul.f32 %v873, 1.442695
      %v878 = vpow.pop %v877
      %v879 = vmul.f32 %v874, 1.442695
      %v880 = vpow.pop %v879
      %v881 = vmul.f32 %v875, 1.442695
      %v882 = vpow.pop %v881
      %v883 = vmul.f32 %v876, 1.442695
      %v884 = vpow.pop %v883
      %v885 = vadd.f32 %v878, 1.0
      %v886 = vadd.f32 %v880, 1.0
      %v887 = vadd.f32 %v882, 1.0
      %v888 = vadd.f32 %v884, 1.0
      %v889 = vrcp.pop %v885
      %v890 = vmul.f32 1.0, %v889
      %v891 = vrcp.pop %v886
      %v892 = vmul.f32 1.0, %v891
      %v893 = vrcp.pop %v887
      %v894 = vmul.f32 1.0, %v893
      %v895 = vrcp.pop %v888
      %v896 = vmul.f32 1.0, %v895
      %v897 = vmul.f32 %v865, %v890
      %v898 = vmul.f32 %v867, %v892
      %v899 = vmul.f32 %v869, %v894
      %v900 = vmul.f32 %v871, %v896
      %v901 = vld [vmem:[%s7] sm:$0xff]
      %v902 = vld [vmem:[%s7 + $0x8] sm:$0xff]
      %903 = vrot.lane.b32.xlu0 %v897, 9
      %v904 = vpop.permute.xlu0 %903
      %905 = vrot.lane.b32.xlu0 %v899, 9
      %v906 = vpop.permute.xlu0 %905
      %907 = vrot.lane.b32.xlu0 %v898, 9
      %v908 = vpop.permute.xlu0 %907
      %909 = vrot.lane.b32.xlu0 %v900, 9
      %v910 = vpop.permute.xlu0 %909
      %v911 = vlaneseq
      %v912 = vand.u32 %v911, 127
      %vm913 = vcmp.lt.s32.totalorder %v912, 9
      %v914 = vsel %vm913, %v904, %v908
      %v915 = vsel %vm913, %v906, %v910
      %v916 = vsel %vm913, %v908, %v904
      %v917 = vsel %vm913, %v910, %v906
      %919 = vset.pattern.permute.xlu0 0
      %920 = vperm.xlu0 %919, %v901
      %v921 = vpop.permute.xlu0 %920
      %924 = vset.pattern.permute.xlu0 0
      %925 = vperm.xlu0 %924, %v902
      %v926 = vpop.permute.xlu0 %925
      %v928 = vmul.f32 %v914, %v921
      %v929 = vmul.f32 %v916, %v921
      %v930 = vmul.f32 %v915, %v926
      %v931 = vmul.f32 %v917, %v926
      %v932 = vld [vmem:[%s1] ss:$8 sm:$0x3]
      %v934 = vlaneseq
      %v935 = vshrl.u32 %v934, 7
      %v936 = vsub.s32 0, %v935
      %v937 = vrot.slane %v932, %v936
      %v938 = vlaneseq
      %v939 = vshrl.u32 %v938, 7
      %v940 = vsub.s32 1, %v939
      %v941 = vrot.slane %v932, %v940
      %v944 = vmul.f32 %v928, %v937
      %v945 = vmul.f32 %v929, %v941
      %v946 = vmul.f32 %v930, %v937
      %v947 = vmul.f32 %v931, %v941
      %v948 = vadd.f32 %v944, 0.0
      %v949 = vadd.f32 %v945, 0.0
      %v950 = vadd.f32 %v946, 0.0
      %v951 = vadd.f32 %v947, 0.0
      %952 = vrot.lane.b32.xlu0 %v897, 8
      %v953 = vpop.permute.xlu0 %952
      %954 = vrot.lane.b32.xlu0 %v899, 8
      %v955 = vpop.permute.xlu0 %954
      %956 = vrot.lane.b32.xlu0 %v898, 8
      %v957 = vpop.permute.xlu0 %956
      %958 = vrot.lane.b32.xlu0 %v900, 8
      %v959 = vpop.permute.xlu0 %958
      %vm960 = vcmp.lt.s32.totalorder %v912, 8
      %v961 = vsel %vm960, %v953, %v957
      %v962 = vsel %vm960, %v955, %v959
      %v963 = vsel %vm960, %v957, %v953
      %v964 = vsel %vm960, %v959, %v955
      %965 = vset.pattern.permute.xlu0 1
      %966 = vperm.xlu0 %965, %v901
      %v967 = vpop.permute.xlu0 %966
      %969 = vset.pattern.permute.xlu0 1
      %970 = vperm.xlu0 %969, %v902
      %v971 = vpop.permute.xlu0 %970
      %v973 = vmul.f32 %v961, %v967
      %v974 = vmul.f32 %v963, %v967
      %v975 = vmul.f32 %v962, %v971
      %v976 = vmul.f32 %v964, %v971
      %s977 = scalar_lea.vmem %s1, 1
      %v978 = vld [vmem:[%s977] ss:$8 sm:$0x3]
      %v980 = vlaneseq
      %v981 = vshrl.u32 %v980, 7
      %v982 = vsub.s32 0, %v981
      %v983 = vrot.slane %v978, %v982
      %v984 = vlaneseq
      %v985 = vshrl.u32 %v984, 7
      %v986 = vsub.s32 1, %v985
      %v987 = vrot.slane %v978, %v986
      %v990 = vmul.f32 %v973, %v983
      %v991 = vmul.f32 %v974, %v987
      %v992 = vmul.f32 %v975, %v983
      %v993 = vmul.f32 %v976, %v987
      %v994 = vadd.f32 %v948, %v990
      %v995 = vadd.f32 %v949, %v991
      %v996 = vadd.f32 %v950, %v992
      %v997 = vadd.f32 %v951, %v993
      %998 = vrot.lane.b32.xlu0 %v897, 7
      %v999 = vpop.permute.xlu0 %998
      %1000 = vrot.lane.b32.xlu0 %v899, 7
      %v1001 = vpop.permute.xlu0 %1000
      %1002 = vrot.lane.b32.xlu0 %v898, 7
      %v1003 = vpop.permute.xlu0 %1002
      %1004 = vrot.lane.b32.xlu0 %v900, 7
      %v1005 = vpop.permute.xlu0 %1004
      %vm1006 = vcmp.lt.s32.totalorder %v912, 7
      %v1007 = vsel %vm1006, %v999, %v1003
      %v1008 = vsel %vm1006, %v1001, %v1005
      %v1009 = vsel %vm1006, %v1003, %v999
      %v1010 = vsel %vm1006, %v1005, %v1001
      %1011 = vset.pattern.permute.xlu0 2
      %1012 = vperm.xlu0 %1011, %v901
      %v1013 = vpop.permute.xlu0 %1012
      %1015 = vset.pattern.permute.xlu0 2
      %1016 = vperm.xlu0 %1015, %v902
      %v1017 = vpop.permute.xlu0 %1016
      %v1019 = vmul.f32 %v1007, %v1013
      %v1020 = vmul.f32 %v1009, %v1013
      %v1021 = vmul.f32 %v1008, %v1017
      %v1022 = vmul.f32 %v1010, %v1017
      %s1023 = scalar_lea.vmem %s1, 2
      %v1024 = vld [vmem:[%s1023] ss:$8 sm:$0x3]
      %v1026 = vlaneseq
      %v1027 = vshrl.u32 %v1026, 7
      %v1028 = vsub.s32 0, %v1027
      %v1029 = vrot.slane %v1024, %v1028
      %v1030 = vlaneseq
      %v1031 = vshrl.u32 %v1030, 7
      %v1032 = vsub.s32 1, %v1031
      %v1033 = vrot.slane %v1024, %v1032
      %v1036 = vmul.f32 %v1019, %v1029
      %v1037 = vmul.f32 %v1020, %v1033
      %v1038 = vmul.f32 %v1021, %v1029
      %v1039 = vmul.f32 %v1022, %v1033
      %v1040 = vadd.f32 %v994, %v1036
      %v1041 = vadd.f32 %v995, %v1037
      %v1042 = vadd.f32 %v996, %v1038
      %v1043 = vadd.f32 %v997, %v1039
      %1044 = vrot.lane.b32.xlu0 %v897, 1
      %v1045 = vpop.permute.xlu0 %1044
      %1046 = vrot.lane.b32.xlu0 %v899, 1
      %v1047 = vpop.permute.xlu0 %1046
      %1048 = vrot.lane.b32.xlu0 %v898, 1
      %v1049 = vpop.permute.xlu0 %1048
      %1050 = vrot.lane.b32.xlu0 %v900, 1
      %v1051 = vpop.permute.xlu0 %1050
      %vm1052 = vcmp.lt.s32.totalorder %v912, 1
      %v1053 = vsel %vm1052, %v1045, %v1049
      %v1054 = vsel %vm1052, %v1047, %v1051
      %v1055 = vsel %vm1052, %v1049, %v1045
      %v1056 = vsel %vm1052, %v1051, %v1047
      %1057 = vset.pattern.permute.xlu0 3
      %1058 = vperm.xlu0 %1057, %v901
      %v1059 = vpop.permute.xlu0 %1058
      %1061 = vset.pattern.permute.xlu0 3
      %1062 = vperm.xlu0 %1061, %v902
      %v1063 = vpop.permute.xlu0 %1062
      %v1065 = vmul.f32 %v1053, %v1059
      %v1066 = vmul.f32 %v1055, %v1059
      %v1067 = vmul.f32 %v1054, %v1063
      %v1068 = vmul.f32 %v1056, %v1063
      %s1069 = scalar_lea.vmem %s1, 3
      %v1070 = vld [vmem:[%s1069] ss:$8 sm:$0x3]
      %v1072 = vlaneseq
      %v1073 = vshrl.u32 %v1072, 7
      %v1074 = vsub.s32 0, %v1073
      %v1075 = vrot.slane %v1070, %v1074
      %v1076 = vlaneseq
      %v1077 = vshrl.u32 %v1076, 7
      %v1078 = vsub.s32 1, %v1077
      %v1079 = vrot.slane %v1070, %v1078
      %v1082 = vmul.f32 %v1065, %v1075
      %v1083 = vmul.f32 %v1066, %v1079
      %v1084 = vmul.f32 %v1067, %v1075
      %v1085 = vmul.f32 %v1068, %v1079
      %v1086 = vadd.f32 %v1040, %v1082
      %v1087 = vadd.f32 %v1041, %v1083
      %v1088 = vadd.f32 %v1042, %v1084
      %v1089 = vadd.f32 %v1043, %v1085
      %1090 = vset.pattern.permute.xlu0 4
      %1091 = vperm.xlu0 %1090, %v901
      %v1092 = vpop.permute.xlu0 %1091
      %1094 = vset.pattern.permute.xlu0 4
      %1095 = vperm.xlu0 %1094, %v902
      %v1096 = vpop.permute.xlu0 %1095
      %v1098 = vmul.f32 %v898, %v1092
      %v1099 = vmul.f32 %v897, %v1092
      %v1100 = vmul.f32 %v900, %v1096
      %v1101 = vmul.f32 %v899, %v1096
      %s1102 = scalar_lea.vmem %s1, 4
      %v1103 = vld [vmem:[%s1102] ss:$8 sm:$0x3]
      %v1105 = vlaneseq
      %v1106 = vshrl.u32 %v1105, 7
      %v1107 = vsub.s32 0, %v1106
      %v1108 = vrot.slane %v1103, %v1107
      %v1109 = vlaneseq
      %v1110 = vshrl.u32 %v1109, 7
      %v1111 = vsub.s32 1, %v1110
      %v1112 = vrot.slane %v1103, %v1111
      %v1115 = vmul.f32 %v1098, %v1108
      %v1116 = vmul.f32 %v1099, %v1112
      %v1117 = vmul.f32 %v1100, %v1108
      %v1118 = vmul.f32 %v1101, %v1112
      %v1119 = vadd.f32 %v1086, %v1115
      %v1120 = vadd.f32 %v1087, %v1116
      %v1121 = vadd.f32 %v1088, %v1117
      %v1122 = vadd.f32 %v1089, %v1118
      %1123 = vrot.lane.b32.xlu0 %v897, 127
      %v1124 = vpop.permute.xlu0 %1123
      %1125 = vrot.lane.b32.xlu0 %v899, 127
      %v1126 = vpop.permute.xlu0 %1125
      %1127 = vrot.lane.b32.xlu0 %v898, 127
      %v1128 = vpop.permute.xlu0 %1127
      %1129 = vrot.lane.b32.xlu0 %v900, 127
      %v1130 = vpop.permute.xlu0 %1129
      %vm1131 = vcmp.lt.s32.totalorder %v912, 127
      %v1132 = vsel %vm1131, %v1124, %v1128
      %v1133 = vsel %vm1131, %v1126, %v1130
      %v1134 = vsel %vm1131, %v1128, %v1124
      %v1135 = vsel %vm1131, %v1130, %v1126
      %1136 = vset.pattern.permute.xlu0 5
      %1137 = vperm.xlu0 %1136, %v901
      %v1138 = vpop.permute.xlu0 %1137
      %1140 = vset.pattern.permute.xlu0 5
      %1141 = vperm.xlu0 %1140, %v902
      %v1142 = vpop.permute.xlu0 %1141
      %v1144 = vmul.f32 %v1134, %v1138
      %v1145 = vmul.f32 %v1132, %v1138
      %v1146 = vmul.f32 %v1135, %v1142
      %v1147 = vmul.f32 %v1133, %v1142
      %s1148 = scalar_lea.vmem %s1, 5
      %v1149 = vld [vmem:[%s1148] ss:$8 sm:$0x3]
      %v1151 = vlaneseq
      %v1152 = vshrl.u32 %v1151, 7
      %v1153 = vsub.s32 0, %v1152
      %v1154 = vrot.slane %v1149, %v1153
      %v1155 = vlaneseq
      %v1156 = vshrl.u32 %v1155, 7
      %v1157 = vsub.s32 1, %v1156
      %v1158 = vrot.slane %v1149, %v1157
      %v1161 = vmul.f32 %v1144, %v1154
      %v1162 = vmul.f32 %v1145, %v1158
      %v1163 = vmul.f32 %v1146, %v1154
      %v1164 = vmul.f32 %v1147, %v1158
      %v1165 = vadd.f32 %v1119, %v1161
      %v1166 = vadd.f32 %v1120, %v1162
      %v1167 = vadd.f32 %v1121, %v1163
      %v1168 = vadd.f32 %v1122, %v1164
      %1169 = vrot.lane.b32.xlu0 %v897, 121
      %v1170 = vpop.permute.xlu0 %1169
      %1171 = vrot.lane.b32.xlu0 %v899, 121
      %v1172 = vpop.permute.xlu0 %1171
      %1173 = vrot.lane.b32.xlu0 %v898, 121
      %v1174 = vpop.permute.xlu0 %1173
      %1175 = vrot.lane.b32.xlu0 %v900, 121
      %v1176 = vpop.permute.xlu0 %1175
      %vm1177 = vcmp.lt.s32.totalorder %v912, 121
      %v1178 = vsel %vm1177, %v1170, %v1174
      %v1179 = vsel %vm1177, %v1172, %v1176
      %v1180 = vsel %vm1177, %v1174, %v1170
      %v1181 = vsel %vm1177, %v1176, %v1172
      %1182 = vset.pattern.permute.xlu0 6
      %1183 = vperm.xlu0 %1182, %v901
      %v1184 = vpop.permute.xlu0 %1183
      %1186 = vset.pattern.permute.xlu0 6
      %1187 = vperm.xlu0 %1186, %v902
      %v1188 = vpop.permute.xlu0 %1187
      %v1190 = vmul.f32 %v1180, %v1184
      %v1191 = vmul.f32 %v1178, %v1184
      %v1192 = vmul.f32 %v1181, %v1188
      %v1193 = vmul.f32 %v1179, %v1188
      %s1194 = scalar_lea.vmem %s1, 6
      %v1195 = vld [vmem:[%s1194] ss:$8 sm:$0x3]
      %v1197 = vlaneseq
      %v1198 = vshrl.u32 %v1197, 7
      %v1199 = vsub.s32 0, %v1198
      %v1200 = vrot.slane %v1195, %v1199
      %v1201 = vlaneseq
      %v1202 = vshrl.u32 %v1201, 7
      %v1203 = vsub.s32 1, %v1202
      %v1204 = vrot.slane %v1195, %v1203
      %v1207 = vmul.f32 %v1190, %v1200
      %v1208 = vmul.f32 %v1191, %v1204
      %v1209 = vmul.f32 %v1192, %v1200
      %v1210 = vmul.f32 %v1193, %v1204
      %v1211 = vadd.f32 %v1165, %v1207
      %v1212 = vadd.f32 %v1166, %v1208
      %v1213 = vadd.f32 %v1167, %v1209
      %v1214 = vadd.f32 %v1168, %v1210
      %1215 = vrot.lane.b32.xlu0 %v897, 120
      %v1216 = vpop.permute.xlu0 %1215
      %1217 = vrot.lane.b32.xlu0 %v899, 120
      %v1218 = vpop.permute.xlu0 %1217
      %1219 = vrot.lane.b32.xlu0 %v898, 120
      %v1220 = vpop.permute.xlu0 %1219
      %1221 = vrot.lane.b32.xlu0 %v900, 120
      %v1222 = vpop.permute.xlu0 %1221
      %vm1223 = vcmp.lt.s32.totalorder %v912, 120
      %v1224 = vsel %vm1223, %v1216, %v1220
      %v1225 = vsel %vm1223, %v1218, %v1222
      %v1226 = vsel %vm1223, %v1220, %v1216
      %v1227 = vsel %vm1223, %v1222, %v1218
      %1228 = vset.pattern.permute.xlu0 7
      %1229 = vperm.xlu0 %1228, %v901
      %v1230 = vpop.permute.xlu0 %1229
      %1232 = vset.pattern.permute.xlu0 7
      %1233 = vperm.xlu0 %1232, %v902
      %v1234 = vpop.permute.xlu0 %1233
      %v1236 = vmul.f32 %v1226, %v1230
      %v1237 = vmul.f32 %v1224, %v1230
      %v1238 = vmul.f32 %v1227, %v1234
      %v1239 = vmul.f32 %v1225, %v1234
      %s1240 = scalar_lea.vmem %s1, 7
      %v1241 = vld [vmem:[%s1240] ss:$8 sm:$0x3]
      %v1243 = vlaneseq
      %v1244 = vshrl.u32 %v1243, 7
      %v1245 = vsub.s32 0, %v1244
      %v1246 = vrot.slane %v1241, %v1245
      %v1247 = vlaneseq
      %v1248 = vshrl.u32 %v1247, 7
      %v1249 = vsub.s32 1, %v1248
      %v1250 = vrot.slane %v1241, %v1249
      %v1253 = vmul.f32 %v1236, %v1246
      %v1254 = vmul.f32 %v1237, %v1250
      %v1255 = vmul.f32 %v1238, %v1246
      %v1256 = vmul.f32 %v1239, %v1250
      %v1257 = vadd.f32 %v1211, %v1253
      %v1258 = vadd.f32 %v1212, %v1254
      %v1259 = vadd.f32 %v1213, %v1255
      %v1260 = vadd.f32 %v1214, %v1256
      %1261 = vrot.lane.b32.xlu0 %v897, 119
      %v1262 = vpop.permute.xlu0 %1261
      %1263 = vrot.lane.b32.xlu0 %v899, 119
      %v1264 = vpop.permute.xlu0 %1263
      %1265 = vrot.lane.b32.xlu0 %v898, 119
      %v1266 = vpop.permute.xlu0 %1265
      %1267 = vrot.lane.b32.xlu0 %v900, 119
      %v1268 = vpop.permute.xlu0 %1267
      %vm1269 = vcmp.lt.s32.totalorder %v912, 119
      %v1270 = vsel %vm1269, %v1262, %v1266
      %v1271 = vsel %vm1269, %v1264, %v1268
      %v1272 = vsel %vm1269, %v1266, %v1262
      %v1273 = vsel %vm1269, %v1268, %v1264
      %1274 = vset.pattern.permute.xlu0 8
      %1275 = vperm.xlu0 %1274, %v901
      %v1276 = vpop.permute.xlu0 %1275
      %1278 = vset.pattern.permute.xlu0 8
      %1279 = vperm.xlu0 %1278, %v902
      %v1280 = vpop.permute.xlu0 %1279
      %v1282 = vmul.f32 %v1272, %v1276
      %v1283 = vmul.f32 %v1270, %v1276
      %v1284 = vmul.f32 %v1273, %v1280
      %v1285 = vmul.f32 %v1271, %v1280
      %s1286 = scalar_lea.vmem %s1, 16
      %v1287 = vld [vmem:[%s1286] ss:$8 sm:$0x3]
      %v1289 = vlaneseq
      %v1290 = vshrl.u32 %v1289, 7
      %v1291 = vsub.s32 0, %v1290
      %v1292 = vrot.slane %v1287, %v1291
      %v1293 = vlaneseq
      %v1294 = vshrl.u32 %v1293, 7
      %v1295 = vsub.s32 1, %v1294
      %v1296 = vrot.slane %v1287, %v1295
      %v1299 = vmul.f32 %v1282, %v1292
      %v1300 = vmul.f32 %v1283, %v1296
      %v1301 = vmul.f32 %v1284, %v1292
      %v1302 = vmul.f32 %v1285, %v1296
      %v1303 = vadd.f32 %v1257, %v1299
      %v1304 = vadd.f32 %v1258, %v1300
      %v1305 = vadd.f32 %v1259, %v1301
      %v1306 = vadd.f32 %v1260, %v1302
      %1307 = vrot.lane.b32.xlu0 %v897, 73
      %v1308 = vpop.permute.xlu0 %1307
      %1309 = vrot.lane.b32.xlu0 %v899, 73
      %v1310 = vpop.permute.xlu0 %1309
      %1311 = vrot.lane.b32.xlu0 %v898, 73
      %v1312 = vpop.permute.xlu0 %1311
      %1313 = vrot.lane.b32.xlu0 %v900, 73
      %v1314 = vpop.permute.xlu0 %1313
      %vm1315 = vcmp.lt.s32.totalorder %v912, 73
      %v1316 = vsel %vm1315, %v1308, %v1312
      %v1317 = vsel %vm1315, %v1310, %v1314
      %v1318 = vsel %vm1315, %v1312, %v1308
      %v1319 = vsel %vm1315, %v1314, %v1310
      %1320 = vset.pattern.permute.xlu0 9
      %1321 = vperm.xlu0 %1320, %v901
      %v1322 = vpop.permute.xlu0 %1321
      %1324 = vset.pattern.permute.xlu0 9
      %1325 = vperm.xlu0 %1324, %v902
      %v1326 = vpop.permute.xlu0 %1325
      %v1328 = vmul.f32 %v1318, %v1322
      %v1329 = vmul.f32 %v1316, %v1322
      %v1330 = vmul.f32 %v1319, %v1326
      %v1331 = vmul.f32 %v1317, %v1326
      %s1332 = scalar_lea.vmem %s1, 17
      %v1333 = vld [vmem:[%s1332] ss:$8 sm:$0x3]
      %v1335 = vlaneseq
      %v1336 = vshrl.u32 %v1335, 7
      %v1337 = vsub.s32 0, %v1336
      %v1338 = vrot.slane %v1333, %v1337
      %v1339 = vlaneseq
      %v1340 = vshrl.u32 %v1339, 7
      %v1341 = vsub.s32 1, %v1340
      %v1342 = vrot.slane %v1333, %v1341
      %v1345 = vmul.f32 %v1328, %v1338
      %v1346 = vmul.f32 %v1329, %v1342
      %v1347 = vmul.f32 %v1330, %v1338
      %v1348 = vmul.f32 %v1331, %v1342
      %v1349 = vadd.f32 %v1303, %v1345
      %v1350 = vadd.f32 %v1304, %v1346
      %v1351 = vadd.f32 %v1305, %v1347
      %v1352 = vadd.f32 %v1306, %v1348
      %1353 = vrot.lane.b32.xlu0 %v897, 72
      %v1354 = vpop.permute.xlu0 %1353
      %1355 = vrot.lane.b32.xlu0 %v899, 72
      %v1356 = vpop.permute.xlu0 %1355
      %1357 = vrot.lane.b32.xlu0 %v898, 72
      %v1358 = vpop.permute.xlu0 %1357
      %1359 = vrot.lane.b32.xlu0 %v900, 72
      %v1360 = vpop.permute.xlu0 %1359
      %vm1361 = vcmp.lt.s32.totalorder %v912, 72
      %v1362 = vsel %vm1361, %v1354, %v1358
      %v1363 = vsel %vm1361, %v1356, %v1360
      %v1364 = vsel %vm1361, %v1358, %v1354
      %v1365 = vsel %vm1361, %v1360, %v1356
      %1366 = vset.pattern.permute.xlu0 10
      %1367 = vperm.xlu0 %1366, %v901
      %v1368 = vpop.permute.xlu0 %1367
      %1370 = vset.pattern.permute.xlu0 10
      %1371 = vperm.xlu0 %1370, %v902
      %v1372 = vpop.permute.xlu0 %1371
      %v1374 = vmul.f32 %v1364, %v1368
      %v1375 = vmul.f32 %v1362, %v1368
      %v1376 = vmul.f32 %v1365, %v1372
      %v1377 = vmul.f32 %v1363, %v1372
      %s1378 = scalar_lea.vmem %s1, 18
      %v1379 = vld [vmem:[%s1378] ss:$8 sm:$0x3]
      %v1381 = vlaneseq
      %v1382 = vshrl.u32 %v1381, 7
      %v1383 = vsub.s32 0, %v1382
      %v1384 = vrot.slane %v1379, %v1383
      %v1385 = vlaneseq
      %v1386 = vshrl.u32 %v1385, 7
      %v1387 = vsub.s32 1, %v1386
      %v1388 = vrot.slane %v1379, %v1387
      %v1391 = vmul.f32 %v1374, %v1384
      %v1392 = vmul.f32 %v1375, %v1388
      %v1393 = vmul.f32 %v1376, %v1384
      %v1394 = vmul.f32 %v1377, %v1388
      %v1395 = vadd.f32 %v1349, %v1391
      %v1396 = vadd.f32 %v1350, %v1392
      %v1397 = vadd.f32 %v1351, %v1393
      %v1398 = vadd.f32 %v1352, %v1394
      %1399 = vrot.lane.b32.xlu0 %v897, 71
      %v1400 = vpop.permute.xlu0 %1399
      %1401 = vrot.lane.b32.xlu0 %v899, 71
      %v1402 = vpop.permute.xlu0 %1401
      %1403 = vrot.lane.b32.xlu0 %v898, 71
      %v1404 = vpop.permute.xlu0 %1403
      %1405 = vrot.lane.b32.xlu0 %v900, 71
      %v1406 = vpop.permute.xlu0 %1405
      %vm1407 = vcmp.lt.s32.totalorder %v912, 71
      %v1408 = vsel %vm1407, %v1400, %v1404
      %v1409 = vsel %vm1407, %v1402, %v1406
      %v1410 = vsel %vm1407, %v1404, %v1400
      %v1411 = vsel %vm1407, %v1406, %v1402
      %1412 = vset.pattern.permute.xlu0 11
      %1413 = vperm.xlu0 %1412, %v901
      %v1414 = vpop.permute.xlu0 %1413
      %1416 = vset.pattern.permute.xlu0 11
      %1417 = vperm.xlu0 %1416, %v902
      %v1418 = vpop.permute.xlu0 %1417
      %v1420 = vmul.f32 %v1410, %v1414
      %v1421 = vmul.f32 %v1408, %v1414
      %v1422 = vmul.f32 %v1411, %v1418
      %v1423 = vmul.f32 %v1409, %v1418
      %s1424 = scalar_lea.vmem %s1, 19
      %v1425 = vld [vmem:[%s1424] ss:$8 sm:$0x3]
      %v1427 = vlaneseq
      %v1428 = vshrl.u32 %v1427, 7
      %v1429 = vsub.s32 0, %v1428
      %v1430 = vrot.slane %v1425, %v1429
      %v1431 = vlaneseq
      %v1432 = vshrl.u32 %v1431, 7
      %v1433 = vsub.s32 1, %v1432
      %v1434 = vrot.slane %v1425, %v1433
      %v1437 = vmul.f32 %v1420, %v1430
      %v1438 = vmul.f32 %v1421, %v1434
      %v1439 = vmul.f32 %v1422, %v1430
      %v1440 = vmul.f32 %v1423, %v1434
      %v1441 = vadd.f32 %v1395, %v1437
      %v1442 = vadd.f32 %v1396, %v1438
      %v1443 = vadd.f32 %v1397, %v1439
      %v1444 = vadd.f32 %v1398, %v1440
      %1445 = vrot.lane.b32.xlu0 %v897, 65
      %v1446 = vpop.permute.xlu0 %1445
      %1447 = vrot.lane.b32.xlu0 %v899, 65
      %v1448 = vpop.permute.xlu0 %1447
      %1449 = vrot.lane.b32.xlu0 %v898, 65
      %v1450 = vpop.permute.xlu0 %1449
      %1451 = vrot.lane.b32.xlu0 %v900, 65
      %v1452 = vpop.permute.xlu0 %1451
      %vm1453 = vcmp.lt.s32.totalorder %v912, 65
      %v1454 = vsel %vm1453, %v1446, %v1450
      %v1455 = vsel %vm1453, %v1448, %v1452
      %v1456 = vsel %vm1453, %v1450, %v1446
      %v1457 = vsel %vm1453, %v1452, %v1448
      %1458 = vset.pattern.permute.xlu0 12
      %1459 = vperm.xlu0 %1458, %v901
      %v1460 = vpop.permute.xlu0 %1459
      %1462 = vset.pattern.permute.xlu0 12
      %1463 = vperm.xlu0 %1462, %v902
      %v1464 = vpop.permute.xlu0 %1463
      %v1466 = vmul.f32 %v1456, %v1460
      %v1467 = vmul.f32 %v1454, %v1460
      %v1468 = vmul.f32 %v1457, %v1464
      %v1469 = vmul.f32 %v1455, %v1464
      %s1470 = scalar_lea.vmem %s1, 20
      %v1471 = vld [vmem:[%s1470] ss:$8 sm:$0x3]
      %v1473 = vlaneseq
      %v1474 = vshrl.u32 %v1473, 7
      %v1475 = vsub.s32 0, %v1474
      %v1476 = vrot.slane %v1471, %v1475
      %v1477 = vlaneseq
      %v1478 = vshrl.u32 %v1477, 7
      %v1479 = vsub.s32 1, %v1478
      %v1480 = vrot.slane %v1471, %v1479
      %v1483 = vmul.f32 %v1466, %v1476
      %v1484 = vmul.f32 %v1467, %v1480
      %v1485 = vmul.f32 %v1468, %v1476
      %v1486 = vmul.f32 %v1469, %v1480
      %v1487 = vadd.f32 %v1441, %v1483
      %v1488 = vadd.f32 %v1442, %v1484
      %v1489 = vadd.f32 %v1443, %v1485
      %v1490 = vadd.f32 %v1444, %v1486
      %1491 = vrot.lane.b32.xlu0 %v897, 64
      %v1492 = vpop.permute.xlu0 %1491
      %1493 = vrot.lane.b32.xlu0 %v899, 64
      %v1494 = vpop.permute.xlu0 %1493
      %1495 = vrot.lane.b32.xlu0 %v898, 64
      %v1496 = vpop.permute.xlu0 %1495
      %1497 = vrot.lane.b32.xlu0 %v900, 64
      %v1498 = vpop.permute.xlu0 %1497
      %vm1499 = vcmp.lt.s32.totalorder %v912, 64
      %v1500 = vsel %vm1499, %v1492, %v1496
      %v1501 = vsel %vm1499, %v1494, %v1498
      %v1502 = vsel %vm1499, %v1496, %v1492
      %v1503 = vsel %vm1499, %v1498, %v1494
      %1504 = vset.pattern.permute.xlu0 13
      %1505 = vperm.xlu0 %1504, %v901
      %v1506 = vpop.permute.xlu0 %1505
      %1508 = vset.pattern.permute.xlu0 13
      %1509 = vperm.xlu0 %1508, %v902
      %v1510 = vpop.permute.xlu0 %1509
      %v1512 = vmul.f32 %v1502, %v1506
      %v1513 = vmul.f32 %v1500, %v1506
      %v1514 = vmul.f32 %v1503, %v1510
      %v1515 = vmul.f32 %v1501, %v1510
      %s1516 = scalar_lea.vmem %s1, 21
      %v1517 = vld [vmem:[%s1516] ss:$8 sm:$0x3]
      %v1519 = vlaneseq
      %v1520 = vshrl.u32 %v1519, 7
      %v1521 = vsub.s32 0, %v1520
      %v1522 = vrot.slane %v1517, %v1521
      %v1523 = vlaneseq
      %v1524 = vshrl.u32 %v1523, 7
      %v1525 = vsub.s32 1, %v1524
      %v1526 = vrot.slane %v1517, %v1525
      %v1529 = vmul.f32 %v1512, %v1522
      %v1530 = vmul.f32 %v1513, %v1526
      %v1531 = vmul.f32 %v1514, %v1522
      %v1532 = vmul.f32 %v1515, %v1526
      %v1533 = vadd.f32 %v1487, %v1529
      %v1534 = vadd.f32 %v1488, %v1530
      %v1535 = vadd.f32 %v1489, %v1531
      %v1536 = vadd.f32 %v1490, %v1532
      %1537 = vrot.lane.b32.xlu0 %v897, 63
      %v1538 = vpop.permute.xlu0 %1537
      %1539 = vrot.lane.b32.xlu0 %v899, 63
      %v1540 = vpop.permute.xlu0 %1539
      %1541 = vrot.lane.b32.xlu0 %v898, 63
      %v1542 = vpop.permute.xlu0 %1541
      %1543 = vrot.lane.b32.xlu0 %v900, 63
      %v1544 = vpop.permute.xlu0 %1543
      %vm1545 = vcmp.lt.s32.totalorder %v912, 63
      %v1546 = vsel %vm1545, %v1538, %v1542
      %v1547 = vsel %vm1545, %v1540, %v1544
      %v1548 = vsel %vm1545, %v1542, %v1538
      %v1549 = vsel %vm1545, %v1544, %v1540
      %1550 = vset.pattern.permute.xlu0 14
      %1551 = vperm.xlu0 %1550, %v901
      %v1552 = vpop.permute.xlu0 %1551
      %1554 = vset.pattern.permute.xlu0 14
      %1555 = vperm.xlu0 %1554, %v902
      %v1556 = vpop.permute.xlu0 %1555
      %v1558 = vmul.f32 %v1548, %v1552
      %v1559 = vmul.f32 %v1546, %v1552
      %v1560 = vmul.f32 %v1549, %v1556
      %v1561 = vmul.f32 %v1547, %v1556
      %s1562 = scalar_lea.vmem %s1, 22
      %v1563 = vld [vmem:[%s1562] ss:$8 sm:$0x3]
      %v1565 = vlaneseq
      %v1566 = vshrl.u32 %v1565, 7
      %v1567 = vsub.s32 0, %v1566
      %v1568 = vrot.slane %v1563, %v1567
      %v1569 = vlaneseq
      %v1570 = vshrl.u32 %v1569, 7
      %v1571 = vsub.s32 1, %v1570
      %v1572 = vrot.slane %v1563, %v1571
      %v1575 = vmul.f32 %v1558, %v1568
      %v1576 = vmul.f32 %v1559, %v1572
      %v1577 = vmul.f32 %v1560, %v1568
      %v1578 = vmul.f32 %v1561, %v1572
      %v1579 = vadd.f32 %v1533, %v1575
      %v1580 = vadd.f32 %v1534, %v1576
      %v1581 = vadd.f32 %v1535, %v1577
      %v1582 = vadd.f32 %v1536, %v1578
      %1583 = vrot.lane.b32.xlu0 %v897, 57
      %v1584 = vpop.permute.xlu0 %1583
      %1585 = vrot.lane.b32.xlu0 %v899, 57
      %v1586 = vpop.permute.xlu0 %1585
      %1587 = vrot.lane.b32.xlu0 %v898, 57
      %v1588 = vpop.permute.xlu0 %1587
      %1589 = vrot.lane.b32.xlu0 %v900, 57
      %v1590 = vpop.permute.xlu0 %1589
      %vm1591 = vcmp.lt.s32.totalorder %v912, 57
      %v1592 = vsel %vm1591, %v1584, %v1588
      %v1593 = vsel %vm1591, %v1586, %v1590
      %v1594 = vsel %vm1591, %v1588, %v1584
      %v1595 = vsel %vm1591, %v1590, %v1586
      %1596 = vset.pattern.permute.xlu0 15
      %1597 = vperm.xlu0 %1596, %v901
      %v1598 = vpop.permute.xlu0 %1597
      %1600 = vset.pattern.permute.xlu0 15
      %1601 = vperm.xlu0 %1600, %v902
      %v1602 = vpop.permute.xlu0 %1601
      %v1604 = vmul.f32 %v1594, %v1598
      %v1605 = vmul.f32 %v1592, %v1598
      %v1606 = vmul.f32 %v1595, %v1602
      %v1607 = vmul.f32 %v1593, %v1602
      %s1608 = scalar_lea.vmem %s1, 23
      %v1609 = vld [vmem:[%s1608] ss:$8 sm:$0x3]
      %v1611 = vlaneseq
      %v1612 = vshrl.u32 %v1611, 7
      %v1613 = vsub.s32 0, %v1612
      %v1614 = vrot.slane %v1609, %v1613
      %v1615 = vlaneseq
      %v1616 = vshrl.u32 %v1615, 7
      %v1617 = vsub.s32 1, %v1616
      %v1618 = vrot.slane %v1609, %v1617
      %v1621 = vmul.f32 %v1604, %v1614
      %v1622 = vmul.f32 %v1605, %v1618
      %v1623 = vmul.f32 %v1606, %v1614
      %v1624 = vmul.f32 %v1607, %v1618
      %v1625 = vadd.f32 %v1579, %v1621
      %v1626 = vadd.f32 %v1580, %v1622
      %v1627 = vadd.f32 %v1581, %v1623
      %v1628 = vadd.f32 %v1582, %v1624
      %1629 = vrot.lane.b32.xlu0 %v897, 56
      %v1630 = vpop.permute.xlu0 %1629
      %1631 = vrot.lane.b32.xlu0 %v899, 56
      %v1632 = vpop.permute.xlu0 %1631
      %1633 = vrot.lane.b32.xlu0 %v898, 56
      %v1634 = vpop.permute.xlu0 %1633
      %1635 = vrot.lane.b32.xlu0 %v900, 56
      %v1636 = vpop.permute.xlu0 %1635
      %vm1637 = vcmp.lt.s32.totalorder %v912, 56
      %v1638 = vsel %vm1637, %v1630, %v1634
      %v1639 = vsel %vm1637, %v1632, %v1636
      %v1640 = vsel %vm1637, %v1634, %v1630
      %v1641 = vsel %vm1637, %v1636, %v1632
      %1642 = vset.pattern.permute.xlu0 16
      %1643 = vperm.xlu0 %1642, %v901
      %v1644 = vpop.permute.xlu0 %1643
      %1646 = vset.pattern.permute.xlu0 16
      %1647 = vperm.xlu0 %1646, %v902
      %v1648 = vpop.permute.xlu0 %1647
      %v1650 = vmul.f32 %v1640, %v1644
      %v1651 = vmul.f32 %v1638, %v1644
      %v1652 = vmul.f32 %v1641, %v1648
      %v1653 = vmul.f32 %v1639, %v1648
      %s1654 = scalar_lea.vmem %s1, 32
      %v1655 = vld [vmem:[%s1654] ss:$8 sm:$0x3]
      %v1657 = vlaneseq
      %v1658 = vshrl.u32 %v1657, 7
      %v1659 = vsub.s32 0, %v1658
      %v1660 = vrot.slane %v1655, %v1659
      %v1661 = vlaneseq
      %v1662 = vshrl.u32 %v1661, 7
      %v1663 = vsub.s32 1, %v1662
      %v1664 = vrot.slane %v1655, %v1663
      %v1667 = vmul.f32 %v1650, %v1660
      %v1668 = vmul.f32 %v1651, %v1664
      %v1669 = vmul.f32 %v1652, %v1660
      %v1670 = vmul.f32 %v1653, %v1664
      %v1671 = vadd.f32 %v1625, %v1667
      %v1672 = vadd.f32 %v1626, %v1668
      %v1673 = vadd.f32 %v1627, %v1669
      %v1674 = vadd.f32 %v1628, %v1670
      %1675 = vrot.lane.b32.xlu0 %v897, 55
      %v1676 = vpop.permute.xlu0 %1675
      %1677 = vrot.lane.b32.xlu0 %v899, 55
      %v1678 = vpop.permute.xlu0 %1677
      %1679 = vrot.lane.b32.xlu0 %v898, 55
      %v1680 = vpop.permute.xlu0 %1679
      %1681 = vrot.lane.b32.xlu0 %v900, 55
      %v1682 = vpop.permute.xlu0 %1681
      %vm1683 = vcmp.lt.s32.totalorder %v912, 55
      %v1684 = vsel %vm1683, %v1676, %v1680
      %v1685 = vsel %vm1683, %v1678, %v1682
      %v1686 = vsel %vm1683, %v1680, %v1676
      %v1687 = vsel %vm1683, %v1682, %v1678
      %1688 = vset.pattern.permute.xlu0 17
      %1689 = vperm.xlu0 %1688, %v901
      %v1690 = vpop.permute.xlu0 %1689
      %1692 = vset.pattern.permute.xlu0 17
      %1693 = vperm.xlu0 %1692, %v902
      %v1694 = vpop.permute.xlu0 %1693
      %v1696 = vmul.f32 %v1686, %v1690
      %v1697 = vmul.f32 %v1684, %v1690
      %v1698 = vmul.f32 %v1687, %v1694
      %v1699 = vmul.f32 %v1685, %v1694
      %s1700 = scalar_lea.vmem %s1, 33
      %v1701 = vld [vmem:[%s1700] ss:$8 sm:$0x3]
      %v1703 = vlaneseq
      %v1704 = vshrl.u32 %v1703, 7
      %v1705 = vsub.s32 0, %v1704
      %v1706 = vrot.slane %v1701, %v1705
      %v1707 = vlaneseq
      %v1708 = vshrl.u32 %v1707, 7
      %v1709 = vsub.s32 1, %v1708
      %v1710 = vrot.slane %v1701, %v1709
      %v1713 = vmul.f32 %v1696, %v1706
      %v1714 = vmul.f32 %v1697, %v1710
      %v1715 = vmul.f32 %v1698, %v1706
      %v1716 = vmul.f32 %v1699, %v1710
      %v1717 = vadd.f32 %v1671, %v1713
      %v1718 = vadd.f32 %v1672, %v1714
      %v1719 = vadd.f32 %v1673, %v1715
      %v1720 = vadd.f32 %v1674, %v1716
      %1721 = vset.pattern.permute.xlu0 18
      %1722 = vperm.xlu0 %1721, %v901
      %v1723 = vpop.permute.xlu0 %1722
      %1725 = vset.pattern.permute.xlu0 18
      %1726 = vperm.xlu0 %1725, %v902
      %v1727 = vpop.permute.xlu0 %1726
      %v1729 = vmul.f32 %v916, %v1723
      %v1730 = vmul.f32 %v914, %v1723
      %v1731 = vmul.f32 %v917, %v1727
      %v1732 = vmul.f32 %v915, %v1727
      %s1733 = scalar_lea.vmem %s1, 34
      %v1734 = vld [vmem:[%s1733] ss:$8 sm:$0x3]
      %v1736 = vlaneseq
      %v1737 = vshrl.u32 %v1736, 7
      %v1738 = vsub.s32 0, %v1737
      %v1739 = vrot.slane %v1734, %v1738
      %v1740 = vlaneseq
      %v1741 = vshrl.u32 %v1740, 7
      %v1742 = vsub.s32 1, %v1741
      %v1743 = vrot.slane %v1734, %v1742
      %v1746 = vmul.f32 %v1729, %v1739
      %v1747 = vmul.f32 %v1730, %v1743
      %v1748 = vmul.f32 %v1731, %v1739
      %v1749 = vmul.f32 %v1732, %v1743
      %v1750 = vadd.f32 %v1717, %v1746
      %v1751 = vadd.f32 %v1718, %v1747
      %v1752 = vadd.f32 %v1719, %v1748
      %v1753 = vadd.f32 %v1720, %v1749
      %1754 = vset.pattern.permute.xlu0 19
      %1755 = vperm.xlu0 %1754, %v901
      %v1756 = vpop.permute.xlu0 %1755
      %1758 = vset.pattern.permute.xlu0 19
      %1759 = vperm.xlu0 %1758, %v902
      %v1760 = vpop.permute.xlu0 %1759
      %v1762 = vmul.f32 %v963, %v1756
      %v1763 = vmul.f32 %v961, %v1756
      %v1764 = vmul.f32 %v964, %v1760
      %v1765 = vmul.f32 %v962, %v1760
      %s1766 = scalar_lea.vmem %s1, 35
      %v1767 = vld [vmem:[%s1766] ss:$8 sm:$0x3]
      %v1769 = vlaneseq
      %v1770 = vshrl.u32 %v1769, 7
      %v1771 = vsub.s32 0, %v1770
      %v1772 = vrot.slane %v1767, %v1771
      %v1773 = vlaneseq
      %v1774 = vshrl.u32 %v1773, 7
      %v1775 = vsub.s32 1, %v1774
      %v1776 = vrot.slane %v1767, %v1775
      %v1779 = vmul.f32 %v1762, %v1772
      %v1780 = vmul.f32 %v1763, %v1776
      %v1781 = vmul.f32 %v1764, %v1772
      %v1782 = vmul.f32 %v1765, %v1776
      %v1783 = vadd.f32 %v1750, %v1779
      %v1784 = vadd.f32 %v1751, %v1780
      %v1785 = vadd.f32 %v1752, %v1781
      %v1786 = vadd.f32 %v1753, %v1782
      %1787 = vset.pattern.permute.xlu0 20
      %1788 = vperm.xlu0 %1787, %v901
      %v1789 = vpop.permute.xlu0 %1788
      %1791 = vset.pattern.permute.xlu0 20
      %1792 = vperm.xlu0 %1791, %v902
      %v1793 = vpop.permute.xlu0 %1792
      %v1795 = vmul.f32 %v1009, %v1789
      %v1796 = vmul.f32 %v1007, %v1789
      %v1797 = vmul.f32 %v1010, %v1793
      %v1798 = vmul.f32 %v1008, %v1793
      %s1799 = scalar_lea.vmem %s1, 36
      %v1800 = vld [vmem:[%s1799] ss:$8 sm:$0x3]
      %v1802 = vlaneseq
      %v1803 = vshrl.u32 %v1802, 7
      %v1804 = vsub.s32 0, %v1803
      %v1805 = vrot.slane %v1800, %v1804
      %v1806 = vlaneseq
      %v1807 = vshrl.u32 %v1806, 7
      %v1808 = vsub.s32 1, %v1807
      %v1809 = vrot.slane %v1800, %v1808
      %v1812 = vmul.f32 %v1795, %v1805
      %v1813 = vmul.f32 %v1796, %v1809
      %v1814 = vmul.f32 %v1797, %v1805
      %v1815 = vmul.f32 %v1798, %v1809
      %v1816 = vadd.f32 %v1783, %v1812
      %v1817 = vadd.f32 %v1784, %v1813
      %v1818 = vadd.f32 %v1785, %v1814
      %v1819 = vadd.f32 %v1786, %v1815
      %1820 = vset.pattern.permute.xlu0 21
      %1821 = vperm.xlu0 %1820, %v901
      %v1822 = vpop.permute.xlu0 %1821
      %1824 = vset.pattern.permute.xlu0 21
      %1825 = vperm.xlu0 %1824, %v902
      %v1826 = vpop.permute.xlu0 %1825
      %v1828 = vmul.f32 %v1055, %v1822
      %v1829 = vmul.f32 %v1053, %v1822
      %v1830 = vmul.f32 %v1056, %v1826
      %v1831 = vmul.f32 %v1054, %v1826
      %s1832 = scalar_lea.vmem %s1, 37
      %v1833 = vld [vmem:[%s1832] ss:$8 sm:$0x3]
      %v1835 = vlaneseq
      %v1836 = vshrl.u32 %v1835, 7
      %v1837 = vsub.s32 0, %v1836
      %v1838 = vrot.slane %v1833, %v1837
      %v1839 = vlaneseq
      %v1840 = vshrl.u32 %v1839, 7
      %v1841 = vsub.s32 1, %v1840
      %v1842 = vrot.slane %v1833, %v1841
      %v1845 = vmul.f32 %v1828, %v1838
      %v1846 = vmul.f32 %v1829, %v1842
      %v1847 = vmul.f32 %v1830, %v1838
      %v1848 = vmul.f32 %v1831, %v1842
      %v1849 = vadd.f32 %v1816, %v1845
      %v1850 = vadd.f32 %v1817, %v1846
      %v1851 = vadd.f32 %v1818, %v1847
      %v1852 = vadd.f32 %v1819, %v1848
      %1853 = vset.pattern.permute.xlu0 22
      %1854 = vperm.xlu0 %1853, %v901
      %v1855 = vpop.permute.xlu0 %1854
      %1857 = vset.pattern.permute.xlu0 22
      %1858 = vperm.xlu0 %1857, %v902
      %v1859 = vpop.permute.xlu0 %1858
      %v1861 = vmul.f32 %v897, %v1855
      %v1862 = vmul.f32 %v898, %v1855
      %v1863 = vmul.f32 %v899, %v1859
      %v1864 = vmul.f32 %v900, %v1859
      %s1865 = scalar_lea.vmem %s1, 38
      %v1866 = vld [vmem:[%s1865] ss:$8 sm:$0x3]
      %v1868 = vlaneseq
      %v1869 = vshrl.u32 %v1868, 7
      %v1870 = vsub.s32 0, %v1869
      %v1871 = vrot.slane %v1866, %v1870
      %v1872 = vlaneseq
      %v1873 = vshrl.u32 %v1872, 7
      %v1874 = vsub.s32 1, %v1873
      %v1875 = vrot.slane %v1866, %v1874
      %v1878 = vmul.f32 %v1861, %v1871
      %v1879 = vmul.f32 %v1862, %v1875
      %v1880 = vmul.f32 %v1863, %v1871
      %v1881 = vmul.f32 %v1864, %v1875
      %v1882 = vadd.f32 %v1849, %v1878
      %v1883 = vadd.f32 %v1850, %v1879
      %v1884 = vadd.f32 %v1851, %v1880
      %v1885 = vadd.f32 %v1852, %v1881
      %1886 = vset.pattern.permute.xlu0 23
      %1887 = vperm.xlu0 %1886, %v901
      %v1888 = vpop.permute.xlu0 %1887
      %1890 = vset.pattern.permute.xlu0 23
      %1891 = vperm.xlu0 %1890, %v902
      %v1892 = vpop.permute.xlu0 %1891
      %v1894 = vmul.f32 %v1132, %v1888
      %v1895 = vmul.f32 %v1134, %v1888
      %v1896 = vmul.f32 %v1133, %v1892
      %v1897 = vmul.f32 %v1135, %v1892
      %s1898 = scalar_lea.vmem %s1, 39
      %v1899 = vld [vmem:[%s1898] ss:$8 sm:$0x3]
      %v1901 = vlaneseq
      %v1902 = vshrl.u32 %v1901, 7
      %v1903 = vsub.s32 0, %v1902
      %v1904 = vrot.slane %v1899, %v1903
      %v1905 = vlaneseq
      %v1906 = vshrl.u32 %v1905, 7
      %v1907 = vsub.s32 1, %v1906
      %v1908 = vrot.slane %v1899, %v1907
      %v1911 = vmul.f32 %v1894, %v1904
      %v1912 = vmul.f32 %v1895, %v1908
      %v1913 = vmul.f32 %v1896, %v1904
      %v1914 = vmul.f32 %v1897, %v1908
      %v1915 = vadd.f32 %v1882, %v1911
      %v1916 = vadd.f32 %v1883, %v1912
      %v1917 = vadd.f32 %v1884, %v1913
      %v1918 = vadd.f32 %v1885, %v1914
      %1919 = vset.pattern.permute.xlu0 24
      %1920 = vperm.xlu0 %1919, %v901
      %v1921 = vpop.permute.xlu0 %1920
      %1923 = vset.pattern.permute.xlu0 24
      %1924 = vperm.xlu0 %1923, %v902
      %v1925 = vpop.permute.xlu0 %1924
      %v1927 = vmul.f32 %v1178, %v1921
      %v1928 = vmul.f32 %v1180, %v1921
      %v1929 = vmul.f32 %v1179, %v1925
      %v1930 = vmul.f32 %v1181, %v1925
      %s1931 = scalar_lea.vmem %s1, 48
      %v1932 = vld [vmem:[%s1931] ss:$8 sm:$0x3]
      %v1934 = vlaneseq
      %v1935 = vshrl.u32 %v1934, 7
      %v1936 = vsub.s32 0, %v1935
      %v1937 = vrot.slane %v1932, %v1936
      %v1938 = vlaneseq
      %v1939 = vshrl.u32 %v1938, 7
      %v1940 = vsub.s32 1, %v1939
      %v1941 = vrot.slane %v1932, %v1940
      %v1944 = vmul.f32 %v1927, %v1937
      %v1945 = vmul.f32 %v1928, %v1941
      %v1946 = vmul.f32 %v1929, %v1937
      %v1947 = vmul.f32 %v1930, %v1941
      %v1948 = vadd.f32 %v1915, %v1944
      %v1949 = vadd.f32 %v1916, %v1945
      %v1950 = vadd.f32 %v1917, %v1946
      %v1951 = vadd.f32 %v1918, %v1947
      %1952 = vset.pattern.permute.xlu0 25
      %1953 = vperm.xlu0 %1952, %v901
      %v1954 = vpop.permute.xlu0 %1953
      %1956 = vset.pattern.permute.xlu0 25
      %1957 = vperm.xlu0 %1956, %v902
      %v1958 = vpop.permute.xlu0 %1957
      %v1960 = vmul.f32 %v1224, %v1954
      %v1961 = vmul.f32 %v1226, %v1954
      %v1962 = vmul.f32 %v1225, %v1958
      %v1963 = vmul.f32 %v1227, %v1958
      %s1964 = scalar_lea.vmem %s1, 49
      %v1965 = vld [vmem:[%s1964] ss:$8 sm:$0x3]
      %v1967 = vlaneseq
      %v1968 = vshrl.u32 %v1967, 7
      %v1969 = vsub.s32 0, %v1968
      %v1970 = vrot.slane %v1965, %v1969
      %v1971 = vlaneseq
      %v1972 = vshrl.u32 %v1971, 7
      %v1973 = vsub.s32 1, %v1972
      %v1974 = vrot.slane %v1965, %v1973
      %v1977 = vmul.f32 %v1960, %v1970
      %v1978 = vmul.f32 %v1961, %v1974
      %v1979 = vmul.f32 %v1962, %v1970
      %v1980 = vmul.f32 %v1963, %v1974
      %v1981 = vadd.f32 %v1948, %v1977
      %v1982 = vadd.f32 %v1949, %v1978
      %v1983 = vadd.f32 %v1950, %v1979
      %v1984 = vadd.f32 %v1951, %v1980
      %1985 = vset.pattern.permute.xlu0 26
      %1986 = vperm.xlu0 %1985, %v901
      %v1987 = vpop.permute.xlu0 %1986
      %1989 = vset.pattern.permute.xlu0 26
      %1990 = vperm.xlu0 %1989, %v902
      %v1991 = vpop.permute.xlu0 %1990
      %v1993 = vmul.f32 %v1270, %v1987
      %v1994 = vmul.f32 %v1272, %v1987
      %v1995 = vmul.f32 %v1271, %v1991
      %v1996 = vmul.f32 %v1273, %v1991
      %s1997 = scalar_lea.vmem %s1, 50
      %v1998 = vld [vmem:[%s1997] ss:$8 sm:$0x3]
      %v2000 = vlaneseq
      %v2001 = vshrl.u32 %v2000, 7
      %v2002 = vsub.s32 0, %v2001
      %v2003 = vrot.slane %v1998, %v2002
      %v2004 = vlaneseq
      %v2005 = vshrl.u32 %v2004, 7
      %v2006 = vsub.s32 1, %v2005
      %v2007 = vrot.slane %v1998, %v2006
      %v2010 = vmul.f32 %v1993, %v2003
      %v2011 = vmul.f32 %v1994, %v2007
      %v2012 = vmul.f32 %v1995, %v2003
      %v2013 = vmul.f32 %v1996, %v2007
      %v2014 = vadd.f32 %v1981, %v2010
      %v2015 = vadd.f32 %v1982, %v2011
      %v2016 = vadd.f32 %v1983, %v2012
      %v2017 = vadd.f32 %v1984, %v2013
      %2018 = vset.pattern.permute.xlu0 1
      %2019 = vperm.xlu0 %2018, %v798
      %v2020 = vpop.permute.xlu0 %2019
      %2022 = vset.pattern.permute.xlu0 1
      %2023 = vperm.xlu0 %2022, %v799
      %v2024 = vpop.permute.xlu0 %2023
      %v2026 = vadd.f32 %v2014, %v2020
      %v2027 = vadd.f32 %v2015, %v2020
      %v2028 = vadd.f32 %v2016, %v2024
      %v2029 = vadd.f32 %v2017, %v2024
      %v2030 = vxor.u32 %v2026, 2147483648
      %v2031 = vxor.u32 %v2027, 2147483648
      %v2032 = vxor.u32 %v2028, 2147483648
      %v2033 = vxor.u32 %v2029, 2147483648
      %v2034 = vmul.f32 %v2030, 1.442695
      %v2035 = vpow.pop %v2034
      %v2036 = vmul.f32 %v2031, 1.442695
      %v2037 = vpow.pop %v2036
      %v2038 = vmul.f32 %v2032, 1.442695
      %v2039 = vpow.pop %v2038
      %v2040 = vmul.f32 %v2033, 1.442695
      %v2041 = vpow.pop %v2040
      %v2042 = vadd.f32 %v2035, 1.0
      %v2043 = vadd.f32 %v2037, 1.0
      %v2044 = vadd.f32 %v2039, 1.0
      %v2045 = vadd.f32 %v2041, 1.0
      %v2046 = vrcp.pop %v2042
      %v2047 = vmul.f32 1.0, %v2046
      %v2048 = vrcp.pop %v2043
      %v2049 = vmul.f32 1.0, %v2048
      %v2050 = vrcp.pop %v2044
      %v2051 = vmul.f32 1.0, %v2050
      %v2052 = vrcp.pop %v2045
      %v2053 = vmul.f32 1.0, %v2052
      %v2054 = vmul.f32 %v2026, %v2047
      %v2055 = vmul.f32 %v2027, %v2049
      %v2056 = vmul.f32 %v2028, %v2051
      %v2057 = vmul.f32 %v2029, %v2053
      %2058 = vmatprep.subr.mxu0 0.0
      %2059 = vmatpush1.msra.mxu0 %v764
      %2060 = vmatprep.subr.mxu0 0.0
      %2061 = vmatpush1.msra.mxu0 %v765
      %2062 = vmatprep.subr.mxu0 0.0
      %2063 = vmatpush1.msra.mxu0 %v766
      %2064 = vmatprep.subr.mxu0 0.0
      %2065 = vmatpush1.msra.mxu0 %v767
      %2066 = vmatprep.subr.mxu0 0.0
      %2067 = vmatpush1.msra.mxu0 %v768
      %2068 = vmatprep.subr.mxu0 0.0
      %2069 = vmatpush1.msra.mxu0 %v769
      %2070 = vmatprep.subr.mxu0 0.0
      %2071 = vmatpush1.msra.mxu0 %v770
      %2072 = vmatprep.subr.mxu0 0.0
      %2073 = vmatpush1.msra.mxu0 %v771
      %2074 = vmatprep.subr.mxu0 0.0
      %2075 = vmatpush1.msra.mxu0 %v772
      %2076 = vmatprep.subr.mxu0 0.0
      %2077 = vmatpush1.msra.mxu0 %v773
      %2078 = vmatprep.subr.mxu0 0.0
      %2079 = vmatpush1.msra.mxu0 %v774
      %2080 = vmatprep.subr.mxu0 0.0
      %2081 = vmatpush1.msra.mxu0 %v775
      %2082 = vmatprep.subr.mxu0 0.0
      %2083 = vmatpush1.msra.mxu0 %v776
      %2084 = vmatprep.subr.mxu0 0.0
      %2085 = vmatpush1.msra.mxu0 %v777
      %2086 = vmatprep.subr.mxu0 0.0
      %2087 = vmatpush1.msra.mxu0 %v778
      %2088 = vmatprep.subr.mxu0 0.0
      %2089 = vmatpush1.msra.mxu0 %v779
      %2090 = vmatprep.subr.mxu0 0.0
      %2091 = vmatpush1.msra.mxu0 %v780
      %2092 = vmatprep.subr.mxu0 0.0
      %2093 = vmatpush1.msra.mxu0 %v781
      %2094 = vmatprep.subr.mxu0 0.0
      %2095 = vmatpush1.msra.mxu0 %v782
      %2096 = vmatprep.subr.mxu0 0.0
      %2097 = vmatpush1.msra.mxu0 %v783
      %2098 = vmatprep.subr.mxu0 0.0
      %2099 = vmatpush1.msra.mxu0 %v784
      %2100 = vmatprep.subr.mxu0 0.0
      %2101 = vmatpush1.msra.mxu0 %v785
      %2102 = vmatprep.subr.mxu0 0.0
      %2103 = vmatpush1.msra.mxu0 %v786
      %2104 = vmatprep.subr.mxu0 0.0
      %2105 = vmatpush1.msra.mxu0 %v787
      %2106 = vmatprep.subr.mxu0 0.0
      %2107 = vmatpush1.msra.mxu0 %v788
      %2108 = vmatprep.subr.mxu0 0.0
      %2109 = vmatpush1.msra.mxu0 %v789
      %2110 = vmatprep.subr.mxu0 0.0
      %2111 = vmatpush1.msra.mxu0 %v790
      %2112 = vmatprep.subr.mxu0 0.0
      %2113 = vmatpush1.msra.mxu0 %v791
      %2114 = vmatprep.subr.mxu0 0.0
      %2115 = vmatpush1.msra.mxu0 %v792
      %2116 = vmatprep.subr.mxu0 0.0
      %2117 = vmatpush1.msra.mxu0 %v793
      %2118 = vmatprep.subr.mxu0 0.0
      %2119 = vmatpush1.msra.mxu0 %v794
      %2120 = vmatprep.subr.mxu0 0.0
      %2121 = vmatpush1.msra.mxu0 %v795
      %2122 = vmatprep.mubr.f32.mxu0 %v2055
      %2123 = vmatmul.mubr.f32.gmra.mrb[0].mxu0 %v2054
      %v2124 = vpop.f32.mrb[0].mxu0
      %v2125 = vadd.f32 0.0, %v2124
      %v2126 = vpop.f32.mrb[0].mxu0
      %2127 = vmatprep.mubr.f32.mxu0 %v2057
      %2128 = vmatmul.mubr.f32.gmra.mrb[0].mxu0 %v2056
      %v2129 = vpop.f32.mrb[0].mxu0
      %v2130 = vadd.f32 0.0, %v2129
      %v2131 = vpop.f32.mrb[0].mxu0
      %2132 = vdwg.mxu0
      %vm2133 = vcmask 31744
      %v2135 = vsel %vm2133, %v2125, 0
      %v2138 = vsel %vm2133, %v2130, 0
      %v2141 = vsel %vm823, %v797, 0
      %2143 = vmatprep.subr.mxu0 0.0
      %2144 = vmatpush1.msra.mxu0 %v2141
      %2145 = vmatprep.subr.mxu0 0.0
      %2146 = vmatpush1.msra.mxu0 0.0
      %2147 = vmatprep.subr.mxu0 0.0
      %2148 = vmatpush1.msra.mxu0 0.0
      %2149 = vmatprep.subr.mxu0 0.0
      %2150 = vmatpush1.msra.mxu0 0.0
      %2151 = vmatprep.subr.mxu0 0.0
      %2152 = vmatpush1.msra.mxu0 0.0
      %2153 = vmatprep.subr.mxu0 0.0
      %2154 = vmatpush1.msra.mxu0 0.0
      %2155 = vmatprep.subr.mxu0 0.0
      %2156 = vmatpush1.msra.mxu0 0.0
      %2157 = vmatprep.subr.mxu0 0.0
      %2158 = vmatpush1.msra.mxu0 0.0
      %2159 = vmatprep.subr.mxu0 0.0
      %2160 = vmatpush1.msra.mxu0 0.0
      %2161 = vmatprep.subr.mxu0 0.0
      %2162 = vmatpush1.msra.mxu0 0.0
      %2163 = vmatprep.subr.mxu0 0.0
      %2164 = vmatpush1.msra.mxu0 0.0
      %2165 = vmatprep.subr.mxu0 0.0
      %2166 = vmatpush1.msra.mxu0 0.0
      %2167 = vmatprep.subr.mxu0 0.0
      %2168 = vmatpush1.msra.mxu0 0.0
      %2169 = vmatprep.subr.mxu0 0.0
      %2170 = vmatpush1.msra.mxu0 0.0
      %2171 = vmatprep.subr.mxu0 0.0
      %2172 = vmatpush1.msra.mxu0 0.0
      %2173 = vmatprep.subr.mxu0 0.0
      %2174 = vmatpush1.msra.mxu0 0.0
      %2175 = vmatprep.subr.mxu0 0.0
      %2176 = vmatpush1.msra.mxu0 0.0
      %2177 = vmatprep.subr.mxu0 0.0
      %2178 = vmatpush1.msra.mxu0 0.0
      %2179 = vmatprep.subr.mxu0 0.0
      %2180 = vmatpush1.msra.mxu0 0.0
      %2181 = vmatprep.subr.mxu0 0.0
      %2182 = vmatpush1.msra.mxu0 0.0
      %2183 = vmatprep.subr.mxu0 0.0
      %2184 = vmatpush1.msra.mxu0 0.0
      %2185 = vmatprep.subr.mxu0 0.0
      %2186 = vmatpush1.msra.mxu0 0.0
      %2187 = vmatprep.subr.mxu0 0.0
      %2188 = vmatpush1.msra.mxu0 0.0
      %2189 = vmatprep.subr.mxu0 0.0
      %2190 = vmatpush1.msra.mxu0 0.0
      %2191 = vmatprep.subr.mxu0 0.0
      %2192 = vmatpush1.msra.mxu0 0.0
      %2193 = vmatprep.subr.mxu0 0.0
      %2194 = vmatpush1.msra.mxu0 0.0
      %2195 = vmatprep.subr.mxu0 0.0
      %2196 = vmatpush1.msra.mxu0 0.0
      %2197 = vmatprep.subr.mxu0 0.0
      %2198 = vmatpush1.msra.mxu0 0.0
      %2199 = vmatprep.subr.mxu0 0.0
      %2200 = vmatpush1.msra.mxu0 0.0
      %2201 = vmatprep.subr.mxu0 0.0
      %2202 = vmatpush1.msra.mxu0 0.0
      %2203 = vmatprep.subr.mxu0 0.0
      %2204 = vmatpush1.msra.mxu0 0.0
      %2205 = vmatprep.subr.mxu0 0.0
      %2206 = vmatpush1.msra.mxu0 0.0
      %2207 = vmatprep.mubr.f32.mxu0 0.0
      %2208 = vmatmul.mubr.f32.gmra.mrb[0].mxu0 %v2135
      %v2209 = vpop.f32.mrb[0].mxu0
      %v2210 = vadd.f32 0.0, %v2209
      %v2211 = vpop.f32.mrb[0].mxu0
      %2212 = vmatprep.mubr.f32.mxu0 0.0
      %2213 = vmatmul.mubr.f32.gmra.mrb[0].mxu0 %v2138
      %v2214 = vpop.f32.mrb[0].mxu0
      %v2215 = vadd.f32 0.0, %v2214
      %v2216 = vpop.f32.mrb[0].mxu0
      %2217 = vdwg.mxu0
      %v2218 = vld [vmem:[%s8] sm:$0xff]
      %2219 = vset.pattern.permute.xlu0 2
      %2220 = vperm.xlu0 %2219, %v798
      %v2221 = vpop.permute.xlu0 %2220
      %vm2223 = vcmask 261120
      %v2225 = vsel %vm2223, %v2218, 0
      %2227 = vmatprep.subr.mxu0 0.0
      %2228 = vmatpush1.msra.mxu0 %v2210
      %2229 = vmatprep.subr.mxu0 0.0
      %2230 = vmatpush1.msra.mxu0 %v2215
      %2231 = vmatprep.subr.mxu0 0.0
      %2232 = vmatpush1.msra.mxu0 %v2125
      %2233 = vmatprep.subr.mxu0 0.0
      %2234 = vmatpush1.msra.mxu0 %v2130
      %2235 = vmatprep.subr.mxu0 0.0
      %2236 = vmatpush1.msra.mxu0 0.0
      %2237 = vmatprep.subr.mxu0 0.0
      %2238 = vmatpush1.msra.mxu0 0.0
      %2239 = vmatprep.subr.mxu0 0.0
      %2240 = vmatpush1.msra.mxu0 0.0
      %2241 = vmatprep.subr.mxu0 0.0
      %2242 = vmatpush1.msra.mxu0 0.0
      %2243 = vmatprep.subr.mxu0 0.0
      %2244 = vmatpush1.msra.mxu0 0.0
      %2245 = vmatprep.subr.mxu0 0.0
      %2246 = vmatpush1.msra.mxu0 0.0
      %2247 = vmatprep.subr.mxu0 0.0
      %2248 = vmatpush1.msra.mxu0 0.0
      %2249 = vmatprep.subr.mxu0 0.0
      %2250 = vmatpush1.msra.mxu0 0.0
      %2251 = vmatprep.subr.mxu0 0.0
      %2252 = vmatpush1.msra.mxu0 0.0
      %2253 = vmatprep.subr.mxu0 0.0
      %2254 = vmatpush1.msra.mxu0 0.0
      %2255 = vmatprep.subr.mxu0 0.0
      %2256 = vmatpush1.msra.mxu0 0.0
      %2257 = vmatprep.subr.mxu0 0.0
      %2258 = vmatpush1.msra.mxu0 0.0
      %2259 = vmatprep.subr.mxu0 0.0
      %2260 = vmatpush1.msra.mxu0 0.0
      %2261 = vmatprep.subr.mxu0 0.0
      %2262 = vmatpush1.msra.mxu0 0.0
      %2263 = vmatprep.subr.mxu0 0.0
      %2264 = vmatpush1.msra.mxu0 0.0
      %2265 = vmatprep.subr.mxu0 0.0
      %2266 = vmatpush1.msra.mxu0 0.0
      %2267 = vmatprep.subr.mxu0 0.0
      %2268 = vmatpush1.msra.mxu0 0.0
      %2269 = vmatprep.subr.mxu0 0.0
      %2270 = vmatpush1.msra.mxu0 0.0
      %2271 = vmatprep.subr.mxu0 0.0
      %2272 = vmatpush1.msra.mxu0 0.0
      %2273 = vmatprep.subr.mxu0 0.0
      %2274 = vmatpush1.msra.mxu0 0.0
      %2275 = vmatprep.subr.mxu0 0.0
      %2276 = vmatpush1.msra.mxu0 0.0
      %2277 = vmatprep.subr.mxu0 0.0
      %2278 = vmatpush1.msra.mxu0 0.0
      %2279 = vmatprep.subr.mxu0 0.0
      %2280 = vmatpush1.msra.mxu0 0.0
      %2281 = vmatprep.subr.mxu0 0.0
      %2282 = vmatpush1.msra.mxu0 0.0
      %2283 = vmatprep.subr.mxu0 0.0
      %2284 = vmatpush1.msra.mxu0 0.0
      %2285 = vmatprep.subr.mxu0 0.0
      %2286 = vmatpush1.msra.mxu0 0.0
      %2287 = vmatprep.subr.mxu0 0.0
      %2288 = vmatpush1.msra.mxu0 0.0
      %2289 = vmatprep.subr.mxu0 0.0
      %2290 = vmatpush1.msra.mxu0 0.0
      %2291 = vmatprep.mubr.f32.mxu0 0.0
      %2292 = vmatmul.mubr.f32.gmra.mrb[0].mxu0 %v2225
      %v2293 = vpop.f32.mrb[0].mxu0
      %v2294 = vadd.f32 %v2221, %v2293
      %v2295 = vpop.f32.mrb[0].mxu0
      %2296 = vdwg.mxu0
      %v2297 = vxor.u32 %v2294, 2147483648
      %v2298 = vmul.f32 %v2297, 1.442695
      %v2299 = vpow.pop %v2298
      %v2300 = vadd.f32 %v2299, 1.0
      %v2301 = vrcp.pop %v2300
      %v2302 = vmul.f32 1.0, %v2301
      %v2303 = vmul.f32 %v2294, %v2302
      %v2304 = vld [vmem:[%s9] sm:$0xff]
      %v2305 = vld [vmem:[%s9 + $0x8] sm:$0xff]
      %2306 = vset.pattern.permute.xlu0 3
      %2307 = vperm.xlu0 %2306, %v798
      %v2308 = vpop.permute.xlu0 %2307
      %2310 = vset.pattern.permute.xlu0 3
      %2311 = vperm.xlu0 %2310, %v799
      %v2312 = vpop.permute.xlu0 %2311
      %v2315 = vsel %vm819, %v2304, 0
      %v2318 = vsel %vm819, %v2305, 0
      %2320 = vmatprep.subr.mxu0 0.0
      %2321 = vmatpush1.msra.mxu0 %v2303
      %2322 = vmatprep.subr.mxu0 0.0
      %2323 = vmatpush1.msra.mxu0 0.0
      %2324 = vmatprep.subr.mxu0 0.0
      %2325 = vmatpush1.msra.mxu0 0.0
      %2326 = vmatprep.subr.mxu0 0.0
      %2327 = vmatpush1.msra.mxu0 0.0
      %2328 = vmatprep.subr.mxu0 0.0
      %2329 = vmatpush1.msra.mxu0 0.0
      %2330 = vmatprep.subr.mxu0 0.0
      %2331 = vmatpush1.msra.mxu0 0.0
      %2332 = vmatprep.subr.mxu0 0.0
      %2333 = vmatpush1.msra.mxu0 0.0
      %2334 = vmatprep.subr.mxu0 0.0
      %2335 = vmatpush1.msra.mxu0 0.0
      %2336 = vmatprep.subr.mxu0 0.0
      %2337 = vmatpush1.msra.mxu0 0.0
      %2338 = vmatprep.subr.mxu0 0.0
      %2339 = vmatpush1.msra.mxu0 0.0
      %2340 = vmatprep.subr.mxu0 0.0
      %2341 = vmatpush1.msra.mxu0 0.0
      %2342 = vmatprep.subr.mxu0 0.0
      %2343 = vmatpush1.msra.mxu0 0.0
      %2344 = vmatprep.subr.mxu0 0.0
      %2345 = vmatpush1.msra.mxu0 0.0
      %2346 = vmatprep.subr.mxu0 0.0
      %2347 = vmatpush1.msra.mxu0 0.0
      %2348 = vmatprep.subr.mxu0 0.0
      %2349 = vmatpush1.msra.mxu0 0.0
      %2350 = vmatprep.subr.mxu0 0.0
      %2351 = vmatpush1.msra.mxu0 0.0
      %2352 = vmatprep.subr.mxu0 0.0
      %2353 = vmatpush1.msra.mxu0 0.0
      %2354 = vmatprep.subr.mxu0 0.0
      %2355 = vmatpush1.msra.mxu0 0.0
      %2356 = vmatprep.subr.mxu0 0.0
      %2357 = vmatpush1.msra.mxu0 0.0
      %2358 = vmatprep.subr.mxu0 0.0
      %2359 = vmatpush1.msra.mxu0 0.0
      %2360 = vmatprep.subr.mxu0 0.0
      %2361 = vmatpush1.msra.mxu0 0.0
      %2362 = vmatprep.subr.mxu0 0.0
      %2363 = vmatpush1.msra.mxu0 0.0
      %2364 = vmatprep.subr.mxu0 0.0
      %2365 = vmatpush1.msra.mxu0 0.0
      %2366 = vmatprep.subr.mxu0 0.0
      %2367 = vmatpush1.msra.mxu0 0.0
      %2368 = vmatprep.subr.mxu0 0.0
      %2369 = vmatpush1.msra.mxu0 0.0
      %2370 = vmatprep.subr.mxu0 0.0
      %2371 = vmatpush1.msra.mxu0 0.0
      %2372 = vmatprep.subr.mxu0 0.0
      %2373 = vmatpush1.msra.mxu0 0.0
      %2374 = vmatprep.subr.mxu0 0.0
      %2375 = vmatpush1.msra.mxu0 0.0
      %2376 = vmatprep.subr.mxu0 0.0
      %2377 = vmatpush1.msra.mxu0 0.0
      %2378 = vmatprep.subr.mxu0 0.0
      %2379 = vmatpush1.msra.mxu0 0.0
      %2380 = vmatprep.subr.mxu0 0.0
      %2381 = vmatpush1.msra.mxu0 0.0
      %2382 = vmatprep.subr.mxu0 0.0
      %2383 = vmatpush1.msra.mxu0 0.0
      %2384 = vmatprep.mubr.f32.mxu0 0.0
      %2385 = vmatmul.mubr.f32.gmra.mrb[0].mxu0 %v2315
      %v2386 = vpop.f32.mrb[0].mxu0
      %v2387 = vadd.f32 %v2308, %v2386
      %v2388 = vpop.f32.mrb[0].mxu0
      %2389 = vmatprep.mubr.f32.mxu0 0.0
      %2390 = vmatmul.mubr.f32.gmra.mrb[0].mxu0 %v2318
      %v2391 = vpop.f32.mrb[0].mxu0
      %v2392 = vadd.f32 %v2312, %v2391
      %v2393 = vpop.f32.mrb[0].mxu0
      %2394 = vdwg.mxu0
      %v2395 = vxor.u32 %v2387, 2147483648
      %v2396 = vxor.u32 %v2392, 2147483648
      %v2397 = vmul.f32 %v2395, 1.442695
      %v2398 = vpow.pop %v2397
      %v2399 = vmul.f32 %v2396, 1.442695
      %v2400 = vpow.pop %v2399
      %v2401 = vadd.f32 %v2398, 1.0
      %v2402 = vadd.f32 %v2400, 1.0
      %v2403 = vrcp.pop %v2401
      %v2404 = vmul.f32 1.0, %v2403
      %v2405 = vrcp.pop %v2402
      %v2406 = vmul.f32 1.0, %v2405
      %v2408 = vcombine.high %v796, %v796
      %v2410 = vsel %vm2133, %v2404, 0
      %v2413 = vsel %vm2133, %v2406, 0
      %v2415 = vsel %vm823, %v796, 0
      %v2417 = vsel %vm823, %v2408, 0
      %2419 = vmatprep.subr.mxu0 %v2417
      %2420 = vmatpush1.msra.mxu0 %v2415
      %2421 = vmatprep.subr.mxu0 0.0
      %2422 = vmatpush1.msra.mxu0 0.0
      %2423 = vmatprep.subr.mxu0 0.0
      %2424 = vmatpush1.msra.mxu0 0.0
      %2425 = vmatprep.subr.mxu0 0.0
      %2426 = vmatpush1.msra.mxu0 0.0
      %2427 = vmatprep.subr.mxu0 0.0
      %2428 = vmatpush1.msra.mxu0 0.0
      %2429 = vmatprep.subr.mxu0 0.0
      %2430 = vmatpush1.msra.mxu0 0.0
      %2431 = vmatprep.subr.mxu0 0.0
      %2432 = vmatpush1.msra.mxu0 0.0
      %2433 = vmatprep.subr.mxu0 0.0
      %2434 = vmatpush1.msra.mxu0 0.0
      %2435 = vmatprep.subr.mxu0 0.0
      %2436 = vmatpush1.msra.mxu0 0.0
      %2437 = vmatprep.subr.mxu0 0.0
      %2438 = vmatpush1.msra.mxu0 0.0
      %2439 = vmatprep.subr.mxu0 0.0
      %2440 = vmatpush1.msra.mxu0 0.0
      %2441 = vmatprep.subr.mxu0 0.0
      %2442 = vmatpush1.msra.mxu0 0.0
      %2443 = vmatprep.subr.mxu0 0.0
      %2444 = vmatpush1.msra.mxu0 0.0
      %2445 = vmatprep.subr.mxu0 0.0
      %2446 = vmatpush1.msra.mxu0 0.0
      %2447 = vmatprep.subr.mxu0 0.0
      %2448 = vmatpush1.msra.mxu0 0.0
      %2449 = vmatprep.subr.mxu0 0.0
      %2450 = vmatpush1.msra.mxu0 0.0
      %2451 = vmatprep.subr.mxu0 0.0
      %2452 = vmatpush1.msra.mxu0 0.0
      %2453 = vmatprep.subr.mxu0 0.0
      %2454 = vmatpush1.msra.mxu0 0.0
      %2455 = vmatprep.subr.mxu0 0.0
      %2456 = vmatpush1.msra.mxu0 0.0
      %2457 = vmatprep.subr.mxu0 0.0
      %2458 = vmatpush1.msra.mxu0 0.0
      %2459 = vmatprep.subr.mxu0 0.0
      %2460 = vmatpush1.msra.mxu0 0.0
      %2461 = vmatprep.subr.mxu0 0.0
      %2462 = vmatpush1.msra.mxu0 0.0
      %2463 = vmatprep.subr.mxu0 0.0
      %2464 = vmatpush1.msra.mxu0 0.0
      %2465 = vmatprep.subr.mxu0 0.0
      %2466 = vmatpush1.msra.mxu0 0.0
      %2467 = vmatprep.subr.mxu0 0.0
      %2468 = vmatpush1.msra.mxu0 0.0
      %2469 = vmatprep.subr.mxu0 0.0
      %2470 = vmatpush1.msra.mxu0 0.0
      %2471 = vmatprep.subr.mxu0 0.0
      %2472 = vmatpush1.msra.mxu0 0.0
      %2473 = vmatprep.subr.mxu0 0.0
      %2474 = vmatpush1.msra.mxu0 0.0
      %2475 = vmatprep.subr.mxu0 0.0
      %2476 = vmatpush1.msra.mxu0 0.0
      %2477 = vmatprep.subr.mxu0 0.0
      %2478 = vmatpush1.msra.mxu0 0.0
      %2479 = vmatprep.subr.mxu0 0.0
      %2480 = vmatpush1.msra.mxu0 0.0
      %2481 = vmatprep.subr.mxu0 0.0
      %2482 = vmatpush1.msra.mxu0 0.0
      %2483 = vmatprep.mubr.f32.mxu0 0.0
      %2484 = vmatmul.mubr.f32.gmra.mrb[0].mxu0 %v2410
      %v2485 = vpop.f32.mrb[0].mxu0
      %v2486 = vadd.f32 0.0, %v2485
      %v2487 = vpop.f32.mrb[0].mxu0
      %v2488 = vadd.f32 0.0, %v2487
      %2489 = vmatprep.mubr.f32.mxu0 0.0
      %2490 = vmatmul.mubr.f32.gmra.mrb[0].mxu0 %v2413
      %v2491 = vpop.f32.mrb[0].mxu0
      %v2492 = vadd.f32 0.0, %v2491
      %v2493 = vpop.f32.mrb[0].mxu0
      %v2494 = vadd.f32 0.0, %v2493
      %2495 = vdwg.mxu0
      %v2496 = vld [vmem:[%s10] sm:$0xf]
      %v2497 = vmul.f32 %v2054, %v2486
      %v2498 = vmul.f32 %v2055, %v2488
      %v2499 = vmul.f32 %v2056, %v2492
      %v2500 = vmul.f32 %v2057, %v2494
      %v2501 = vpack.c.bf16 %v2499, %v2497
      %v2502 = vpack.c.bf16 %v2500, %v2498
      %2503 = vset.pattern.permute.xlu0 4
      %2504 = vperm.xlu0 %2503, %v798
      %v2505 = vpop.permute.xlu0 %2504
      %vm2507 = vcmask 130048
      %v2509 = vsel %vm2507, %v2496, 0
      %2511 = vmatprep.subr.bf16.mxu0 %v2502
      %2512 = vmatpush1.bf16.msra.mxu0 %v2501
      %2513 = vmatprep.subr.bf16.mxu0 0
      %2514 = vmatpush1.bf16.msra.mxu0 0
      %2515 = vmatprep.subr.bf16.mxu0 0
      %2516 = vmatpush1.bf16.msra.mxu0 0
      %2517 = vmatprep.subr.bf16.mxu0 0
      %2518 = vmatpush1.bf16.msra.mxu0 0
      %2519 = vmatprep.subr.bf16.mxu0 0
      %2520 = vmatpush1.bf16.msra.mxu0 0
      %2521 = vmatprep.subr.bf16.mxu0 0
      %2522 = vmatpush1.bf16.msra.mxu0 0
      %2523 = vmatprep.subr.bf16.mxu0 0
      %2524 = vmatpush1.bf16.msra.mxu0 0
      %2525 = vmatprep.subr.bf16.mxu0 0
      %2526 = vmatpush1.bf16.msra.mxu0 0
      %2527 = vmatprep.subr.bf16.mxu0 0
      %2528 = vmatpush1.bf16.msra.mxu0 0
      %2529 = vmatprep.subr.bf16.mxu0 0
      %2530 = vmatpush1.bf16.msra.mxu0 0
      %2531 = vmatprep.subr.bf16.mxu0 0
      %2532 = vmatpush1.bf16.msra.mxu0 0
      %2533 = vmatprep.subr.bf16.mxu0 0
      %2534 = vmatpush1.bf16.msra.mxu0 0
      %2535 = vmatprep.subr.bf16.mxu0 0
      %2536 = vmatpush1.bf16.msra.mxu0 0
      %2537 = vmatprep.subr.bf16.mxu0 0
      %2538 = vmatpush1.bf16.msra.mxu0 0
      %2539 = vmatprep.subr.bf16.mxu0 0
      %2540 = vmatpush1.bf16.msra.mxu0 0
      %2541 = vmatprep.subr.bf16.mxu0 0
      %2542 = vmatpush1.bf16.msra.mxu0 0
      %2543 = vmatprep.mubr.bf16.mxu0 0
      %2544 = vmatmul.mubr.bf16.gmra.mrb[0].mxu0 %v2509
      %v2545 = vpop.f32.mrb[0].mxu0
      %v2546 = vadd.f32 %v2505, %v2545
      %v2547 = vpop.f32.mrb[0].mxu0
      %v2548 = vadd.f32 %v2505, %v2547
      %v2549 = vpop.f32.mrb[0].mxu0
      %v2550 = vpop.f32.mrb[0].mxu0
      %2551 = vdwg.mxu0
      %2552 = vrot.lane.b32.xlu0 %v798, 122
      %v2553 = vpop.permute.xlu0 %2552
      %s2554 = vtos %v2553
      %v2555 = vstv %s2554
      %v2557 = vmul.f32 %v2555, %v2546
      %v2558 = vmul.f32 %v2555, %v2548
      %v2559 = vadd.f32 %v762, %v2557
      %v2560 = vadd.f32 %v763, %v2558
      %v2561 = vld [vmem:[%s17] sm:$0xff]
      %v2562 = vld [vmem:[%s17 + $0x8] sm:$0xff]
      %v2563 = vld [vmem:[%s17 + $0x10] sm:$0xff]
      %v2564 = vld [vmem:[%s12] sm:$0xf]
      %v2565 = vld [vmem:[%s12 + $0x4] sm:$0xf]
      %v2566 = vld [vmem:[%s12 + $0x8] sm:$0xf]
      %v2567 = vld [vmem:[%s12 + $0xc] sm:$0xf]
      %v2568 = vld [vmem:[%s12 + $0x10] sm:$0xf]
      %v2569 = vpack.c.bf16 %v2559, %v2559
      %v2570 = vpack.c.bf16 %v2560, %v2560
      %v2576 = vunpack.c.l.b16 %v2564
      %v2577 = vunpack.c.l.b16 %v2565
      %v2578 = vunpack.c.l.b16 %v2566
      %v2579 = vunpack.c.l.b16 %v2567
      %v2580 = vunpack.c.l.b16 %v2568
      %v2581 = vpack.c.b16 %v2577, %v2576
      %v2582 = vpack.c.b16 %v2579, %v2578
      %v2583 = vpack.c.b16 %v2580, %v2580
      %v2585 = vsel %vm819, %v2581, 0
      %v2588 = vsel %vm819, %v2582, 0
      %v2591 = vsel %vm819, %v2583, 0
      %v2594 = vsel %vm823, %v2569, 0
      %v2597 = vsel %vm823, %v2570, 0
      %2599 = vmatprep.subr.bf16.mxu0 %v2597
      %2600 = vmatpush1.bf16.msra.mxu0 %v2594
      %2601 = vmatprep.subr.bf16.mxu0 0
      %2602 = vmatpush1.bf16.msra.mxu0 0
      %2603 = vmatprep.subr.bf16.mxu0 0
      %2604 = vmatpush1.bf16.msra.mxu0 0
      %2605 = vmatprep.subr.bf16.mxu0 0
      %2606 = vmatpush1.bf16.msra.mxu0 0
      %2607 = vmatprep.subr.bf16.mxu0 0
      %2608 = vmatpush1.bf16.msra.mxu0 0
      %2609 = vmatprep.subr.bf16.mxu0 0
      %2610 = vmatpush1.bf16.msra.mxu0 0
      %2611 = vmatprep.subr.bf16.mxu0 0
      %2612 = vmatpush1.bf16.msra.mxu0 0
      %2613 = vmatprep.subr.bf16.mxu0 0
      %2614 = vmatpush1.bf16.msra.mxu0 0
      %2615 = vmatprep.subr.bf16.mxu0 0
      %2616 = vmatpush1.bf16.msra.mxu0 0
      %2617 = vmatprep.subr.bf16.mxu0 0
      %2618 = vmatpush1.bf16.msra.mxu0 0
      %2619 = vmatprep.subr.bf16.mxu0 0
      %2620 = vmatpush1.bf16.msra.mxu0 0
      %2621 = vmatprep.subr.bf16.mxu0 0
      %2622 = vmatpush1.bf16.msra.mxu0 0
      %2623 = vmatprep.subr.bf16.mxu0 0
      %2624 = vmatpush1.bf16.msra.mxu0 0
      %2625 = vmatprep.subr.bf16.mxu0 0
      %2626 = vmatpush1.bf16.msra.mxu0 0
      %2627 = vmatprep.subr.bf16.mxu0 0
      %2628 = vmatpush1.bf16.msra.mxu0 0
      %2629 = vmatprep.subr.bf16.mxu0 0
      %2630 = vmatpush1.bf16.msra.mxu0 0
      %2631 = vmatprep.mubr.bf16.mxu0 0
      %2632 = vmatmul.mubr.bf16.gmra.mrb[0].mxu0 %v2585
      %v2633 = vpop.f32.mrb[0].mxu0
      %v2634 = vadd.f32 0.0, %v2633
      %v2635 = vpop.f32.mrb[0].mxu0
      %v2636 = vadd.f32 0.0, %v2635
      %v2637 = vpop.f32.mrb[0].mxu0
      %v2638 = vadd.f32 0.0, %v2637
      %v2639 = vpop.f32.mrb[0].mxu0
      %v2640 = vadd.f32 0.0, %v2639
      %2641 = vmatprep.mubr.bf16.mxu0 0
      %2642 = vmatmul.mubr.bf16.gmra.mrb[0].mxu0 %v2588
      %v2643 = vpop.f32.mrb[0].mxu0
      %v2644 = vadd.f32 0.0, %v2643
      %v2645 = vpop.f32.mrb[0].mxu0
      %v2646 = vadd.f32 0.0, %v2645
      %v2647 = vpop.f32.mrb[0].mxu0
      %v2648 = vadd.f32 0.0, %v2647
      %v2649 = vpop.f32.mrb[0].mxu0
      %v2650 = vadd.f32 0.0, %v2649
      %2651 = vmatprep.mubr.bf16.mxu0 0
      %2652 = vmatmul.mubr.bf16.gmra.mrb[0].mxu0 %v2591
      %v2653 = vpop.f32.mrb[0].mxu0
      %v2654 = vadd.f32 0.0, %v2653
      %v2655 = vpop.f32.mrb[0].mxu0
      %v2656 = vadd.f32 0.0, %v2655
      %v2657 = vpop.f32.mrb[0].mxu0
      %v2658 = vpop.f32.mrb[0].mxu0
      %2659 = vdwg.mxu0
      %2661 = vset.pattern.permute.xlu0 0
      %2662 = vperm.xlu0 %2661, %v2561
      %v2663 = vpop.permute.xlu0 %2662
      %2666 = vset.pattern.permute.xlu0 0
      %2667 = vperm.xlu0 %2666, %v2562
      %v2668 = vpop.permute.xlu0 %2667
      %2671 = vset.pattern.permute.xlu0 0
      %2672 = vperm.xlu0 %2671, %v2563
      %v2673 = vpop.permute.xlu0 %2672
      %v2675 = vadd.f32 %v2634, %v2663
      %v2676 = vadd.f32 %v2636, %v2663
      %v2677 = vadd.f32 %v2638, %v2668
      %v2678 = vadd.f32 %v2640, %v2668
      %v2679 = vadd.f32 %v2644, %v2673
      %v2680 = vadd.f32 %v2646, %v2673
      %v2681 = vxor.u32 %v2675, 2147483648
      %v2682 = vxor.u32 %v2676, 2147483648
      %v2683 = vxor.u32 %v2677, 2147483648
      %v2684 = vxor.u32 %v2678, 2147483648
      %v2685 = vxor.u32 %v2679, 2147483648
      %v2686 = vxor.u32 %v2680, 2147483648
      %v2687 = vmul.f32 %v2681, 1.442695
      %v2688 = vpow.pop %v2687
      %v2689 = vmul.f32 %v2682, 1.442695
      %v2690 = vpow.pop %v2689
      %v2691 = vmul.f32 %v2683, 1.442695
      %v2692 = vpow.pop %v2691
      %v2693 = vmul.f32 %v2684, 1.442695
      %v2694 = vpow.pop %v2693
      %v2695 = vmul.f32 %v2685, 1.442695
      %v2696 = vpow.pop %v2695
      %v2697 = vmul.f32 %v2686, 1.442695
      %v2698 = vpow.pop %v2697
      %v2699 = vadd.f32 %v2688, 1.0
      %v2700 = vadd.f32 %v2690, 1.0
      %v2701 = vadd.f32 %v2692, 1.0
      %v2702 = vadd.f32 %v2694, 1.0
      %v2703 = vadd.f32 %v2696, 1.0
      %v2704 = vadd.f32 %v2698, 1.0
      %v2705 = vrcp.pop %v2699
      %v2706 = vmul.f32 1.0, %v2705
      %v2707 = vrcp.pop %v2700
      %v2708 = vmul.f32 1.0, %v2707
      %v2709 = vrcp.pop %v2701
      %v2710 = vmul.f32 1.0, %v2709
      %v2711 = vrcp.pop %v2702
      %v2712 = vmul.f32 1.0, %v2711
      %v2713 = vrcp.pop %v2703
      %v2714 = vmul.f32 1.0, %v2713
      %v2715 = vrcp.pop %v2704
      %v2716 = vmul.f32 1.0, %v2715
      %v2717 = vmul.f32 %v2675, %v2706
      %v2718 = vmul.f32 %v2676, %v2708
      %v2719 = vmul.f32 %v2677, %v2710
      %v2720 = vmul.f32 %v2678, %v2712
      %v2721 = vmul.f32 %v2679, %v2714
      %v2722 = vmul.f32 %v2680, %v2716
      %2723 = vset.pattern.permute.xlu0 5
      %2724 = vperm.xlu0 %2723, %v2561
      %v2725 = vpop.permute.xlu0 %2724
      %2727 = vset.pattern.permute.xlu0 5
      %2728 = vperm.xlu0 %2727, %v2562
      %v2729 = vpop.permute.xlu0 %2728
      %v2731 = vadd.f32 %v2648, %v2725
      %v2732 = vadd.f32 %v2650, %v2725
      %v2733 = vadd.f32 %v2654, %v2729
      %v2734 = vadd.f32 %v2656, %v2729
      %v2735 = vld [vmem:[%s13] sm:$0xff]
      %v2736 = vld [vmem:[%s13 + $0x8] sm:$0xff]
      %v2737 = vld [vmem:[%s13 + $0x10] sm:$0xff]
      %2738 = vrot.lane.b32.xlu0 %v2717, 9
      %v2739 = vpop.permute.xlu0 %2738
      %2740 = vrot.lane.b32.xlu0 %v2719, 9
      %v2741 = vpop.permute.xlu0 %2740
      %2742 = vrot.lane.b32.xlu0 %v2721, 9
      %v2743 = vpop.permute.xlu0 %2742
      %2744 = vrot.lane.b32.xlu0 %v2718, 9
      %v2745 = vpop.permute.xlu0 %2744
      %2746 = vrot.lane.b32.xlu0 %v2720, 9
      %v2747 = vpop.permute.xlu0 %2746
      %2748 = vrot.lane.b32.xlu0 %v2722, 9
      %v2749 = vpop.permute.xlu0 %2748
      %v2750 = vsel %vm913, %v2739, %v2745
      %v2751 = vsel %vm913, %v2741, %v2747
      %v2752 = vsel %vm913, %v2743, %v2749
      %v2753 = vsel %vm913, %v2745, %v2739
      %v2754 = vsel %vm913, %v2747, %v2741
      %v2755 = vsel %vm913, %v2749, %v2743
      %2757 = vset.pattern.permute.xlu0 0
      %2758 = vperm.xlu0 %2757, %v2735
      %v2759 = vpop.permute.xlu0 %2758
      %2762 = vset.pattern.permute.xlu0 0
      %2763 = vperm.xlu0 %2762, %v2736
      %v2764 = vpop.permute.xlu0 %2763
      %2767 = vset.pattern.permute.xlu0 0
      %2768 = vperm.xlu0 %2767, %v2737
      %v2769 = vpop.permute.xlu0 %2768
      %v2771 = vmul.f32 %v2750, %v2759
      %v2772 = vmul.f32 %v2753, %v2759
      %v2773 = vmul.f32 %v2751, %v2764
      %v2774 = vmul.f32 %v2754, %v2764
      %v2775 = vmul.f32 %v2752, %v2769
      %v2776 = vmul.f32 %v2755, %v2769
      %v2777 = vmul.f32 %v2771, %v937
      %v2778 = vmul.f32 %v2772, %v941
      %v2779 = vmul.f32 %v2773, %v937
      %v2780 = vmul.f32 %v2774, %v941
      %v2781 = vmul.f32 %v2775, %v937
      %v2782 = vmul.f32 %v2776, %v941
      %v2783 = vadd.f32 %v2777, 0.0
      %v2784 = vadd.f32 %v2778, 0.0
      %v2785 = vadd.f32 %v2779, 0.0
      %v2786 = vadd.f32 %v2780, 0.0
      %v2787 = vadd.f32 %v2781, 0.0
      %v2788 = vadd.f32 %v2782, 0.0
      %2789 = vrot.lane.b32.xlu0 %v2717, 8
      %v2790 = vpop.permute.xlu0 %2789
      %2791 = vrot.lane.b32.xlu0 %v2719, 8
      %v2792 = vpop.permute.xlu0 %2791
      %2793 = vrot.lane.b32.xlu0 %v2721, 8
      %v2794 = vpop.permute.xlu0 %2793
      %2795 = vrot.lane.b32.xlu0 %v2718, 8
      %v2796 = vpop.permute.xlu0 %2795
      %2797 = vrot.lane.b32.xlu0 %v2720, 8
      %v2798 = vpop.permute.xlu0 %2797
      %2799 = vrot.lane.b32.xlu0 %v2722, 8
      %v2800 = vpop.permute.xlu0 %2799
      %v2801 = vsel %vm960, %v2790, %v2796
      %v2802 = vsel %vm960, %v2792, %v2798
      %v2803 = vsel %vm960, %v2794, %v2800
      %v2804 = vsel %vm960, %v2796, %v2790
      %v2805 = vsel %vm960, %v2798, %v2792
      %v2806 = vsel %vm960, %v2800, %v2794
      %2807 = vset.pattern.permute.xlu0 1
      %2808 = vperm.xlu0 %2807, %v2735
      %v2809 = vpop.permute.xlu0 %2808
      %2811 = vset.pattern.permute.xlu0 1
      %2812 = vperm.xlu0 %2811, %v2736
      %v2813 = vpop.permute.xlu0 %2812
      %2815 = vset.pattern.permute.xlu0 1
      %2816 = vperm.xlu0 %2815, %v2737
      %v2817 = vpop.permute.xlu0 %2816
      %v2819 = vmul.f32 %v2801, %v2809
      %v2820 = vmul.f32 %v2804, %v2809
      %v2821 = vmul.f32 %v2802, %v2813
      %v2822 = vmul.f32 %v2805, %v2813
      %v2823 = vmul.f32 %v2803, %v2817
      %v2824 = vmul.f32 %v2806, %v2817
      %v2825 = vmul.f32 %v2819, %v983
      %v2826 = vmul.f32 %v2820, %v987
      %v2827 = vmul.f32 %v2821, %v983
      %v2828 = vmul.f32 %v2822, %v987
      %v2829 = vmul.f32 %v2823, %v983
      %v2830 = vmul.f32 %v2824, %v987
      %v2831 = vadd.f32 %v2783, %v2825
      %v2832 = vadd.f32 %v2784, %v2826
      %v2833 = vadd.f32 %v2785, %v2827
      %v2834 = vadd.f32 %v2786, %v2828
      %v2835 = vadd.f32 %v2787, %v2829
      %v2836 = vadd.f32 %v2788, %v2830
      %2837 = vrot.lane.b32.xlu0 %v2717, 7
      %v2838 = vpop.permute.xlu0 %2837
      %2839 = vrot.lane.b32.xlu0 %v2719, 7
      %v2840 = vpop.permute.xlu0 %2839
      %2841 = vrot.lane.b32.xlu0 %v2721, 7
      %v2842 = vpop.permute.xlu0 %2841
      %2843 = vrot.lane.b32.xlu0 %v2718, 7
      %v2844 = vpop.permute.xlu0 %2843
      %2845 = vrot.lane.b32.xlu0 %v2720, 7
      %v2846 = vpop.permute.xlu0 %2845
      %2847 = vrot.lane.b32.xlu0 %v2722, 7
      %v2848 = vpop.permute.xlu0 %2847
      %v2849 = vsel %vm1006, %v2838, %v2844
      %v2850 = vsel %vm1006, %v2840, %v2846
      %v2851 = vsel %vm1006, %v2842, %v2848
      %v2852 = vsel %vm1006, %v2844, %v2838
      %v2853 = vsel %vm1006, %v2846, %v2840
      %v2854 = vsel %vm1006, %v2848, %v2842
      %2855 = vset.pattern.permute.xlu0 2
      %2856 = vperm.xlu0 %2855, %v2735
      %v2857 = vpop.permute.xlu0 %2856
      %2859 = vset.pattern.permute.xlu0 2
      %2860 = vperm.xlu0 %2859, %v2736
      %v2861 = vpop.permute.xlu0 %2860
      %2863 = vset.pattern.permute.xlu0 2
      %2864 = vperm.xlu0 %2863, %v2737
      %v2865 = vpop.permute.xlu0 %2864
      %v2867 = vmul.f32 %v2849, %v2857
      %v2868 = vmul.f32 %v2852, %v2857
      %v2869 = vmul.f32 %v2850, %v2861
      %v2870 = vmul.f32 %v2853, %v2861
      %v2871 = vmul.f32 %v2851, %v2865
      %v2872 = vmul.f32 %v2854, %v2865
      %v2873 = vmul.f32 %v2867, %v1029
      %v2874 = vmul.f32 %v2868, %v1033
      %v2875 = vmul.f32 %v2869, %v1029
      %v2876 = vmul.f32 %v2870, %v1033
      %v2877 = vmul.f32 %v2871, %v1029
      %v2878 = vmul.f32 %v2872, %v1033
      %v2879 = vadd.f32 %v2831, %v2873
      %v2880 = vadd.f32 %v2832, %v2874
      %v2881 = vadd.f32 %v2833, %v2875
      %v2882 = vadd.f32 %v2834, %v2876
      %v2883 = vadd.f32 %v2835, %v2877
      %v2884 = vadd.f32 %v2836, %v2878
      %2885 = vrot.lane.b32.xlu0 %v2717, 1
      %v2886 = vpop.permute.xlu0 %2885
      %2887 = vrot.lane.b32.xlu0 %v2719, 1
      %v2888 = vpop.permute.xlu0 %2887
      %2889 = vrot.lane.b32.xlu0 %v2721, 1
      %v2890 = vpop.permute.xlu0 %2889
      %2891 = vrot.lane.b32.xlu0 %v2718, 1
      %v2892 = vpop.permute.xlu0 %2891
      %2893 = vrot.lane.b32.xlu0 %v2720, 1
      %v2894 = vpop.permute.xlu0 %2893
      %2895 = vrot.lane.b32.xlu0 %v2722, 1
      %v2896 = vpop.permute.xlu0 %2895
      %v2897 = vsel %vm1052, %v2886, %v2892
      %v2898 = vsel %vm1052, %v2888, %v2894
      %v2899 = vsel %vm1052, %v2890, %v2896
      %v2900 = vsel %vm1052, %v2892, %v2886
      %v2901 = vsel %vm1052, %v2894, %v2888
      %v2902 = vsel %vm1052, %v2896, %v2890
      %2903 = vset.pattern.permute.xlu0 3
      %2904 = vperm.xlu0 %2903, %v2735
      %v2905 = vpop.permute.xlu0 %2904
      %2907 = vset.pattern.permute.xlu0 3
      %2908 = vperm.xlu0 %2907, %v2736
      %v2909 = vpop.permute.xlu0 %2908
      %2911 = vset.pattern.permute.xlu0 3
      %2912 = vperm.xlu0 %2911, %v2737
      %v2913 = vpop.permute.xlu0 %2912
      %v2915 = vmul.f32 %v2897, %v2905
      %v2916 = vmul.f32 %v2900, %v2905
      %v2917 = vmul.f32 %v2898, %v2909
      %v2918 = vmul.f32 %v2901, %v2909
      %v2919 = vmul.f32 %v2899, %v2913
      %v2920 = vmul.f32 %v2902, %v2913
      %v2921 = vmul.f32 %v2915, %v1075
      %v2922 = vmul.f32 %v2916, %v1079
      %v2923 = vmul.f32 %v2917, %v1075
      %v2924 = vmul.f32 %v2918, %v1079
      %v2925 = vmul.f32 %v2919, %v1075
      %v2926 = vmul.f32 %v2920, %v1079
      %v2927 = vadd.f32 %v2879, %v2921
      %v2928 = vadd.f32 %v2880, %v2922
      %v2929 = vadd.f32 %v2881, %v2923
      %v2930 = vadd.f32 %v2882, %v2924
      %v2931 = vadd.f32 %v2883, %v2925
      %v2932 = vadd.f32 %v2884, %v2926
      %2933 = vset.pattern.permute.xlu0 4
      %2934 = vperm.xlu0 %2933, %v2735
      %v2935 = vpop.permute.xlu0 %2934
      %2937 = vset.pattern.permute.xlu0 4
      %2938 = vperm.xlu0 %2937, %v2736
      %v2939 = vpop.permute.xlu0 %2938
      %2941 = vset.pattern.permute.xlu0 4
      %2942 = vperm.xlu0 %2941, %v2737
      %v2943 = vpop.permute.xlu0 %2942
      %v2945 = vmul.f32 %v2718, %v2935
      %v2946 = vmul.f32 %v2717, %v2935
      %v2947 = vmul.f32 %v2720, %v2939
      %v2948 = vmul.f32 %v2719, %v2939
      %v2949 = vmul.f32 %v2722, %v2943
      %v2950 = vmul.f32 %v2721, %v2943
      %v2951 = vmul.f32 %v2945, %v1108
      %v2952 = vmul.f32 %v2946, %v1112
      %v2953 = vmul.f32 %v2947, %v1108
      %v2954 = vmul.f32 %v2948, %v1112
      %v2955 = vmul.f32 %v2949, %v1108
      %v2956 = vmul.f32 %v2950, %v1112
      %v2957 = vadd.f32 %v2927, %v2951
      %v2958 = vadd.f32 %v2928, %v2952
      %v2959 = vadd.f32 %v2929, %v2953
      %v2960 = vadd.f32 %v2930, %v2954
      %v2961 = vadd.f32 %v2931, %v2955
      %v2962 = vadd.f32 %v2932, %v2956
      %2963 = vrot.lane.b32.xlu0 %v2717, 127
      %v2964 = vpop.permute.xlu0 %2963
      %2965 = vrot.lane.b32.xlu0 %v2719, 127
      %v2966 = vpop.permute.xlu0 %2965
      %2967 = vrot.lane.b32.xlu0 %v2721, 127
      %v2968 = vpop.permute.xlu0 %2967
      %2969 = vrot.lane.b32.xlu0 %v2718, 127
      %v2970 = vpop.permute.xlu0 %2969
      %2971 = vrot.lane.b32.xlu0 %v2720, 127
      %v2972 = vpop.permute.xlu0 %2971
      %2973 = vrot.lane.b32.xlu0 %v2722, 127
      %v2974 = vpop.permute.xlu0 %2973
      %v2975 = vsel %vm1131, %v2964, %v2970
      %v2976 = vsel %vm1131, %v2966, %v2972
      %v2977 = vsel %vm1131, %v2968, %v2974
      %v2978 = vsel %vm1131, %v2970, %v2964
      %v2979 = vsel %vm1131, %v2972, %v2966
      %v2980 = vsel %vm1131, %v2974, %v2968
      %2981 = vset.pattern.permute.xlu0 5
      %2982 = vperm.xlu0 %2981, %v2735
      %v2983 = vpop.permute.xlu0 %2982
      %2985 = vset.pattern.permute.xlu0 5
      %2986 = vperm.xlu0 %2985, %v2736
      %v2987 = vpop.permute.xlu0 %2986
      %2989 = vset.pattern.permute.xlu0 5
      %2990 = vperm.xlu0 %2989, %v2737
      %v2991 = vpop.permute.xlu0 %2990
      %v2993 = vmul.f32 %v2978, %v2983
      %v2994 = vmul.f32 %v2975, %v2983
      %v2995 = vmul.f32 %v2979, %v2987
      %v2996 = vmul.f32 %v2976, %v2987
      %v2997 = vmul.f32 %v2980, %v2991
      %v2998 = vmul.f32 %v2977, %v2991
      %v2999 = vmul.f32 %v2993, %v1154
      %v3000 = vmul.f32 %v2994, %v1158
      %v3001 = vmul.f32 %v2995, %v1154
      %v3002 = vmul.f32 %v2996, %v1158
      %v3003 = vmul.f32 %v2997, %v1154
      %v3004 = vmul.f32 %v2998, %v1158
      %v3005 = vadd.f32 %v2957, %v2999
      %v3006 = vadd.f32 %v2958, %v3000
      %v3007 = vadd.f32 %v2959, %v3001
      %v3008 = vadd.f32 %v2960, %v3002
      %v3009 = vadd.f32 %v2961, %v3003
      %v3010 = vadd.f32 %v2962, %v3004
      %3011 = vrot.lane.b32.xlu0 %v2717, 121
      %v3012 = vpop.permute.xlu0 %3011
      %3013 = vrot.lane.b32.xlu0 %v2719, 121
      %v3014 = vpop.permute.xlu0 %3013
      %3015 = vrot.lane.b32.xlu0 %v2721, 121
      %v3016 = vpop.permute.xlu0 %3015
      %3017 = vrot.lane.b32.xlu0 %v2718, 121
      %v3018 = vpop.permute.xlu0 %3017
      %3019 = vrot.lane.b32.xlu0 %v2720, 121
      %v3020 = vpop.permute.xlu0 %3019
      %3021 = vrot.lane.b32.xlu0 %v2722, 121
      %v3022 = vpop.permute.xlu0 %3021
      %v3023 = vsel %vm1177, %v3012, %v3018
      %v3024 = vsel %vm1177, %v3014, %v3020
      %v3025 = vsel %vm1177, %v3016, %v3022
      %v3026 = vsel %vm1177, %v3018, %v3012
      %v3027 = vsel %vm1177, %v3020, %v3014
      %v3028 = vsel %vm1177, %v3022, %v3016
      %3029 = vset.pattern.permute.xlu0 6
      %3030 = vperm.xlu0 %3029, %v2735
      %v3031 = vpop.permute.xlu0 %3030
      %3033 = vset.pattern.permute.xlu0 6
      %3034 = vperm.xlu0 %3033, %v2736
      %v3035 = vpop.permute.xlu0 %3034
      %3037 = vset.pattern.permute.xlu0 6
      %3038 = vperm.xlu0 %3037, %v2737
      %v3039 = vpop.permute.xlu0 %3038
      %v3041 = vmul.f32 %v3026, %v3031
      %v3042 = vmul.f32 %v3023, %v3031
      %v3043 = vmul.f32 %v3027, %v3035
      %v3044 = vmul.f32 %v3024, %v3035
      %v3045 = vmul.f32 %v3028, %v3039
      %v3046 = vmul.f32 %v3025, %v3039
      %v3047 = vmul.f32 %v3041, %v1200
      %v3048 = vmul.f32 %v3042, %v1204
      %v3049 = vmul.f32 %v3043, %v1200
      %v3050 = vmul.f32 %v3044, %v1204
      %v3051 = vmul.f32 %v3045, %v1200
      %v3052 = vmul.f32 %v3046, %v1204
      %v3053 = vadd.f32 %v3005, %v3047
      %v3054 = vadd.f32 %v3006, %v3048
      %v3055 = vadd.f32 %v3007, %v3049
      %v3056 = vadd.f32 %v3008, %v3050
      %v3057 = vadd.f32 %v3009, %v3051
      %v3058 = vadd.f32 %v3010, %v3052
      %3059 = vrot.lane.b32.xlu0 %v2717, 120
      %v3060 = vpop.permute.xlu0 %3059
      %3061 = vrot.lane.b32.xlu0 %v2719, 120
      %v3062 = vpop.permute.xlu0 %3061
      %3063 = vrot.lane.b32.xlu0 %v2721, 120
      %v3064 = vpop.permute.xlu0 %3063
      %3065 = vrot.lane.b32.xlu0 %v2718, 120
      %v3066 = vpop.permute.xlu0 %3065
      %3067 = vrot.lane.b32.xlu0 %v2720, 120
      %v3068 = vpop.permute.xlu0 %3067
      %3069 = vrot.lane.b32.xlu0 %v2722, 120
      %v3070 = vpop.permute.xlu0 %3069
      %v3071 = vsel %vm1223, %v3060, %v3066
      %v3072 = vsel %vm1223, %v3062, %v3068
      %v3073 = vsel %vm1223, %v3064, %v3070
      %v3074 = vsel %vm1223, %v3066, %v3060
      %v3075 = vsel %vm1223, %v3068, %v3062
      %v3076 = vsel %vm1223, %v3070, %v3064
      %3077 = vset.pattern.permute.xlu0 7
      %3078 = vperm.xlu0 %3077, %v2735
      %v3079 = vpop.permute.xlu0 %3078
      %3081 = vset.pattern.permute.xlu0 7
      %3082 = vperm.xlu0 %3081, %v2736
      %v3083 = vpop.permute.xlu0 %3082
      %3085 = vset.pattern.permute.xlu0 7
      %3086 = vperm.xlu0 %3085, %v2737
      %v3087 = vpop.permute.xlu0 %3086
      %v3089 = vmul.f32 %v3074, %v3079
      %v3090 = vmul.f32 %v3071, %v3079
      %v3091 = vmul.f32 %v3075, %v3083
      %v3092 = vmul.f32 %v3072, %v3083
      %v3093 = vmul.f32 %v3076, %v3087
      %v3094 = vmul.f32 %v3073, %v3087
      %v3095 = vmul.f32 %v3089, %v1246
      %v3096 = vmul.f32 %v3090, %v1250
      %v3097 = vmul.f32 %v3091, %v1246
      %v3098 = vmul.f32 %v3092, %v1250
      %v3099 = vmul.f32 %v3093, %v1246
      %v3100 = vmul.f32 %v3094, %v1250
      %v3101 = vadd.f32 %v3053, %v3095
      %v3102 = vadd.f32 %v3054, %v3096
      %v3103 = vadd.f32 %v3055, %v3097
      %v3104 = vadd.f32 %v3056, %v3098
      %v3105 = vadd.f32 %v3057, %v3099
      %v3106 = vadd.f32 %v3058, %v3100
      %3107 = vrot.lane.b32.xlu0 %v2717, 119
      %v3108 = vpop.permute.xlu0 %3107
      %3109 = vrot.lane.b32.xlu0 %v2719, 119
      %v3110 = vpop.permute.xlu0 %3109
      %3111 = vrot.lane.b32.xlu0 %v2721, 119
      %v3112 = vpop.permute.xlu0 %3111
      %3113 = vrot.lane.b32.xlu0 %v2718, 119
      %v3114 = vpop.permute.xlu0 %3113
      %3115 = vrot.lane.b32.xlu0 %v2720, 119
      %v3116 = vpop.permute.xlu0 %3115
      %3117 = vrot.lane.b32.xlu0 %v2722, 119
      %v3118 = vpop.permute.xlu0 %3117
      %v3119 = vsel %vm1269, %v3108, %v3114
      %v3120 = vsel %vm1269, %v3110, %v3116
      %v3121 = vsel %vm1269, %v3112, %v3118
      %v3122 = vsel %vm1269, %v3114, %v3108
      %v3123 = vsel %vm1269, %v3116, %v3110
      %v3124 = vsel %vm1269, %v3118, %v3112
      %3125 = vset.pattern.permute.xlu0 8
      %3126 = vperm.xlu0 %3125, %v2735
      %v3127 = vpop.permute.xlu0 %3126
      %3129 = vset.pattern.permute.xlu0 8
      %3130 = vperm.xlu0 %3129, %v2736
      %v3131 = vpop.permute.xlu0 %3130
      %3133 = vset.pattern.permute.xlu0 8
      %3134 = vperm.xlu0 %3133, %v2737
      %v3135 = vpop.permute.xlu0 %3134
      %v3137 = vmul.f32 %v3122, %v3127
      %v3138 = vmul.f32 %v3119, %v3127
      %v3139 = vmul.f32 %v3123, %v3131
      %v3140 = vmul.f32 %v3120, %v3131
      %v3141 = vmul.f32 %v3124, %v3135
      %v3142 = vmul.f32 %v3121, %v3135
      %v3143 = vmul.f32 %v3137, %v1292
      %v3144 = vmul.f32 %v3138, %v1296
      %v3145 = vmul.f32 %v3139, %v1292
      %v3146 = vmul.f32 %v3140, %v1296
      %v3147 = vmul.f32 %v3141, %v1292
      %v3148 = vmul.f32 %v3142, %v1296
      %v3149 = vadd.f32 %v3101, %v3143
      %v3150 = vadd.f32 %v3102, %v3144
      %v3151 = vadd.f32 %v3103, %v3145
      %v3152 = vadd.f32 %v3104, %v3146
      %v3153 = vadd.f32 %v3105, %v3147
      %v3154 = vadd.f32 %v3106, %v3148
      %3155 = vrot.lane.b32.xlu0 %v2717, 73
      %v3156 = vpop.permute.xlu0 %3155
      %3157 = vrot.lane.b32.xlu0 %v2719, 73
      %v3158 = vpop.permute.xlu0 %3157
      %3159 = vrot.lane.b32.xlu0 %v2721, 73
      %v3160 = vpop.permute.xlu0 %3159
      %3161 = vrot.lane.b32.xlu0 %v2718, 73
      %v3162 = vpop.permute.xlu0 %3161
      %3163 = vrot.lane.b32.xlu0 %v2720, 73
      %v3164 = vpop.permute.xlu0 %3163
      %3165 = vrot.lane.b32.xlu0 %v2722, 73
      %v3166 = vpop.permute.xlu0 %3165
      %v3167 = vsel %vm1315, %v3156, %v3162
      %v3168 = vsel %vm1315, %v3158, %v3164
      %v3169 = vsel %vm1315, %v3160, %v3166
      %v3170 = vsel %vm1315, %v3162, %v3156
      %v3171 = vsel %vm1315, %v3164, %v3158
      %v3172 = vsel %vm1315, %v3166, %v3160
      %3173 = vset.pattern.permute.xlu0 9
      %3174 = vperm.xlu0 %3173, %v2735
      %v3175 = vpop.permute.xlu0 %3174
      %3177 = vset.pattern.permute.xlu0 9
      %3178 = vperm.xlu0 %3177, %v2736
      %v3179 = vpop.permute.xlu0 %3178
      %3181 = vset.pattern.permute.xlu0 9
      %3182 = vperm.xlu0 %3181, %v2737
      %v3183 = vpop.permute.xlu0 %3182
      %v3185 = vmul.f32 %v3170, %v3175
      %v3186 = vmul.f32 %v3167, %v3175
      %v3187 = vmul.f32 %v3171, %v3179
      %v3188 = vmul.f32 %v3168, %v3179
      %v3189 = vmul.f32 %v3172, %v3183
      %v3190 = vmul.f32 %v3169, %v3183
      %v3191 = vmul.f32 %v3185, %v1338
      %v3192 = vmul.f32 %v3186, %v1342
      %v3193 = vmul.f32 %v3187, %v1338
      %v3194 = vmul.f32 %v3188, %v1342
      %v3195 = vmul.f32 %v3189, %v1338
      %v3196 = vmul.f32 %v3190, %v1342
      %v3197 = vadd.f32 %v3149, %v3191
      %v3198 = vadd.f32 %v3150, %v3192
      %v3199 = vadd.f32 %v3151, %v3193
      %v3200 = vadd.f32 %v3152, %v3194
      %v3201 = vadd.f32 %v3153, %v3195
      %v3202 = vadd.f32 %v3154, %v3196
      %3203 = vrot.lane.b32.xlu0 %v2717, 72
      %v3204 = vpop.permute.xlu0 %3203
      %3205 = vrot.lane.b32.xlu0 %v2719, 72
      %v3206 = vpop.permute.xlu0 %3205
      %3207 = vrot.lane.b32.xlu0 %v2721, 72
      %v3208 = vpop.permute.xlu0 %3207
      %3209 = vrot.lane.b32.xlu0 %v2718, 72
      %v3210 = vpop.permute.xlu0 %3209
      %3211 = vrot.lane.b32.xlu0 %v2720, 72
      %v3212 = vpop.permute.xlu0 %3211
      %3213 = vrot.lane.b32.xlu0 %v2722, 72
      %v3214 = vpop.permute.xlu0 %3213
      %v3215 = vsel %vm1361, %v3204, %v3210
      %v3216 = vsel %vm1361, %v3206, %v3212
      %v3217 = vsel %vm1361, %v3208, %v3214
      %v3218 = vsel %vm1361, %v3210, %v3204
      %v3219 = vsel %vm1361, %v3212, %v3206
      %v3220 = vsel %vm1361, %v3214, %v3208
      %3221 = vset.pattern.permute.xlu0 10
      %3222 = vperm.xlu0 %3221, %v2735
      %v3223 = vpop.permute.xlu0 %3222
      %3225 = vset.pattern.permute.xlu0 10
      %3226 = vperm.xlu0 %3225, %v2736
      %v3227 = vpop.permute.xlu0 %3226
      %3229 = vset.pattern.permute.xlu0 10
      %3230 = vperm.xlu0 %3229, %v2737
      %v3231 = vpop.permute.xlu0 %3230
      %v3233 = vmul.f32 %v3218, %v3223
      %v3234 = vmul.f32 %v3215, %v3223
      %v3235 = vmul.f32 %v3219, %v3227
      %v3236 = vmul.f32 %v3216, %v3227
      %v3237 = vmul.f32 %v3220, %v3231
      %v3238 = vmul.f32 %v3217, %v3231
      %v3239 = vmul.f32 %v3233, %v1384
      %v3240 = vmul.f32 %v3234, %v1388
      %v3241 = vmul.f32 %v3235, %v1384
      %v3242 = vmul.f32 %v3236, %v1388
      %v3243 = vmul.f32 %v3237, %v1384
      %v3244 = vmul.f32 %v3238, %v1388
      %v3245 = vadd.f32 %v3197, %v3239
      %v3246 = vadd.f32 %v3198, %v3240
      %v3247 = vadd.f32 %v3199, %v3241
      %v3248 = vadd.f32 %v3200, %v3242
      %v3249 = vadd.f32 %v3201, %v3243
      %v3250 = vadd.f32 %v3202, %v3244
      %3251 = vrot.lane.b32.xlu0 %v2717, 71
      %v3252 = vpop.permute.xlu0 %3251
      %3253 = vrot.lane.b32.xlu0 %v2719, 71
      %v3254 = vpop.permute.xlu0 %3253
      %3255 = vrot.lane.b32.xlu0 %v2721, 71
      %v3256 = vpop.permute.xlu0 %3255
      %3257 = vrot.lane.b32.xlu0 %v2718, 71
      %v3258 = vpop.permute.xlu0 %3257
      %3259 = vrot.lane.b32.xlu0 %v2720, 71
      %v3260 = vpop.permute.xlu0 %3259
      %3261 = vrot.lane.b32.xlu0 %v2722, 71
      %v3262 = vpop.permute.xlu0 %3261
      %v3263 = vsel %vm1407, %v3252, %v3258
      %v3264 = vsel %vm1407, %v3254, %v3260
      %v3265 = vsel %vm1407, %v3256, %v3262
      %v3266 = vsel %vm1407, %v3258, %v3252
      %v3267 = vsel %vm1407, %v3260, %v3254
      %v3268 = vsel %vm1407, %v3262, %v3256
      %3269 = vset.pattern.permute.xlu0 11
      %3270 = vperm.xlu0 %3269, %v2735
      %v3271 = vpop.permute.xlu0 %3270
      %3273 = vset.pattern.permute.xlu0 11
      %3274 = vperm.xlu0 %3273, %v2736
      %v3275 = vpop.permute.xlu0 %3274
      %3277 = vset.pattern.permute.xlu0 11
      %3278 = vperm.xlu0 %3277, %v2737
      %v3279 = vpop.permute.xlu0 %3278
      %v3281 = vmul.f32 %v3266, %v3271
      %v3282 = vmul.f32 %v3263, %v3271
      %v3283 = vmul.f32 %v3267, %v3275
      %v3284 = vmul.f32 %v3264, %v3275
      %v3285 = vmul.f32 %v3268, %v3279
      %v3286 = vmul.f32 %v3265, %v3279
      %v3287 = vmul.f32 %v3281, %v1430
      %v3288 = vmul.f32 %v3282, %v1434
      %v3289 = vmul.f32 %v3283, %v1430
      %v3290 = vmul.f32 %v3284, %v1434
      %v3291 = vmul.f32 %v3285, %v1430
      %v3292 = vmul.f32 %v3286, %v1434
      %v3293 = vadd.f32 %v3245, %v3287
      %v3294 = vadd.f32 %v3246, %v3288
      %v3295 = vadd.f32 %v3247, %v3289
      %v3296 = vadd.f32 %v3248, %v3290
      %v3297 = vadd.f32 %v3249, %v3291
      %v3298 = vadd.f32 %v3250, %v3292
      %3299 = vrot.lane.b32.xlu0 %v2717, 65
      %v3300 = vpop.permute.xlu0 %3299
      %3301 = vrot.lane.b32.xlu0 %v2719, 65
      %v3302 = vpop.permute.xlu0 %3301
      %3303 = vrot.lane.b32.xlu0 %v2721, 65
      %v3304 = vpop.permute.xlu0 %3303
      %3305 = vrot.lane.b32.xlu0 %v2718, 65
      %v3306 = vpop.permute.xlu0 %3305
      %3307 = vrot.lane.b32.xlu0 %v2720, 65
      %v3308 = vpop.permute.xlu0 %3307
      %3309 = vrot.lane.b32.xlu0 %v2722, 65
      %v3310 = vpop.permute.xlu0 %3309
      %v3311 = vsel %vm1453, %v3300, %v3306
      %v3312 = vsel %vm1453, %v3302, %v3308
      %v3313 = vsel %vm1453, %v3304, %v3310
      %v3314 = vsel %vm1453, %v3306, %v3300
      %v3315 = vsel %vm1453, %v3308, %v3302
      %v3316 = vsel %vm1453, %v3310, %v3304
      %3317 = vset.pattern.permute.xlu0 12
      %3318 = vperm.xlu0 %3317, %v2735
      %v3319 = vpop.permute.xlu0 %3318
      %3321 = vset.pattern.permute.xlu0 12
      %3322 = vperm.xlu0 %3321, %v2736
      %v3323 = vpop.permute.xlu0 %3322
      %3325 = vset.pattern.permute.xlu0 12
      %3326 = vperm.xlu0 %3325, %v2737
      %v3327 = vpop.permute.xlu0 %3326
      %v3329 = vmul.f32 %v3314, %v3319
      %v3330 = vmul.f32 %v3311, %v3319
      %v3331 = vmul.f32 %v3315, %v3323
      %v3332 = vmul.f32 %v3312, %v3323
      %v3333 = vmul.f32 %v3316, %v3327
      %v3334 = vmul.f32 %v3313, %v3327
      %v3335 = vmul.f32 %v3329, %v1476
      %v3336 = vmul.f32 %v3330, %v1480
      %v3337 = vmul.f32 %v3331, %v1476
      %v3338 = vmul.f32 %v3332, %v1480
      %v3339 = vmul.f32 %v3333, %v1476
      %v3340 = vmul.f32 %v3334, %v1480
      %v3341 = vadd.f32 %v3293, %v3335
      %v3342 = vadd.f32 %v3294, %v3336
      %v3343 = vadd.f32 %v3295, %v3337
      %v3344 = vadd.f32 %v3296, %v3338
      %v3345 = vadd.f32 %v3297, %v3339
      %v3346 = vadd.f32 %v3298, %v3340
      %3347 = vrot.lane.b32.xlu0 %v2717, 64
      %v3348 = vpop.permute.xlu0 %3347
      %3349 = vrot.lane.b32.xlu0 %v2719, 64
      %v3350 = vpop.permute.xlu0 %3349
      %3351 = vrot.lane.b32.xlu0 %v2721, 64
      %v3352 = vpop.permute.xlu0 %3351
      %3353 = vrot.lane.b32.xlu0 %v2718, 64
      %v3354 = vpop.permute.xlu0 %3353
      %3355 = vrot.lane.b32.xlu0 %v2720, 64
      %v3356 = vpop.permute.xlu0 %3355
      %3357 = vrot.lane.b32.xlu0 %v2722, 64
      %v3358 = vpop.permute.xlu0 %3357
      %v3359 = vsel %vm1499, %v3348, %v3354
      %v3360 = vsel %vm1499, %v3350, %v3356
      %v3361 = vsel %vm1499, %v3352, %v3358
      %v3362 = vsel %vm1499, %v3354, %v3348
      %v3363 = vsel %vm1499, %v3356, %v3350
      %v3364 = vsel %vm1499, %v3358, %v3352
      %3365 = vset.pattern.permute.xlu0 13
      %3366 = vperm.xlu0 %3365, %v2735
      %v3367 = vpop.permute.xlu0 %3366
      %3369 = vset.pattern.permute.xlu0 13
      %3370 = vperm.xlu0 %3369, %v2736
      %v3371 = vpop.permute.xlu0 %3370
      %3373 = vset.pattern.permute.xlu0 13
      %3374 = vperm.xlu0 %3373, %v2737
      %v3375 = vpop.permute.xlu0 %3374
      %v3377 = vmul.f32 %v3362, %v3367
      %v3378 = vmul.f32 %v3359, %v3367
      %v3379 = vmul.f32 %v3363, %v3371
      %v3380 = vmul.f32 %v3360, %v3371
      %v3381 = vmul.f32 %v3364, %v3375
      %v3382 = vmul.f32 %v3361, %v3375
      %v3383 = vmul.f32 %v3377, %v1522
      %v3384 = vmul.f32 %v3378, %v1526
      %v3385 = vmul.f32 %v3379, %v1522
      %v3386 = vmul.f32 %v3380, %v1526
      %v3387 = vmul.f32 %v3381, %v1522
      %v3388 = vmul.f32 %v3382, %v1526
      %v3389 = vadd.f32 %v3341, %v3383
      %v3390 = vadd.f32 %v3342, %v3384
      %v3391 = vadd.f32 %v3343, %v3385
      %v3392 = vadd.f32 %v3344, %v3386
      %v3393 = vadd.f32 %v3345, %v3387
      %v3394 = vadd.f32 %v3346, %v3388
      %3395 = vrot.lane.b32.xlu0 %v2717, 63
      %v3396 = vpop.permute.xlu0 %3395
      %3397 = vrot.lane.b32.xlu0 %v2719, 63
      %v3398 = vpop.permute.xlu0 %3397
      %3399 = vrot.lane.b32.xlu0 %v2721, 63
      %v3400 = vpop.permute.xlu0 %3399
      %3401 = vrot.lane.b32.xlu0 %v2718, 63
      %v3402 = vpop.permute.xlu0 %3401
      %3403 = vrot.lane.b32.xlu0 %v2720, 63
      %v3404 = vpop.permute.xlu0 %3403
      %3405 = vrot.lane.b32.xlu0 %v2722, 63
      %v3406 = vpop.permute.xlu0 %3405
      %v3407 = vsel %vm1545, %v3396, %v3402
      %v3408 = vsel %vm1545, %v3398, %v3404
      %v3409 = vsel %vm1545, %v3400, %v3406
      %v3410 = vsel %vm1545, %v3402, %v3396
      %v3411 = vsel %vm1545, %v3404, %v3398
      %v3412 = vsel %vm1545, %v3406, %v3400
      %3413 = vset.pattern.permute.xlu0 14
      %3414 = vperm.xlu0 %3413, %v2735
      %v3415 = vpop.permute.xlu0 %3414
      %3417 = vset.pattern.permute.xlu0 14
      %3418 = vperm.xlu0 %3417, %v2736
      %v3419 = vpop.permute.xlu0 %3418
      %3421 = vset.pattern.permute.xlu0 14
      %3422 = vperm.xlu0 %3421, %v2737
      %v3423 = vpop.permute.xlu0 %3422
      %v3425 = vmul.f32 %v3410, %v3415
      %v3426 = vmul.f32 %v3407, %v3415
      %v3427 = vmul.f32 %v3411, %v3419
      %v3428 = vmul.f32 %v3408, %v3419
      %v3429 = vmul.f32 %v3412, %v3423
      %v3430 = vmul.f32 %v3409, %v3423
      %v3431 = vmul.f32 %v3425, %v1568
      %v3432 = vmul.f32 %v3426, %v1572
      %v3433 = vmul.f32 %v3427, %v1568
      %v3434 = vmul.f32 %v3428, %v1572
      %v3435 = vmul.f32 %v3429, %v1568
      %v3436 = vmul.f32 %v3430, %v1572
      %v3437 = vadd.f32 %v3389, %v3431
      %v3438 = vadd.f32 %v3390, %v3432
      %v3439 = vadd.f32 %v3391, %v3433
      %v3440 = vadd.f32 %v3392, %v3434
      %v3441 = vadd.f32 %v3393, %v3435
      %v3442 = vadd.f32 %v3394, %v3436
      %3443 = vrot.lane.b32.xlu0 %v2717, 57
      %v3444 = vpop.permute.xlu0 %3443
      %3445 = vrot.lane.b32.xlu0 %v2719, 57
      %v3446 = vpop.permute.xlu0 %3445
      %3447 = vrot.lane.b32.xlu0 %v2721, 57
      %v3448 = vpop.permute.xlu0 %3447
      %3449 = vrot.lane.b32.xlu0 %v2718, 57
      %v3450 = vpop.permute.xlu0 %3449
      %3451 = vrot.lane.b32.xlu0 %v2720, 57
      %v3452 = vpop.permute.xlu0 %3451
      %3453 = vrot.lane.b32.xlu0 %v2722, 57
      %v3454 = vpop.permute.xlu0 %3453
      %v3455 = vsel %vm1591, %v3444, %v3450
      %v3456 = vsel %vm1591, %v3446, %v3452
      %v3457 = vsel %vm1591, %v3448, %v3454
      %v3458 = vsel %vm1591, %v3450, %v3444
      %v3459 = vsel %vm1591, %v3452, %v3446
      %v3460 = vsel %vm1591, %v3454, %v3448
      %3461 = vset.pattern.permute.xlu0 15
      %3462 = vperm.xlu0 %3461, %v2735
      %v3463 = vpop.permute.xlu0 %3462
      %3465 = vset.pattern.permute.xlu0 15
      %3466 = vperm.xlu0 %3465, %v2736
      %v3467 = vpop.permute.xlu0 %3466
      %3469 = vset.pattern.permute.xlu0 15
      %3470 = vperm.xlu0 %3469, %v2737
      %v3471 = vpop.permute.xlu0 %3470
      %v3473 = vmul.f32 %v3458, %v3463
      %v3474 = vmul.f32 %v3455, %v3463
      %v3475 = vmul.f32 %v3459, %v3467
      %v3476 = vmul.f32 %v3456, %v3467
      %v3477 = vmul.f32 %v3460, %v3471
      %v3478 = vmul.f32 %v3457, %v3471
      %v3479 = vmul.f32 %v3473, %v1614
      %v3480 = vmul.f32 %v3474, %v1618
      %v3481 = vmul.f32 %v3475, %v1614
      %v3482 = vmul.f32 %v3476, %v1618
      %v3483 = vmul.f32 %v3477, %v1614
      %v3484 = vmul.f32 %v3478, %v1618
      %v3485 = vadd.f32 %v3437, %v3479
      %v3486 = vadd.f32 %v3438, %v3480
      %v3487 = vadd.f32 %v3439, %v3481
      %v3488 = vadd.f32 %v3440, %v3482
      %v3489 = vadd.f32 %v3441, %v3483
      %v3490 = vadd.f32 %v3442, %v3484
      %3491 = vrot.lane.b32.xlu0 %v2717, 56
      %v3492 = vpop.permute.xlu0 %3491
      %3493 = vrot.lane.b32.xlu0 %v2719, 56
      %v3494 = vpop.permute.xlu0 %3493
      %3495 = vrot.lane.b32.xlu0 %v2721, 56
      %v3496 = vpop.permute.xlu0 %3495
      %3497 = vrot.lane.b32.xlu0 %v2718, 56
      %v3498 = vpop.permute.xlu0 %3497
      %3499 = vrot.lane.b32.xlu0 %v2720, 56
      %v3500 = vpop.permute.xlu0 %3499
      %3501 = vrot.lane.b32.xlu0 %v2722, 56
      %v3502 = vpop.permute.xlu0 %3501
      %v3503 = vsel %vm1637, %v3492, %v3498
      %v3504 = vsel %vm1637, %v3494, %v3500
      %v3505 = vsel %vm1637, %v3496, %v3502
      %v3506 = vsel %vm1637, %v3498, %v3492
      %v3507 = vsel %vm1637, %v3500, %v3494
      %v3508 = vsel %vm1637, %v3502, %v3496
      %3509 = vset.pattern.permute.xlu0 16
      %3510 = vperm.xlu0 %3509, %v2735
      %v3511 = vpop.permute.xlu0 %3510
      %3513 = vset.pattern.permute.xlu0 16
      %3514 = vperm.xlu0 %3513, %v2736
      %v3515 = vpop.permute.xlu0 %3514
      %3517 = vset.pattern.permute.xlu0 16
      %3518 = vperm.xlu0 %3517, %v2737
      %v3519 = vpop.permute.xlu0 %3518
      %v3521 = vmul.f32 %v3506, %v3511
      %v3522 = vmul.f32 %v3503, %v3511
      %v3523 = vmul.f32 %v3507, %v3515
      %v3524 = vmul.f32 %v3504, %v3515
      %v3525 = vmul.f32 %v3508, %v3519
      %v3526 = vmul.f32 %v3505, %v3519
      %v3527 = vmul.f32 %v3521, %v1660
      %v3528 = vmul.f32 %v3522, %v1664
      %v3529 = vmul.f32 %v3523, %v1660
      %v3530 = vmul.f32 %v3524, %v1664
      %v3531 = vmul.f32 %v3525, %v1660
      %v3532 = vmul.f32 %v3526, %v1664
      %v3533 = vadd.f32 %v3485, %v3527
      %v3534 = vadd.f32 %v3486, %v3528
      %v3535 = vadd.f32 %v3487, %v3529
      %v3536 = vadd.f32 %v3488, %v3530
      %v3537 = vadd.f32 %v3489, %v3531
      %v3538 = vadd.f32 %v3490, %v3532
      %3539 = vrot.lane.b32.xlu0 %v2717, 55
      %v3540 = vpop.permute.xlu0 %3539
      %3541 = vrot.lane.b32.xlu0 %v2719, 55
      %v3542 = vpop.permute.xlu0 %3541
      %3543 = vrot.lane.b32.xlu0 %v2721, 55
      %v3544 = vpop.permute.xlu0 %3543
      %3545 = vrot.lane.b32.xlu0 %v2718, 55
      %v3546 = vpop.permute.xlu0 %3545
      %3547 = vrot.lane.b32.xlu0 %v2720, 55
      %v3548 = vpop.permute.xlu0 %3547
      %3549 = vrot.lane.b32.xlu0 %v2722, 55
      %v3550 = vpop.permute.xlu0 %3549
      %v3551 = vsel %vm1683, %v3540, %v3546
      %v3552 = vsel %vm1683, %v3542, %v3548
      %v3553 = vsel %vm1683, %v3544, %v3550
      %v3554 = vsel %vm1683, %v3546, %v3540
      %v3555 = vsel %vm1683, %v3548, %v3542
      %v3556 = vsel %vm1683, %v3550, %v3544
      %3557 = vset.pattern.permute.xlu0 17
      %3558 = vperm.xlu0 %3557, %v2735
      %v3559 = vpop.permute.xlu0 %3558
      %3561 = vset.pattern.permute.xlu0 17
      %3562 = vperm.xlu0 %3561, %v2736
      %v3563 = vpop.permute.xlu0 %3562
      %3565 = vset.pattern.permute.xlu0 17
      %3566 = vperm.xlu0 %3565, %v2737
      %v3567 = vpop.permute.xlu0 %3566
      %v3569 = vmul.f32 %v3554, %v3559
      %v3570 = vmul.f32 %v3551, %v3559
      %v3571 = vmul.f32 %v3555, %v3563
      %v3572 = vmul.f32 %v3552, %v3563
      %v3573 = vmul.f32 %v3556, %v3567
      %v3574 = vmul.f32 %v3553, %v3567
      %v3575 = vmul.f32 %v3569, %v1706
      %v3576 = vmul.f32 %v3570, %v1710
      %v3577 = vmul.f32 %v3571, %v1706
      %v3578 = vmul.f32 %v3572, %v1710
      %v3579 = vmul.f32 %v3573, %v1706
      %v3580 = vmul.f32 %v3574, %v1710
      %v3581 = vadd.f32 %v3533, %v3575
      %v3582 = vadd.f32 %v3534, %v3576
      %v3583 = vadd.f32 %v3535, %v3577
      %v3584 = vadd.f32 %v3536, %v3578
      %v3585 = vadd.f32 %v3537, %v3579
      %v3586 = vadd.f32 %v3538, %v3580
      %3587 = vset.pattern.permute.xlu0 18
      %3588 = vperm.xlu0 %3587, %v2735
      %v3589 = vpop.permute.xlu0 %3588
      %3591 = vset.pattern.permute.xlu0 18
      %3592 = vperm.xlu0 %3591, %v2736
      %v3593 = vpop.permute.xlu0 %3592
      %3595 = vset.pattern.permute.xlu0 18
      %3596 = vperm.xlu0 %3595, %v2737
      %v3597 = vpop.permute.xlu0 %3596
      %v3599 = vmul.f32 %v2753, %v3589
      %v3600 = vmul.f32 %v2750, %v3589
      %v3601 = vmul.f32 %v2754, %v3593
      %v3602 = vmul.f32 %v2751, %v3593
      %v3603 = vmul.f32 %v2755, %v3597
      %v3604 = vmul.f32 %v2752, %v3597
      %v3605 = vmul.f32 %v3599, %v1739
      %v3606 = vmul.f32 %v3600, %v1743
      %v3607 = vmul.f32 %v3601, %v1739
      %v3608 = vmul.f32 %v3602, %v1743
      %v3609 = vmul.f32 %v3603, %v1739
      %v3610 = vmul.f32 %v3604, %v1743
      %v3611 = vadd.f32 %v3581, %v3605
      %v3612 = vadd.f32 %v3582, %v3606
      %v3613 = vadd.f32 %v3583, %v3607
      %v3614 = vadd.f32 %v3584, %v3608
      %v3615 = vadd.f32 %v3585, %v3609
      %v3616 = vadd.f32 %v3586, %v3610
      %3617 = vset.pattern.permute.xlu0 19
      %3618 = vperm.xlu0 %3617, %v2735
      %v3619 = vpop.permute.xlu0 %3618
      %3621 = vset.pattern.permute.xlu0 19
      %3622 = vperm.xlu0 %3621, %v2736
      %v3623 = vpop.permute.xlu0 %3622
      %3625 = vset.pattern.permute.xlu0 19
      %3626 = vperm.xlu0 %3625, %v2737
      %v3627 = vpop.permute.xlu0 %3626
      %v3629 = vmul.f32 %v2804, %v3619
      %v3630 = vmul.f32 %v2801, %v3619
      %v3631 = vmul.f32 %v2805, %v3623
      %v3632 = vmul.f32 %v2802, %v3623
      %v3633 = vmul.f32 %v2806, %v3627
      %v3634 = vmul.f32 %v2803, %v3627
      %v3635 = vmul.f32 %v3629, %v1772
      %v3636 = vmul.f32 %v3630, %v1776
      %v3637 = vmul.f32 %v3631, %v1772
      %v3638 = vmul.f32 %v3632, %v1776
      %v3639 = vmul.f32 %v3633, %v1772
      %v3640 = vmul.f32 %v3634, %v1776
      %v3641 = vadd.f32 %v3611, %v3635
      %v3642 = vadd.f32 %v3612, %v3636
      %v3643 = vadd.f32 %v3613, %v3637
      %v3644 = vadd.f32 %v3614, %v3638
      %v3645 = vadd.f32 %v3615, %v3639
      %v3646 = vadd.f32 %v3616, %v3640
      %3647 = vset.pattern.permute.xlu0 20
      %3648 = vperm.xlu0 %3647, %v2735
      %v3649 = vpop.permute.xlu0 %3648
      %3651 = vset.pattern.permute.xlu0 20
      %3652 = vperm.xlu0 %3651, %v2736
      %v3653 = vpop.permute.xlu0 %3652
      %3655 = vset.pattern.permute.xlu0 20
      %3656 = vperm.xlu0 %3655, %v2737
      %v3657 = vpop.permute.xlu0 %3656
      %v3659 = vmul.f32 %v2852, %v3649
      %v3660 = vmul.f32 %v2849, %v3649
      %v3661 = vmul.f32 %v2853, %v3653
      %v3662 = vmul.f32 %v2850, %v3653
      %v3663 = vmul.f32 %v2854, %v3657
      %v3664 = vmul.f32 %v2851, %v3657
      %v3665 = vmul.f32 %v3659, %v1805
      %v3666 = vmul.f32 %v3660, %v1809
      %v3667 = vmul.f32 %v3661, %v1805
      %v3668 = vmul.f32 %v3662, %v1809
      %v3669 = vmul.f32 %v3663, %v1805
      %v3670 = vmul.f32 %v3664, %v1809
      %v3671 = vadd.f32 %v3641, %v3665
      %v3672 = vadd.f32 %v3642, %v3666
      %v3673 = vadd.f32 %v3643, %v3667
      %v3674 = vadd.f32 %v3644, %v3668
      %v3675 = vadd.f32 %v3645, %v3669
      %v3676 = vadd.f32 %v3646, %v3670
      %3677 = vset.pattern.permute.xlu0 21
      %3678 = vperm.xlu0 %3677, %v2735
      %v3679 = vpop.permute.xlu0 %3678
      %3681 = vset.pattern.permute.xlu0 21
      %3682 = vperm.xlu0 %3681, %v2736
      %v3683 = vpop.permute.xlu0 %3682
      %3685 = vset.pattern.permute.xlu0 21
      %3686 = vperm.xlu0 %3685, %v2737
      %v3687 = vpop.permute.xlu0 %3686
      %v3689 = vmul.f32 %v2900, %v3679
      %v3690 = vmul.f32 %v2897, %v3679
      %v3691 = vmul.f32 %v2901, %v3683
      %v3692 = vmul.f32 %v2898, %v3683
      %v3693 = vmul.f32 %v2902, %v3687
      %v3694 = vmul.f32 %v2899, %v3687
      %v3695 = vmul.f32 %v3689, %v1838
      %v3696 = vmul.f32 %v3690, %v1842
      %v3697 = vmul.f32 %v3691, %v1838
      %v3698 = vmul.f32 %v3692, %v1842
      %v3699 = vmul.f32 %v3693, %v1838
      %v3700 = vmul.f32 %v3694, %v1842
      %v3701 = vadd.f32 %v3671, %v3695
      %v3702 = vadd.f32 %v3672, %v3696
      %v3703 = vadd.f32 %v3673, %v3697
      %v3704 = vadd.f32 %v3674, %v3698
      %v3705 = vadd.f32 %v3675, %v3699
      %v3706 = vadd.f32 %v3676, %v3700
      %3707 = vset.pattern.permute.xlu0 22
      %3708 = vperm.xlu0 %3707, %v2735
      %v3709 = vpop.permute.xlu0 %3708
      %3711 = vset.pattern.permute.xlu0 22
      %3712 = vperm.xlu0 %3711, %v2736
      %v3713 = vpop.permute.xlu0 %3712
      %3715 = vset.pattern.permute.xlu0 22
      %3716 = vperm.xlu0 %3715, %v2737
      %v3717 = vpop.permute.xlu0 %3716
      %v3719 = vmul.f32 %v2717, %v3709
      %v3720 = vmul.f32 %v2718, %v3709
      %v3721 = vmul.f32 %v2719, %v3713
      %v3722 = vmul.f32 %v2720, %v3713
      %v3723 = vmul.f32 %v2721, %v3717
      %v3724 = vmul.f32 %v2722, %v3717
      %v3725 = vmul.f32 %v3719, %v1871
      %v3726 = vmul.f32 %v3720, %v1875
      %v3727 = vmul.f32 %v3721, %v1871
      %v3728 = vmul.f32 %v3722, %v1875
      %v3729 = vmul.f32 %v3723, %v1871
      %v3730 = vmul.f32 %v3724, %v1875
      %v3731 = vadd.f32 %v3701, %v3725
      %v3732 = vadd.f32 %v3702, %v3726
      %v3733 = vadd.f32 %v3703, %v3727
      %v3734 = vadd.f32 %v3704, %v3728
      %v3735 = vadd.f32 %v3705, %v3729
      %v3736 = vadd.f32 %v3706, %v3730
      %3737 = vset.pattern.permute.xlu0 23
      %3738 = vperm.xlu0 %3737, %v2735
      %v3739 = vpop.permute.xlu0 %3738
      %3741 = vset.pattern.permute.xlu0 23
      %3742 = vperm.xlu0 %3741, %v2736
      %v3743 = vpop.permute.xlu0 %3742
      %3745 = vset.pattern.permute.xlu0 23
      %3746 = vperm.xlu0 %3745, %v2737
      %v3747 = vpop.permute.xlu0 %3746
      %v3749 = vmul.f32 %v2975, %v3739
      %v3750 = vmul.f32 %v2978, %v3739
      %v3751 = vmul.f32 %v2976, %v3743
      %v3752 = vmul.f32 %v2979, %v3743
      %v3753 = vmul.f32 %v2977, %v3747
      %v3754 = vmul.f32 %v2980, %v3747
      %v3755 = vmul.f32 %v3749, %v1904
      %v3756 = vmul.f32 %v3750, %v1908
      %v3757 = vmul.f32 %v3751, %v1904
      %v3758 = vmul.f32 %v3752, %v1908
      %v3759 = vmul.f32 %v3753, %v1904
      %v3760 = vmul.f32 %v3754, %v1908
      %v3761 = vadd.f32 %v3731, %v3755
      %v3762 = vadd.f32 %v3732, %v3756
      %v3763 = vadd.f32 %v3733, %v3757
      %v3764 = vadd.f32 %v3734, %v3758
      %v3765 = vadd.f32 %v3735, %v3759
      %v3766 = vadd.f32 %v3736, %v3760
      %3767 = vset.pattern.permute.xlu0 24
      %3768 = vperm.xlu0 %3767, %v2735
      %v3769 = vpop.permute.xlu0 %3768
      %3771 = vset.pattern.permute.xlu0 24
      %3772 = vperm.xlu0 %3771, %v2736
      %v3773 = vpop.permute.xlu0 %3772
      %3775 = vset.pattern.permute.xlu0 24
      %3776 = vperm.xlu0 %3775, %v2737
      %v3777 = vpop.permute.xlu0 %3776
      %v3779 = vmul.f32 %v3023, %v3769
      %v3780 = vmul.f32 %v3026, %v3769
      %v3781 = vmul.f32 %v3024, %v3773
      %v3782 = vmul.f32 %v3027, %v3773
      %v3783 = vmul.f32 %v3025, %v3777
      %v3784 = vmul.f32 %v3028, %v3777
      %v3785 = vmul.f32 %v3779, %v1937
      %v3786 = vmul.f32 %v3780, %v1941
      %v3787 = vmul.f32 %v3781, %v1937
      %v3788 = vmul.f32 %v3782, %v1941
      %v3789 = vmul.f32 %v3783, %v1937
      %v3790 = vmul.f32 %v3784, %v1941
      %v3791 = vadd.f32 %v3761, %v3785
      %v3792 = vadd.f32 %v3762, %v3786
      %v3793 = vadd.f32 %v3763, %v3787
      %v3794 = vadd.f32 %v3764, %v3788
      %v3795 = vadd.f32 %v3765, %v3789
      %v3796 = vadd.f32 %v3766, %v3790
      %3797 = vset.pattern.permute.xlu0 25
      %3798 = vperm.xlu0 %3797, %v2735
      %v3799 = vpop.permute.xlu0 %3798
      %3801 = vset.pattern.permute.xlu0 25
      %3802 = vperm.xlu0 %3801, %v2736
      %v3803 = vpop.permute.xlu0 %3802
      %3805 = vset.pattern.permute.xlu0 25
      %3806 = vperm.xlu0 %3805, %v2737
      %v3807 = vpop.permute.xlu0 %3806
      %v3809 = vmul.f32 %v3071, %v3799
      %v3810 = vmul.f32 %v3074, %v3799
      %v3811 = vmul.f32 %v3072, %v3803
      %v3812 = vmul.f32 %v3075, %v3803
      %v3813 = vmul.f32 %v3073, %v3807
      %v3814 = vmul.f32 %v3076, %v3807
      %v3815 = vmul.f32 %v3809, %v1970
      %v3816 = vmul.f32 %v3810, %v1974
      %v3817 = vmul.f32 %v3811, %v1970
      %v3818 = vmul.f32 %v3812, %v1974
      %v3819 = vmul.f32 %v3813, %v1970
      %v3820 = vmul.f32 %v3814, %v1974
      %v3821 = vadd.f32 %v3791, %v3815
      %v3822 = vadd.f32 %v3792, %v3816
      %v3823 = vadd.f32 %v3793, %v3817
      %v3824 = vadd.f32 %v3794, %v3818
      %v3825 = vadd.f32 %v3795, %v3819
      %v3826 = vadd.f32 %v3796, %v3820
      %3827 = vset.pattern.permute.xlu0 26
      %3828 = vperm.xlu0 %3827, %v2735
      %v3829 = vpop.permute.xlu0 %3828
      %3831 = vset.pattern.permute.xlu0 26
      %3832 = vperm.xlu0 %3831, %v2736
      %v3833 = vpop.permute.xlu0 %3832
      %3835 = vset.pattern.permute.xlu0 26
      %3836 = vperm.xlu0 %3835, %v2737
      %v3837 = vpop.permute.xlu0 %3836
      %v3839 = vmul.f32 %v3119, %v3829
      %v3840 = vmul.f32 %v3122, %v3829
      %v3841 = vmul.f32 %v3120, %v3833
      %v3842 = vmul.f32 %v3123, %v3833
      %v3843 = vmul.f32 %v3121, %v3837
      %v3844 = vmul.f32 %v3124, %v3837
      %v3845 = vmul.f32 %v3839, %v2003
      %v3846 = vmul.f32 %v3840, %v2007
      %v3847 = vmul.f32 %v3841, %v2003
      %v3848 = vmul.f32 %v3842, %v2007
      %v3849 = vmul.f32 %v3843, %v2003
      %v3850 = vmul.f32 %v3844, %v2007
      %v3851 = vadd.f32 %v3821, %v3845
      %v3852 = vadd.f32 %v3822, %v3846
      %v3853 = vadd.f32 %v3823, %v3847
      %v3854 = vadd.f32 %v3824, %v3848
      %v3855 = vadd.f32 %v3825, %v3849
      %v3856 = vadd.f32 %v3826, %v3850
      %3857 = vset.pattern.permute.xlu0 1
      %3858 = vperm.xlu0 %3857, %v2561
      %v3859 = vpop.permute.xlu0 %3858
      %3861 = vset.pattern.permute.xlu0 1
      %3862 = vperm.xlu0 %3861, %v2562
      %v3863 = vpop.permute.xlu0 %3862
      %3865 = vset.pattern.permute.xlu0 1
      %3866 = vperm.xlu0 %3865, %v2563
      %v3867 = vpop.permute.xlu0 %3866
      %v3869 = vadd.f32 %v3851, %v3859
      %v3870 = vadd.f32 %v3852, %v3859
      %v3871 = vadd.f32 %v3853, %v3863
      %v3872 = vadd.f32 %v3854, %v3863
      %v3873 = vadd.f32 %v3855, %v3867
      %v3874 = vadd.f32 %v3856, %v3867
      %v3875 = vxor.u32 %v3869, 2147483648
      %v3876 = vxor.u32 %v3870, 2147483648
      %v3877 = vxor.u32 %v3871, 2147483648
      %v3878 = vxor.u32 %v3872, 2147483648
      %v3879 = vxor.u32 %v3873, 2147483648
      %v3880 = vxor.u32 %v3874, 2147483648
      %v3881 = vmul.f32 %v3875, 1.442695
      %v3882 = vpow.pop %v3881
      %v3883 = vmul.f32 %v3876, 1.442695
      %v3884 = vpow.pop %v3883
      %v3885 = vmul.f32 %v3877, 1.442695
      %v3886 = vpow.pop %v3885
      %v3887 = vmul.f32 %v3878, 1.442695
      %v3888 = vpow.pop %v3887
      %v3889 = vmul.f32 %v3879, 1.442695
      %v3890 = vpow.pop %v3889
      %v3891 = vmul.f32 %v3880, 1.442695
      %v3892 = vpow.pop %v3891
      %v3893 = vadd.f32 %v3882, 1.0
      %v3894 = vadd.f32 %v3884, 1.0
      %v3895 = vadd.f32 %v3886, 1.0
      %v3896 = vadd.f32 %v3888, 1.0
      %v3897 = vadd.f32 %v3890, 1.0
      %v3898 = vadd.f32 %v3892, 1.0
      %v3899 = vrcp.pop %v3893
      %v3900 = vmul.f32 1.0, %v3899
      %v3901 = vrcp.pop %v3894
      %v3902 = vmul.f32 1.0, %v3901
      %v3903 = vrcp.pop %v3895
      %v3904 = vmul.f32 1.0, %v3903
      %v3905 = vrcp.pop %v3896
      %v3906 = vmul.f32 1.0, %v3905
      %v3907 = vrcp.pop %v3897
      %v3908 = vmul.f32 1.0, %v3907
      %v3909 = vrcp.pop %v3898
      %v3910 = vmul.f32 1.0, %v3909
      %v3911 = vmul.f32 %v3869, %v3900
      %v3912 = vmul.f32 %v3870, %v3902
      %v3913 = vmul.f32 %v3871, %v3904
      %v3914 = vmul.f32 %v3872, %v3906
      %v3915 = vmul.f32 %v3873, %v3908
      %v3916 = vmul.f32 %v3874, %v3910
      %3917 = vmatprep.subr.mxu0 0.0
      %3918 = vmatpush1.msra.mxu0 %v764
      %3919 = vmatprep.subr.mxu0 0.0
      %3920 = vmatpush1.msra.mxu0 %v765
      %3921 = vmatprep.subr.mxu0 0.0
      %3922 = vmatpush1.msra.mxu0 %v766
      %3923 = vmatprep.subr.mxu0 0.0
      %3924 = vmatpush1.msra.mxu0 %v767
      %3925 = vmatprep.subr.mxu0 0.0
      %3926 = vmatpush1.msra.mxu0 %v768
      %3927 = vmatprep.subr.mxu0 0.0
      %3928 = vmatpush1.msra.mxu0 %v769
      %3929 = vmatprep.subr.mxu0 0.0
      %3930 = vmatpush1.msra.mxu0 %v770
      %3931 = vmatprep.subr.mxu0 0.0
      %3932 = vmatpush1.msra.mxu0 %v771
      %3933 = vmatprep.subr.mxu0 0.0
      %3934 = vmatpush1.msra.mxu0 %v772
      %3935 = vmatprep.subr.mxu0 0.0
      %3936 = vmatpush1.msra.mxu0 %v773
      %3937 = vmatprep.subr.mxu0 0.0
      %3938 = vmatpush1.msra.mxu0 %v774
      %3939 = vmatprep.subr.mxu0 0.0
      %3940 = vmatpush1.msra.mxu0 %v775
      %3941 = vmatprep.subr.mxu0 0.0
      %3942 = vmatpush1.msra.mxu0 %v776
      %3943 = vmatprep.subr.mxu0 0.0
      %3944 = vmatpush1.msra.mxu0 %v777
      %3945 = vmatprep.subr.mxu0 0.0
      %3946 = vmatpush1.msra.mxu0 %v778
      %3947 = vmatprep.subr.mxu0 0.0
      %3948 = vmatpush1.msra.mxu0 %v779
      %3949 = vmatprep.subr.mxu0 0.0
      %3950 = vmatpush1.msra.mxu0 %v780
      %3951 = vmatprep.subr.mxu0 0.0
      %3952 = vmatpush1.msra.mxu0 %v781
      %3953 = vmatprep.subr.mxu0 0.0
      %3954 = vmatpush1.msra.mxu0 %v782
      %3955 = vmatprep.subr.mxu0 0.0
      %3956 = vmatpush1.msra.mxu0 %v783
      %3957 = vmatprep.subr.mxu0 0.0
      %3958 = vmatpush1.msra.mxu0 %v784
      %3959 = vmatprep.subr.mxu0 0.0
      %3960 = vmatpush1.msra.mxu0 %v785
      %3961 = vmatprep.subr.mxu0 0.0
      %3962 = vmatpush1.msra.mxu0 %v786
      %3963 = vmatprep.subr.mxu0 0.0
      %3964 = vmatpush1.msra.mxu0 %v787
      %3965 = vmatprep.subr.mxu0 0.0
      %3966 = vmatpush1.msra.mxu0 %v788
      %3967 = vmatprep.subr.mxu0 0.0
      %3968 = vmatpush1.msra.mxu0 %v789
      %3969 = vmatprep.subr.mxu0 0.0
      %3970 = vmatpush1.msra.mxu0 %v790
      %3971 = vmatprep.subr.mxu0 0.0
      %3972 = vmatpush1.msra.mxu0 %v791
      %3973 = vmatprep.subr.mxu0 0.0
      %3974 = vmatpush1.msra.mxu0 %v792
      %3975 = vmatprep.subr.mxu0 0.0
      %3976 = vmatpush1.msra.mxu0 %v793
      %3977 = vmatprep.subr.mxu0 0.0
      %3978 = vmatpush1.msra.mxu0 %v794
      %3979 = vmatprep.subr.mxu0 0.0
      %3980 = vmatpush1.msra.mxu0 %v795
      %3981 = vmatprep.mubr.f32.mxu0 %v3912
      %3982 = vmatmul.mubr.f32.gmra.mrb[0].mxu0 %v3911
      %v3983 = vpop.f32.mrb[0].mxu0
      %v3984 = vadd.f32 0.0, %v3983
      %v3985 = vpop.f32.mrb[0].mxu0
      %3986 = vmatprep.mubr.f32.mxu0 %v3914
      %3987 = vmatmul.mubr.f32.gmra.mrb[0].mxu0 %v3913
      %v3988 = vpop.f32.mrb[0].mxu0
      %v3989 = vadd.f32 0.0, %v3988
      %v3990 = vpop.f32.mrb[0].mxu0
      %3991 = vmatprep.mubr.f32.mxu0 %v3916
      %3992 = vmatmul.mubr.f32.gmra.mrb[0].mxu0 %v3915
      %v3993 = vpop.f32.mrb[0].mxu0
      %v3994 = vadd.f32 0.0, %v3993
      %v3995 = vpop.f32.mrb[0].mxu0
      %3996 = vdwg.mxu0
      %v3998 = vsel %vm2133, %v3984, 0
      %v4001 = vsel %vm2133, %v3989, 0
      %v4004 = vsel %vm2133, %v3994, 0
      %4006 = vmatprep.subr.mxu0 0.0
      %4007 = vmatpush1.msra.mxu0 %v2141
      %4008 = vmatprep.subr.mxu0 0.0
      %4009 = vmatpush1.msra.mxu0 0.0
      %4010 = vmatprep.subr.mxu0 0.0
      %4011 = vmatpush1.msra.mxu0 0.0
      %4012 = vmatprep.subr.mxu0 0.0
      %4013 = vmatpush1.msra.mxu0 0.0
      %4014 = vmatprep.subr.mxu0 0.0
      %4015 = vmatpush1.msra.mxu0 0.0
      %4016 = vmatprep.subr.mxu0 0.0
      %4017 = vmatpush1.msra.mxu0 0.0
      %4018 = vmatprep.subr.mxu0 0.0
      %4019 = vmatpush1.msra.mxu0 0.0
      %4020 = vmatprep.subr.mxu0 0.0
      %4021 = vmatpush1.msra.mxu0 0.0
      %4022 = vmatprep.subr.mxu0 0.0
      %4023 = vmatpush1.msra.mxu0 0.0
      %4024 = vmatprep.subr.mxu0 0.0
      %4025 = vmatpush1.msra.mxu0 0.0
      %4026 = vmatprep.subr.mxu0 0.0
      %4027 = vmatpush1.msra.mxu0 0.0
      %4028 = vmatprep.subr.mxu0 0.0
      %4029 = vmatpush1.msra.mxu0 0.0
      %4030 = vmatprep.subr.mxu0 0.0
      %4031 = vmatpush1.msra.mxu0 0.0
      %4032 = vmatprep.subr.mxu0 0.0
      %4033 = vmatpush1.msra.mxu0 0.0
      %4034 = vmatprep.subr.mxu0 0.0
      %4035 = vmatpush1.msra.mxu0 0.0
      %4036 = vmatprep.subr.mxu0 0.0
      %4037 = vmatpush1.msra.mxu0 0.0
      %4038 = vmatprep.subr.mxu0 0.0
      %4039 = vmatpush1.msra.mxu0 0.0
      %4040 = vmatprep.subr.mxu0 0.0
      %4041 = vmatpush1.msra.mxu0 0.0
      %4042 = vmatprep.subr.mxu0 0.0
      %4043 = vmatpush1.msra.mxu0 0.0
      %4044 = vmatprep.subr.mxu0 0.0
      %4045 = vmatpush1.msra.mxu0 0.0
      %4046 = vmatprep.subr.mxu0 0.0
      %4047 = vmatpush1.msra.mxu0 0.0
      %4048 = vmatprep.subr.mxu0 0.0
      %4049 = vmatpush1.msra.mxu0 0.0
      %4050 = vmatprep.subr.mxu0 0.0
      %4051 = vmatpush1.msra.mxu0 0.0
      %4052 = vmatprep.subr.mxu0 0.0
      %4053 = vmatpush1.msra.mxu0 0.0
      %4054 = vmatprep.subr.mxu0 0.0
      %4055 = vmatpush1.msra.mxu0 0.0
      %4056 = vmatprep.subr.mxu0 0.0
      %4057 = vmatpush1.msra.mxu0 0.0
      %4058 = vmatprep.subr.mxu0 0.0
      %4059 = vmatpush1.msra.mxu0 0.0
      %4060 = vmatprep.subr.mxu0 0.0
      %4061 = vmatpush1.msra.mxu0 0.0
      %4062 = vmatprep.subr.mxu0 0.0
      %4063 = vmatpush1.msra.mxu0 0.0
      %4064 = vmatprep.subr.mxu0 0.0
      %4065 = vmatpush1.msra.mxu0 0.0
      %4066 = vmatprep.subr.mxu0 0.0
      %4067 = vmatpush1.msra.mxu0 0.0
      %4068 = vmatprep.subr.mxu0 0.0
      %4069 = vmatpush1.msra.mxu0 0.0
      %4070 = vmatprep.mubr.f32.mxu0 0.0
      %4071 = vmatmul.mubr.f32.gmra.mrb[0].mxu0 %v3998
      %v4072 = vpop.f32.mrb[0].mxu0
      %v4073 = vadd.f32 0.0, %v4072
      %v4074 = vpop.f32.mrb[0].mxu0
      %4075 = vmatprep.mubr.f32.mxu0 0.0
      %4076 = vmatmul.mubr.f32.gmra.mrb[0].mxu0 %v4001
      %v4077 = vpop.f32.mrb[0].mxu0
      %v4078 = vadd.f32 0.0, %v4077
      %v4079 = vpop.f32.mrb[0].mxu0
      %4080 = vmatprep.mubr.f32.mxu0 0.0
      %4081 = vmatmul.mubr.f32.gmra.mrb[0].mxu0 %v4004
      %v4082 = vpop.f32.mrb[0].mxu0
      %v4083 = vadd.f32 0.0, %v4082
      %v4084 = vpop.f32.mrb[0].mxu0
      %4085 = vdwg.mxu0
      %v4086 = vld [vmem:[%s14] sm:$0xff]
      %v4087 = vld [vmem:[%s14 + $0x8] sm:$0xff]
      %4088 = vset.pattern.permute.xlu0 2
      %4089 = vperm.xlu0 %4088, %v2561
      %v4090 = vpop.permute.xlu0 %4089
      %4092 = vset.pattern.permute.xlu0 2
      %4093 = vperm.xlu0 %4092, %v2562
      %v4094 = vpop.permute.xlu0 %4093
      %vm4096 = vcmask 392192
      %v4098 = vsel %vm4096, %v4086, 0
      %v4101 = vsel %vm4096, %v4087, 0
      %4103 = vmatprep.subr.mxu0 0.0
      %4104 = vmatpush1.msra.mxu0 %v4073
      %4105 = vmatprep.subr.mxu0 0.0
      %4106 = vmatpush1.msra.mxu0 %v4078
      %4107 = vmatprep.subr.mxu0 0.0
      %4108 = vmatpush1.msra.mxu0 %v4083
      %4109 = vmatprep.subr.mxu0 0.0
      %4110 = vmatpush1.msra.mxu0 %v3984
      %4111 = vmatprep.subr.mxu0 0.0
      %4112 = vmatpush1.msra.mxu0 %v3989
      %4113 = vmatprep.subr.mxu0 0.0
      %4114 = vmatpush1.msra.mxu0 %v3994
      %4115 = vmatprep.subr.mxu0 0.0
      %4116 = vmatpush1.msra.mxu0 0.0
      %4117 = vmatprep.subr.mxu0 0.0
      %4118 = vmatpush1.msra.mxu0 0.0
      %4119 = vmatprep.subr.mxu0 0.0
      %4120 = vmatpush1.msra.mxu0 0.0
      %4121 = vmatprep.subr.mxu0 0.0
      %4122 = vmatpush1.msra.mxu0 0.0
      %4123 = vmatprep.subr.mxu0 0.0
      %4124 = vmatpush1.msra.mxu0 0.0
      %4125 = vmatprep.subr.mxu0 0.0
      %4126 = vmatpush1.msra.mxu0 0.0
      %4127 = vmatprep.subr.mxu0 0.0
      %4128 = vmatpush1.msra.mxu0 0.0
      %4129 = vmatprep.subr.mxu0 0.0
      %4130 = vmatpush1.msra.mxu0 0.0
      %4131 = vmatprep.subr.mxu0 0.0
      %4132 = vmatpush1.msra.mxu0 0.0
      %4133 = vmatprep.subr.mxu0 0.0
      %4134 = vmatpush1.msra.mxu0 0.0
      %4135 = vmatprep.subr.mxu0 0.0
      %4136 = vmatpush1.msra.mxu0 0.0
      %4137 = vmatprep.subr.mxu0 0.0
      %4138 = vmatpush1.msra.mxu0 0.0
      %4139 = vmatprep.subr.mxu0 0.0
      %4140 = vmatpush1.msra.mxu0 0.0
      %4141 = vmatprep.subr.mxu0 0.0
      %4142 = vmatpush1.msra.mxu0 0.0
      %4143 = vmatprep.subr.mxu0 0.0
      %4144 = vmatpush1.msra.mxu0 0.0
      %4145 = vmatprep.subr.mxu0 0.0
      %4146 = vmatpush1.msra.mxu0 0.0
      %4147 = vmatprep.subr.mxu0 0.0
      %4148 = vmatpush1.msra.mxu0 0.0
      %4149 = vmatprep.subr.mxu0 0.0
      %4150 = vmatpush1.msra.mxu0 0.0
      %4151 = vmatprep.subr.mxu0 0.0
      %4152 = vmatpush1.msra.mxu0 0.0
      %4153 = vmatprep.subr.mxu0 0.0
      %4154 = vmatpush1.msra.mxu0 0.0
      %4155 = vmatprep.subr.mxu0 0.0
      %4156 = vmatpush1.msra.mxu0 0.0
      %4157 = vmatprep.subr.mxu0 0.0
      %4158 = vmatpush1.msra.mxu0 0.0
      %4159 = vmatprep.subr.mxu0 0.0
      %4160 = vmatpush1.msra.mxu0 0.0
      %4161 = vmatprep.subr.mxu0 0.0
      %4162 = vmatpush1.msra.mxu0 0.0
      %4163 = vmatprep.subr.mxu0 0.0
      %4164 = vmatpush1.msra.mxu0 0.0
      %4165 = vmatprep.subr.mxu0 0.0
      %4166 = vmatpush1.msra.mxu0 0.0
      %4167 = vmatprep.mubr.f32.mxu0 0.0
      %4168 = vmatmul.mubr.f32.gmra.mrb[0].mxu0 %v4098
      %v4169 = vpop.f32.mrb[0].mxu0
      %v4170 = vadd.f32 %v4090, %v4169
      %v4171 = vpop.f32.mrb[0].mxu0
      %4172 = vmatprep.mubr.f32.mxu0 0.0
      %4173 = vmatmul.mubr.f32.gmra.mrb[0].mxu0 %v4101
      %v4174 = vpop.f32.mrb[0].mxu0
      %v4175 = vadd.f32 %v4094, %v4174
      %v4176 = vpop.f32.mrb[0].mxu0
      %4177 = vdwg.mxu0
      %v4178 = vxor.u32 %v4170, 2147483648
      %v4179 = vxor.u32 %v4175, 2147483648
      %v4180 = vmul.f32 %v4178, 1.442695
      %v4181 = vpow.pop %v4180
      %v4182 = vmul.f32 %v4179, 1.442695
      %v4183 = vpow.pop %v4182
      %v4184 = vadd.f32 %v4181, 1.0
      %v4185 = vadd.f32 %v4183, 1.0
      %v4186 = vrcp.pop %v4184
      %v4187 = vmul.f32 1.0, %v4186
      %v4188 = vrcp.pop %v4185
      %v4189 = vmul.f32 1.0, %v4188
      %v4190 = vmul.f32 %v4170, %v4187
      %v4191 = vmul.f32 %v4175, %v4189
      %v4192 = vld [vmem:[%s15] sm:$0xff]
      %v4193 = vld [vmem:[%s15 + $0x8] sm:$0xff]
      %v4194 = vld [vmem:[%s15 + $0x10] sm:$0xff]
      %4195 = vset.pattern.permute.xlu0 3
      %4196 = vperm.xlu0 %4195, %v2561
      %v4197 = vpop.permute.xlu0 %4196
      %4199 = vset.pattern.permute.xlu0 3
      %4200 = vperm.xlu0 %4199, %v2562
      %v4201 = vpop.permute.xlu0 %4200
      %4203 = vset.pattern.permute.xlu0 3
      %4204 = vperm.xlu0 %4203, %v2563
      %v4205 = vpop.permute.xlu0 %4204
      %v4208 = vsel %vm2507, %v4192, 0
      %v4211 = vsel %vm2507, %v4193, 0
      %v4214 = vsel %vm2507, %v4194, 0
      %4216 = vmatprep.subr.mxu0 0.0
      %4217 = vmatpush1.msra.mxu0 %v4190
      %4218 = vmatprep.subr.mxu0 0.0
      %4219 = vmatpush1.msra.mxu0 %v4191
      %4220 = vmatprep.subr.mxu0 0.0
      %4221 = vmatpush1.msra.mxu0 0.0
      %4222 = vmatprep.subr.mxu0 0.0
      %4223 = vmatpush1.msra.mxu0 0.0
      %4224 = vmatprep.subr.mxu0 0.0
      %4225 = vmatpush1.msra.mxu0 0.0
      %4226 = vmatprep.subr.mxu0 0.0
      %4227 = vmatpush1.msra.mxu0 0.0
      %4228 = vmatprep.subr.mxu0 0.0
      %4229 = vmatpush1.msra.mxu0 0.0
      %4230 = vmatprep.subr.mxu0 0.0
      %4231 = vmatpush1.msra.mxu0 0.0
      %4232 = vmatprep.subr.mxu0 0.0
      %4233 = vmatpush1.msra.mxu0 0.0
      %4234 = vmatprep.subr.mxu0 0.0
      %4235 = vmatpush1.msra.mxu0 0.0
      %4236 = vmatprep.subr.mxu0 0.0
      %4237 = vmatpush1.msra.mxu0 0.0
      %4238 = vmatprep.subr.mxu0 0.0
      %4239 = vmatpush1.msra.mxu0 0.0
      %4240 = vmatprep.subr.mxu0 0.0
      %4241 = vmatpush1.msra.mxu0 0.0
      %4242 = vmatprep.subr.mxu0 0.0
      %4243 = vmatpush1.msra.mxu0 0.0
      %4244 = vmatprep.subr.mxu0 0.0
      %4245 = vmatpush1.msra.mxu0 0.0
      %4246 = vmatprep.subr.mxu0 0.0
      %4247 = vmatpush1.msra.mxu0 0.0
      %4248 = vmatprep.subr.mxu0 0.0
      %4249 = vmatpush1.msra.mxu0 0.0
      %4250 = vmatprep.subr.mxu0 0.0
      %4251 = vmatpush1.msra.mxu0 0.0
      %4252 = vmatprep.subr.mxu0 0.0
      %4253 = vmatpush1.msra.mxu0 0.0
      %4254 = vmatprep.subr.mxu0 0.0
      %4255 = vmatpush1.msra.mxu0 0.0
      %4256 = vmatprep.subr.mxu0 0.0
      %4257 = vmatpush1.msra.mxu0 0.0
      %4258 = vmatprep.subr.mxu0 0.0
      %4259 = vmatpush1.msra.mxu0 0.0
      %4260 = vmatprep.subr.mxu0 0.0
      %4261 = vmatpush1.msra.mxu0 0.0
      %4262 = vmatprep.subr.mxu0 0.0
      %4263 = vmatpush1.msra.mxu0 0.0
      %4264 = vmatprep.subr.mxu0 0.0
      %4265 = vmatpush1.msra.mxu0 0.0
      %4266 = vmatprep.subr.mxu0 0.0
      %4267 = vmatpush1.msra.mxu0 0.0
      %4268 = vmatprep.subr.mxu0 0.0
      %4269 = vmatpush1.msra.mxu0 0.0
      %4270 = vmatprep.subr.mxu0 0.0
      %4271 = vmatpush1.msra.mxu0 0.0
      %4272 = vmatprep.subr.mxu0 0.0
      %4273 = vmatpush1.msra.mxu0 0.0
      %4274 = vmatprep.subr.mxu0 0.0
      %4275 = vmatpush1.msra.mxu0 0.0
      %4276 = vmatprep.subr.mxu0 0.0
      %4277 = vmatpush1.msra.mxu0 0.0
      %4278 = vmatprep.subr.mxu0 0.0
      %4279 = vmatpush1.msra.mxu0 0.0
      %4280 = vmatprep.mubr.f32.mxu0 0.0
      %4281 = vmatmul.mubr.f32.gmra.mrb[0].mxu0 %v4208
      %v4282 = vpop.f32.mrb[0].mxu0
      %v4283 = vadd.f32 %v4197, %v4282
      %v4284 = vpop.f32.mrb[0].mxu0
      %4285 = vmatprep.mubr.f32.mxu0 0.0
      %4286 = vmatmul.mubr.f32.gmra.mrb[0].mxu0 %v4211
      %v4287 = vpop.f32.mrb[0].mxu0
      %v4288 = vadd.f32 %v4201, %v4287
      %v4289 = vpop.f32.mrb[0].mxu0
      %4290 = vmatprep.mubr.f32.mxu0 0.0
      %4291 = vmatmul.mubr.f32.gmra.mrb[0].mxu0 %v4214
      %v4292 = vpop.f32.mrb[0].mxu0
      %v4293 = vadd.f32 %v4205, %v4292
      %v4294 = vpop.f32.mrb[0].mxu0
      %4295 = vdwg.mxu0
      %v4296 = vxor.u32 %v4283, 2147483648
      %v4297 = vxor.u32 %v4288, 2147483648
      %v4298 = vxor.u32 %v4293, 2147483648
      %v4299 = vmul.f32 %v4296, 1.442695
      %v4300 = vpow.pop %v4299
      %v4301 = vmul.f32 %v4297, 1.442695
      %v4302 = vpow.pop %v4301
      %v4303 = vmul.f32 %v4298, 1.442695
      %v4304 = vpow.pop %v4303
      %v4305 = vadd.f32 %v4300, 1.0
      %v4306 = vadd.f32 %v4302, 1.0
      %v4307 = vadd.f32 %v4304, 1.0
      %v4308 = vrcp.pop %v4305
      %v4309 = vmul.f32 1.0, %v4308
      %v4310 = vrcp.pop %v4306
      %v4311 = vmul.f32 1.0, %v4310
      %v4312 = vrcp.pop %v4307
      %v4313 = vmul.f32 1.0, %v4312
      %v4315 = vsel %vm2133, %v4309, 0
      %v4318 = vsel %vm2133, %v4311, 0
      %v4321 = vsel %vm2133, %v4313, 0
      %4323 = vmatprep.subr.mxu0 %v2417
      %4324 = vmatpush1.msra.mxu0 %v2415
      %4325 = vmatprep.subr.mxu0 0.0
      %4326 = vmatpush1.msra.mxu0 0.0
      %4327 = vmatprep.subr.mxu0 0.0
      %4328 = vmatpush1.msra.mxu0 0.0
      %4329 = vmatprep.subr.mxu0 0.0
      %4330 = vmatpush1.msra.mxu0 0.0
      %4331 = vmatprep.subr.mxu0 0.0
      %4332 = vmatpush1.msra.mxu0 0.0
      %4333 = vmatprep.subr.mxu0 0.0
      %4334 = vmatpush1.msra.mxu0 0.0
      %4335 = vmatprep.subr.mxu0 0.0
      %4336 = vmatpush1.msra.mxu0 0.0
      %4337 = vmatprep.subr.mxu0 0.0
      %4338 = vmatpush1.msra.mxu0 0.0
      %4339 = vmatprep.subr.mxu0 0.0
      %4340 = vmatpush1.msra.mxu0 0.0
      %4341 = vmatprep.subr.mxu0 0.0
      %4342 = vmatpush1.msra.mxu0 0.0
      %4343 = vmatprep.subr.mxu0 0.0
      %4344 = vmatpush1.msra.mxu0 0.0
      %4345 = vmatprep.subr.mxu0 0.0
      %4346 = vmatpush1.msra.mxu0 0.0
      %4347 = vmatprep.subr.mxu0 0.0
      %4348 = vmatpush1.msra.mxu0 0.0
      %4349 = vmatprep.subr.mxu0 0.0
      %4350 = vmatpush1.msra.mxu0 0.0
      %4351 = vmatprep.subr.mxu0 0.0
      %4352 = vmatpush1.msra.mxu0 0.0
      %4353 = vmatprep.subr.mxu0 0.0
      %4354 = vmatpush1.msra.mxu0 0.0
      %4355 = vmatprep.subr.mxu0 0.0
      %4356 = vmatpush1.msra.mxu0 0.0
      %4357 = vmatprep.subr.mxu0 0.0
      %4358 = vmatpush1.msra.mxu0 0.0
      %4359 = vmatprep.subr.mxu0 0.0
      %4360 = vmatpush1.msra.mxu0 0.0
      %4361 = vmatprep.subr.mxu0 0.0
      %4362 = vmatpush1.msra.mxu0 0.0
      %4363 = vmatprep.subr.mxu0 0.0
      %4364 = vmatpush1.msra.mxu0 0.0
      %4365 = vmatprep.subr.mxu0 0.0
      %4366 = vmatpush1.msra.mxu0 0.0
      %4367 = vmatprep.subr.mxu0 0.0
      %4368 = vmatpush1.msra.mxu0 0.0
      %4369 = vmatprep.subr.mxu0 0.0
      %4370 = vmatpush1.msra.mxu0 0.0
      %4371 = vmatprep.subr.mxu0 0.0
      %4372 = vmatpush1.msra.mxu0 0.0
      %4373 = vmatprep.subr.mxu0 0.0
      %4374 = vmatpush1.msra.mxu0 0.0
      %4375 = vmatprep.subr.mxu0 0.0
      %4376 = vmatpush1.msra.mxu0 0.0
      %4377 = vmatprep.subr.mxu0 0.0
      %4378 = vmatpush1.msra.mxu0 0.0
      %4379 = vmatprep.subr.mxu0 0.0
      %4380 = vmatpush1.msra.mxu0 0.0
      %4381 = vmatprep.subr.mxu0 0.0
      %4382 = vmatpush1.msra.mxu0 0.0
      %4383 = vmatprep.subr.mxu0 0.0
      %4384 = vmatpush1.msra.mxu0 0.0
      %4385 = vmatprep.subr.mxu0 0.0
      %4386 = vmatpush1.msra.mxu0 0.0
      %4387 = vmatprep.mubr.f32.mxu0 0.0
      %4388 = vmatmul.mubr.f32.gmra.mrb[0].mxu0 %v4315
      %v4389 = vpop.f32.mrb[0].mxu0
      %v4390 = vadd.f32 0.0, %v4389
      %v4391 = vpop.f32.mrb[0].mxu0
      %v4392 = vadd.f32 0.0, %v4391
      %4393 = vmatprep.mubr.f32.mxu0 0.0
      %4394 = vmatmul.mubr.f32.gmra.mrb[0].mxu0 %v4318
      %v4395 = vpop.f32.mrb[0].mxu0
      %v4396 = vadd.f32 0.0, %v4395
      %v4397 = vpop.f32.mrb[0].mxu0
      %v4398 = vadd.f32 0.0, %v4397
      %4399 = vmatprep.mubr.f32.mxu0 0.0
      %4400 = vmatmul.mubr.f32.gmra.mrb[0].mxu0 %v4321
      %v4401 = vpop.f32.mrb[0].mxu0
      %v4402 = vadd.f32 0.0, %v4401
      %v4403 = vpop.f32.mrb[0].mxu0
      %v4404 = vadd.f32 0.0, %v4403
      %4405 = vdwg.mxu0
      %v4406 = vld [vmem:[%s16] sm:$0xf]
      %v4407 = vld [vmem:[%s16 + $0x4] sm:$0xf]
      %v4408 = vmul.f32 %v3911, %v4390
      %v4409 = vmul.f32 %v3912, %v4392
      %v4410 = vmul.f32 %v3913, %v4396
      %v4411 = vmul.f32 %v3914, %v4398
      %v4412 = vmul.f32 %v3915, %v4402
      %v4413 = vmul.f32 %v3916, %v4404
      %v4414 = vpack.c.bf16 %v4410, %v4408
      %v4415 = vpack.c.bf16 %v4411, %v4409
      %v4416 = vpack.c.bf16 %v4412, %v4412
      %v4417 = vpack.c.bf16 %v4413, %v4413
      %4418 = vset.pattern.permute.xlu0 4
      %4419 = vperm.xlu0 %4418, %v2561
      %v4420 = vpop.permute.xlu0 %4419
      %4422 = vset.pattern.permute.xlu0 4
      %4423 = vperm.xlu0 %4422, %v2562
      %v4424 = vpop.permute.xlu0 %4423
      %v4428 = vunpack.c.l.b16 %v4406
      %v4429 = vunpack.c.l.b16 %v4407
      %v4430 = vpack.c.b16 %v4429, %v4428
      %vm4431 = vcmask 195584
      %v4433 = vsel %vm4431, %v4430, 0
      %v4436 = vsel %vm823, %v4416, 0
      %v4439 = vsel %vm823, %v4417, 0
      %4441 = vmatprep.subr.bf16.mxu0 %v4415
      %4442 = vmatpush1.bf16.msra.mxu0 %v4414
      %4443 = vmatprep.subr.bf16.mxu0 %v4439
      %4444 = vmatpush1.bf16.msra.mxu0 %v4436
      %4445 = vmatprep.subr.bf16.mxu0 0
      %4446 = vmatpush1.bf16.msra.mxu0 0
      %4447 = vmatprep.subr.bf16.mxu0 0
      %4448 = vmatpush1.bf16.msra.mxu0 0
      %4449 = vmatprep.subr.bf16.mxu0 0
      %4450 = vmatpush1.bf16.msra.mxu0 0
      %4451 = vmatprep.subr.bf16.mxu0 0
      %4452 = vmatpush1.bf16.msra.mxu0 0
      %4453 = vmatprep.subr.bf16.mxu0 0
      %4454 = vmatpush1.bf16.msra.mxu0 0
      %4455 = vmatprep.subr.bf16.mxu0 0
      %4456 = vmatpush1.bf16.msra.mxu0 0
      %4457 = vmatprep.subr.bf16.mxu0 0
      %4458 = vmatpush1.bf16.msra.mxu0 0
      %4459 = vmatprep.subr.bf16.mxu0 0
      %4460 = vmatpush1.bf16.msra.mxu0 0
      %4461 = vmatprep.subr.bf16.mxu0 0
      %4462 = vmatpush1.bf16.msra.mxu0 0
      %4463 = vmatprep.subr.bf16.mxu0 0
      %4464 = vmatpush1.bf16.msra.mxu0 0
      %4465 = vmatprep.subr.bf16.mxu0 0
      %4466 = vmatpush1.bf16.msra.mxu0 0
      %4467 = vmatprep.subr.bf16.mxu0 0
      %4468 = vmatpush1.bf16.msra.mxu0 0
      %4469 = vmatprep.subr.bf16.mxu0 0
      %4470 = vmatpush1.bf16.msra.mxu0 0
      %4471 = vmatprep.subr.bf16.mxu0 0
      %4472 = vmatpush1.bf16.msra.mxu0 0
      %4473 = vmatprep.mubr.bf16.mxu0 0
      %4474 = vmatmul.mubr.bf16.gmra.mrb[0].mxu0 %v4433
      %v4475 = vpop.f32.mrb[0].mxu0
      %v4476 = vadd.f32 %v4420, %v4475
      %v4477 = vpop.f32.mrb[0].mxu0
      %v4478 = vadd.f32 %v4420, %v4477
      %v4479 = vpop.f32.mrb[0].mxu0
      %v4480 = vadd.f32 %v4424, %v4479
      %v4481 = vpop.f32.mrb[0].mxu0
      %v4482 = vadd.f32 %v4424, %v4481
      %4483 = vdwg.mxu0
      %4484 = vrot.lane.b32.xlu0 %v2561, 122
      %v4485 = vpop.permute.xlu0 %4484
      %s4486 = vtos %v4485
      %v4487 = vstv %s4486
      %v4489 = vmul.f32 %v4487, %v4476
      %v4490 = vmul.f32 %v4487, %v4478
      %v4491 = vmul.f32 %v4487, %v4480
      %v4492 = vmul.f32 %v4487, %v4482
      %v4493 = vadd.f32 %v2731, %v4489
      %v4494 = vadd.f32 %v2732, %v4490
      %v4495 = vadd.f32 %v2733, %v4491
      %v4496 = vadd.f32 %v2734, %v4492
      %v4497 = vld [vmem:[%s18] sm:$0xf]
      %v4498 = vld [vmem:[%s18 + $0x4] sm:$0xf]
      %v4499 = vld [vmem:[%s18 + $0x8] sm:$0xf]
      %v4500 = vld [vmem:[%s18 + $0xc] sm:$0xf]
      %v4501 = vpack.c.bf16 %v4495, %v4493
      %v4502 = vpack.c.bf16 %v4496, %v4494
      %v4503 = vld [vmem:[%s21] sm:$0xff]
      %v4504 = vld [vmem:[%s21 + $0x8] sm:$0xff]
      %v4505 = vld [vmem:[%s21 + $0x10] sm:$0xff]
      %v4506 = vld [vmem:[%s21 + $0x18] sm:$0xff]
      %4508 = vset.pattern.permute.xlu0 0
      %4509 = vperm.xlu0 %4508, %v4503
      %v4510 = vpop.permute.xlu0 %4509
      %4513 = vset.pattern.permute.xlu0 0
      %4514 = vperm.xlu0 %4513, %v4504
      %v4515 = vpop.permute.xlu0 %4514
      %4518 = vset.pattern.permute.xlu0 0
      %4519 = vperm.xlu0 %4518, %v4505
      %v4520 = vpop.permute.xlu0 %4519
      %4523 = vset.pattern.permute.xlu0 0
      %4524 = vperm.xlu0 %4523, %v4506
      %v4525 = vpop.permute.xlu0 %4524
      %v4531 = vunpack.c.l.b16 %v4497
      %v4532 = vunpack.c.l.b16 %v4498
      %v4533 = vunpack.c.l.b16 %v4499
      %v4534 = vunpack.c.l.b16 %v4500
      %v4535 = vpack.c.b16 %v4532, %v4531
      %v4536 = vpack.c.b16 %v4534, %v4533
      %v4538 = vsel %vm2507, %v4535, 0
      %v4541 = vsel %vm2507, %v4536, 0
      %4543 = vmatprep.subr.bf16.mxu0 %v4502
      %4544 = vmatpush1.bf16.msra.mxu0 %v4501
      %4545 = vmatprep.subr.bf16.mxu0 0
      %4546 = vmatpush1.bf16.msra.mxu0 0
      %4547 = vmatprep.subr.bf16.mxu0 0
      %4548 = vmatpush1.bf16.msra.mxu0 0
      %4549 = vmatprep.subr.bf16.mxu0 0
      %4550 = vmatpush1.bf16.msra.mxu0 0
      %4551 = vmatprep.subr.bf16.mxu0 0
      %4552 = vmatpush1.bf16.msra.mxu0 0
      %4553 = vmatprep.subr.bf16.mxu0 0
      %4554 = vmatpush1.bf16.msra.mxu0 0
      %4555 = vmatprep.subr.bf16.mxu0 0
      %4556 = vmatpush1.bf16.msra.mxu0 0
      %4557 = vmatprep.subr.bf16.mxu0 0
      %4558 = vmatpush1.bf16.msra.mxu0 0
      %4559 = vmatprep.subr.bf16.mxu0 0
      %4560 = vmatpush1.bf16.msra.mxu0 0
      %4561 = vmatprep.subr.bf16.mxu0 0
      %4562 = vmatpush1.bf16.msra.mxu0 0
      %4563 = vmatprep.subr.bf16.mxu0 0
      %4564 = vmatpush1.bf16.msra.mxu0 0
      %4565 = vmatprep.subr.bf16.mxu0 0
      %4566 = vmatpush1.bf16.msra.mxu0 0
      %4567 = vmatprep.subr.bf16.mxu0 0
      %4568 = vmatpush1.bf16.msra.mxu0 0
      %4569 = vmatprep.subr.bf16.mxu0 0
      %4570 = vmatpush1.bf16.msra.mxu0 0
      %4571 = vmatprep.subr.bf16.mxu0 0
      %4572 = vmatpush1.bf16.msra.mxu0 0
      %4573 = vmatprep.subr.bf16.mxu0 0
      %4574 = vmatpush1.bf16.msra.mxu0 0
      %4575 = vmatprep.mubr.bf16.mxu0 0
      %4576 = vmatmul.mubr.bf16.gmra.mrb[0].mxu0 %v4538
      %v4577 = vpop.f32.mrb[0].mxu0
      %v4578 = vadd.f32 %v4510, %v4577
      %v4579 = vpop.f32.mrb[0].mxu0
      %v4580 = vadd.f32 %v4510, %v4579
      %v4581 = vpop.f32.mrb[0].mxu0
      %v4582 = vadd.f32 %v4515, %v4581
      %v4583 = vpop.f32.mrb[0].mxu0
      %v4584 = vadd.f32 %v4515, %v4583
      %4585 = vmatprep.mubr.bf16.mxu0 0
      %4586 = vmatmul.mubr.bf16.gmra.mrb[0].mxu0 %v4541
      %v4587 = vpop.f32.mrb[0].mxu0
      %v4588 = vadd.f32 %v4520, %v4587
      %v4589 = vpop.f32.mrb[0].mxu0
      %v4590 = vadd.f32 %v4520, %v4589
      %v4591 = vpop.f32.mrb[0].mxu0
      %v4592 = vadd.f32 %v4525, %v4591
      %v4593 = vpop.f32.mrb[0].mxu0
      %v4594 = vadd.f32 %v4525, %v4593
      %4595 = vdwg.mxu0
      %v4596 = vxor.u32 %v4578, 2147483648
      %v4597 = vxor.u32 %v4580, 2147483648
      %v4598 = vxor.u32 %v4582, 2147483648
      %v4599 = vxor.u32 %v4584, 2147483648
      %v4600 = vxor.u32 %v4588, 2147483648
      %v4601 = vxor.u32 %v4590, 2147483648
      %v4602 = vxor.u32 %v4592, 2147483648
      %v4603 = vxor.u32 %v4594, 2147483648
      %v4604 = vmul.f32 %v4596, 1.442695
      %v4605 = vpow.pop %v4604
      %v4606 = vmul.f32 %v4597, 1.442695
      %v4607 = vpow.pop %v4606
      %v4608 = vmul.f32 %v4598, 1.442695
      %v4609 = vpow.pop %v4608
      %v4610 = vmul.f32 %v4599, 1.442695
      %v4611 = vpow.pop %v4610
      %v4612 = vmul.f32 %v4600, 1.442695
      %v4613 = vpow.pop %v4612
      %v4614 = vmul.f32 %v4601, 1.442695
      %v4615 = vpow.pop %v4614
      %v4616 = vmul.f32 %v4602, 1.442695
      %v4617 = vpow.pop %v4616
      %v4618 = vmul.f32 %v4603, 1.442695
      %v4619 = vpow.pop %v4618
      %v4620 = vadd.f32 %v4605, 1.0
      %v4621 = vadd.f32 %v4607, 1.0
      %v4622 = vadd.f32 %v4609, 1.0
      %v4623 = vadd.f32 %v4611, 1.0
      %v4624 = vadd.f32 %v4613, 1.0
      %v4625 = vadd.f32 %v4615, 1.0
      %v4626 = vadd.f32 %v4617, 1.0
      %v4627 = vadd.f32 %v4619, 1.0
      %v4628 = vrcp.pop %v4620
      %v4629 = vmul.f32 1.0, %v4628
      %v4630 = vrcp.pop %v4621
      %v4631 = vmul.f32 1.0, %v4630
      %v4632 = vrcp.pop %v4622
      %v4633 = vmul.f32 1.0, %v4632
      %v4634 = vrcp.pop %v4623
      %v4635 = vmul.f32 1.0, %v4634
      %v4636 = vrcp.pop %v4624
      %v4637 = vmul.f32 1.0, %v4636
      %v4638 = vrcp.pop %v4625
      %v4639 = vmul.f32 1.0, %v4638
      %v4640 = vrcp.pop %v4626
      %v4641 = vmul.f32 1.0, %v4640
      %v4642 = vrcp.pop %v4627
      %v4643 = vmul.f32 1.0, %v4642
      %v4644 = vmul.f32 %v4578, %v4629
      %v4645 = vmul.f32 %v4580, %v4631
      %v4646 = vmul.f32 %v4582, %v4633
      %v4647 = vmul.f32 %v4584, %v4635
      %v4648 = vmul.f32 %v4588, %v4637
      %v4649 = vmul.f32 %v4590, %v4639
      %v4650 = vmul.f32 %v4592, %v4641
      %v4651 = vmul.f32 %v4594, %v4643
      %v4652 = vadd.f32 %v4644, %v4645
      %4653 = vadd.xlane.f32.xlu0 %v4652
      %v4654 = vpop.xlane.xlu0 %4653
      %v4655 = vadd.f32 %v4646, %v4647
      %4656 = vadd.xlane.f32.xlu0 %v4655
      %v4657 = vpop.xlane.xlu0 %4656
      %v4658 = vadd.f32 %v4648, %v4649
      %4659 = vadd.xlane.f32.xlu0 %v4658
      %v4660 = vpop.xlane.xlu0 %4659
      %v4661 = vadd.f32 %v4650, %v4651
      %4662 = vadd.xlane.f32.xlu0 %v4661
      %v4663 = vpop.xlane.xlu0 %4662
      %v4664 = vmul.f32 %v4654, 0.00390625
      %v4665 = vmul.f32 %v4657, 0.00390625
      %v4666 = vmul.f32 %v4660, 0.00390625
      %v4667 = vmul.f32 %v4663, 0.00390625
      %v4668 = vld [vmem:[%s19] sm:$0xff]
      %v4669 = vld [vmem:[%s19 + $0x8] sm:$0xff]
      %v4670 = vld [vmem:[%s19 + $0x10] sm:$0xff]
      %v4671 = vld [vmem:[%s19 + $0x18] sm:$0xff]
      %v4672 = vld [vmem:[%s19 + $0x20] sm:$0xff]
      %v4673 = vld [vmem:[%s21] sm:$0xff]
      %v4674 = vld [vmem:[%s21 + $0x8] sm:$0xff]
      %v4675 = vld [vmem:[%s21 + $0x10] sm:$0xff]
      %v4676 = vld [vmem:[%s21 + $0x18] sm:$0xff]
      %v4677 = vld [vmem:[%s21 + $0x20] sm:$0xff]
      %4683 = vrot.lane.b32.xlu0 %v4673, 127
      %v4684 = vpop.permute.xlu0 %4683
      %4685 = vrot.lane.b32.xlu0 %v4674, 127
      %v4686 = vpop.permute.xlu0 %4685
      %4687 = vrot.lane.b32.xlu0 %v4675, 127
      %v4688 = vpop.permute.xlu0 %4687
      %4689 = vrot.lane.b32.xlu0 %v4676, 127
      %v4690 = vpop.permute.xlu0 %4689
      %4691 = vrot.lane.b32.xlu0 %v4677, 127
      %v4692 = vpop.permute.xlu0 %4691
      %v4699 = vsel %vm2223, %v4668, 0
      %v4702 = vsel %vm2223, %v4669, 0
      %v4705 = vsel %vm2223, %v4670, 0
      %v4708 = vsel %vm2223, %v4671, 0
      %v4711 = vsel %vm2223, %v4672, 0
      %4713 = vmatprep.subr.mxu0 0.0
      %4714 = vmatpush1.msra.mxu0 %v4664
      %4715 = vmatprep.subr.mxu0 0.0
      %4716 = vmatpush1.msra.mxu0 %v4665
      %4717 = vmatprep.subr.mxu0 0.0
      %4718 = vmatpush1.msra.mxu0 %v4666
      %4719 = vmatprep.subr.mxu0 0.0
      %4720 = vmatpush1.msra.mxu0 %v4667
      %4721 = vmatprep.subr.mxu0 0.0
      %4722 = vmatpush1.msra.mxu0 0.0
      %4723 = vmatprep.subr.mxu0 0.0
      %4724 = vmatpush1.msra.mxu0 0.0
      %4725 = vmatprep.subr.mxu0 0.0
      %4726 = vmatpush1.msra.mxu0 0.0
      %4727 = vmatprep.subr.mxu0 0.0
      %4728 = vmatpush1.msra.mxu0 0.0
      %4729 = vmatprep.subr.mxu0 0.0
      %4730 = vmatpush1.msra.mxu0 0.0
      %4731 = vmatprep.subr.mxu0 0.0
      %4732 = vmatpush1.msra.mxu0 0.0
      %4733 = vmatprep.subr.mxu0 0.0
      %4734 = vmatpush1.msra.mxu0 0.0
      %4735 = vmatprep.subr.mxu0 0.0
      %4736 = vmatpush1.msra.mxu0 0.0
      %4737 = vmatprep.subr.mxu0 0.0
      %4738 = vmatpush1.msra.mxu0 0.0
      %4739 = vmatprep.subr.mxu0 0.0
      %4740 = vmatpush1.msra.mxu0 0.0
      %4741 = vmatprep.subr.mxu0 0.0
      %4742 = vmatpush1.msra.mxu0 0.0
      %4743 = vmatprep.subr.mxu0 0.0
      %4744 = vmatpush1.msra.mxu0 0.0
      %4745 = vmatprep.subr.mxu0 0.0
      %4746 = vmatpush1.msra.mxu0 0.0
      %4747 = vmatprep.subr.mxu0 0.0
      %4748 = vmatpush1.msra.mxu0 0.0
      %4749 = vmatprep.subr.mxu0 0.0
      %4750 = vmatpush1.msra.mxu0 0.0
      %4751 = vmatprep.subr.mxu0 0.0
      %4752 = vmatpush1.msra.mxu0 0.0
      %4753 = vmatprep.subr.mxu0 0.0
      %4754 = vmatpush1.msra.mxu0 0.0
      %4755 = vmatprep.subr.mxu0 0.0
      %4756 = vmatpush1.msra.mxu0 0.0
      %4757 = vmatprep.subr.mxu0 0.0
      %4758 = vmatpush1.msra.mxu0 0.0
      %4759 = vmatprep.subr.mxu0 0.0
      %4760 = vmatpush1.msra.mxu0 0.0
      %4761 = vmatprep.subr.mxu0 0.0
      %4762 = vmatpush1.msra.mxu0 0.0
      %4763 = vmatprep.subr.mxu0 0.0
      %4764 = vmatpush1.msra.mxu0 0.0
      %4765 = vmatprep.subr.mxu0 0.0
      %4766 = vmatpush1.msra.mxu0 0.0
      %4767 = vmatprep.subr.mxu0 0.0
      %4768 = vmatpush1.msra.mxu0 0.0
      %4769 = vmatprep.subr.mxu0 0.0
      %4770 = vmatpush1.msra.mxu0 0.0
      %4771 = vmatprep.subr.mxu0 0.0
      %4772 = vmatpush1.msra.mxu0 0.0
      %4773 = vmatprep.subr.mxu0 0.0
      %4774 = vmatpush1.msra.mxu0 0.0
      %4775 = vmatprep.subr.mxu0 0.0
      %4776 = vmatpush1.msra.mxu0 0.0
      %4777 = vmatprep.mubr.f32.mxu0 0.0
      %4778 = vmatmul.mubr.f32.gmra.mrb[0].mxu0 %v4699
      %v4779 = vpop.f32.mrb[0].mxu0
      %v4780 = vadd.f32 %v4684, %v4779
      %v4781 = vpop.f32.mrb[0].mxu0
      %4782 = vmatprep.mubr.f32.mxu0 0.0
      %4783 = vmatmul.mubr.f32.gmra.mrb[0].mxu0 %v4702
      %v4784 = vpop.f32.mrb[0].mxu0
      %v4785 = vadd.f32 %v4686, %v4784
      %v4786 = vpop.f32.mrb[0].mxu0
      %4787 = vmatprep.mubr.f32.mxu0 0.0
      %4788 = vmatmul.mubr.f32.gmra.mrb[0].mxu0 %v4705
      %v4789 = vpop.f32.mrb[0].mxu0
      %v4790 = vadd.f32 %v4688, %v4789
      %v4791 = vpop.f32.mrb[0].mxu0
      %4792 = vmatprep.mubr.f32.mxu0 0.0
      %4793 = vmatmul.mubr.f32.gmra.mrb[0].mxu0 %v4708
      %v4794 = vpop.f32.mrb[0].mxu0
      %v4795 = vadd.f32 %v4690, %v4794
      %v4796 = vpop.f32.mrb[0].mxu0
      %4797 = vmatprep.mubr.f32.mxu0 0.0
      %4798 = vmatmul.mubr.f32.gmra.mrb[0].mxu0 %v4711
      %v4799 = vpop.f32.mrb[0].mxu0
      %v4800 = vadd.f32 %v4692, %v4799
      %v4801 = vpop.f32.mrb[0].mxu0
      %4802 = vdwg.mxu0
      %v4803 = vxor.u32 %v4780, 2147483648
      %v4804 = vxor.u32 %v4785, 2147483648
      %v4805 = vxor.u32 %v4790, 2147483648
      %v4806 = vxor.u32 %v4795, 2147483648
      %v4807 = vxor.u32 %v4800, 2147483648
      %v4808 = vmul.f32 %v4803, 1.442695
      %v4809 = vpow.pop %v4808
      %v4810 = vmul.f32 %v4804, 1.442695
      %v4811 = vpow.pop %v4810
      %v4812 = vmul.f32 %v4805, 1.442695
      %v4813 = vpow.pop %v4812
      %v4814 = vmul.f32 %v4806, 1.442695
      %v4815 = vpow.pop %v4814
      %v4816 = vmul.f32 %v4807, 1.442695
      %v4817 = vpow.pop %v4816
      %v4818 = vadd.f32 %v4809, 1.0
      %v4819 = vadd.f32 %v4811, 1.0
      %v4820 = vadd.f32 %v4813, 1.0
      %v4821 = vadd.f32 %v4815, 1.0
      %v4822 = vadd.f32 %v4817, 1.0
      %v4823 = vrcp.pop %v4818
      %v4824 = vmul.f32 1.0, %v4823
      %v4825 = vrcp.pop %v4819
      %v4826 = vmul.f32 1.0, %v4825
      %v4827 = vrcp.pop %v4820
      %v4828 = vmul.f32 1.0, %v4827
      %v4829 = vrcp.pop %v4821
      %v4830 = vmul.f32 1.0, %v4829
      %v4831 = vrcp.pop %v4822
      %v4832 = vmul.f32 1.0, %v4831
      %v4833 = vmul.f32 %v4780, %v4824
      %v4834 = vmul.f32 %v4785, %v4826
      %v4835 = vmul.f32 %v4790, %v4828
      %v4836 = vmul.f32 %v4795, %v4830
      %v4837 = vmul.f32 %v4800, %v4832
      %v4838 = vld [vmem:[%s20] sm:$0xff]
      %v4839 = vld [vmem:[%s20 + $0x8] sm:$0x3]
      %v4840 = vld [vmem:[%s21] sm:$0xff]
      %v4841 = vld [vmem:[%s21 + $0x8] sm:$0x3]
      %4844 = vrot.lane.b32.xlu0 %v4840, 126
      %v4845 = vpop.permute.xlu0 %4844
      %4846 = vrot.lane.b32.xlu0 %v4841, 126
      %v4847 = vpop.permute.xlu0 %4846
      %vm4850 = vcmask 326656
      %v4852 = vsel %vm4850, %v4838, 0
      %v4855 = vsel %vm4850, %v4839, 0
      %4857 = vmatprep.subr.mxu0 0.0
      %4858 = vmatpush1.msra.mxu0 %v4833
      %4859 = vmatprep.subr.mxu0 0.0
      %4860 = vmatpush1.msra.mxu0 %v4834
      %4861 = vmatprep.subr.mxu0 0.0
      %4862 = vmatpush1.msra.mxu0 %v4835
      %4863 = vmatprep.subr.mxu0 0.0
      %4864 = vmatpush1.msra.mxu0 %v4836
      %4865 = vmatprep.subr.mxu0 0.0
      %4866 = vmatpush1.msra.mxu0 %v4837
      %4867 = vmatprep.subr.mxu0 0.0
      %4868 = vmatpush1.msra.mxu0 0.0
      %4869 = vmatprep.subr.mxu0 0.0
      %4870 = vmatpush1.msra.mxu0 0.0
      %4871 = vmatprep.subr.mxu0 0.0
      %4872 = vmatpush1.msra.mxu0 0.0
      %4873 = vmatprep.subr.mxu0 0.0
      %4874 = vmatpush1.msra.mxu0 0.0
      %4875 = vmatprep.subr.mxu0 0.0
      %4876 = vmatpush1.msra.mxu0 0.0
      %4877 = vmatprep.subr.mxu0 0.0
      %4878 = vmatpush1.msra.mxu0 0.0
      %4879 = vmatprep.subr.mxu0 0.0
      %4880 = vmatpush1.msra.mxu0 0.0
      %4881 = vmatprep.subr.mxu0 0.0
      %4882 = vmatpush1.msra.mxu0 0.0
      %4883 = vmatprep.subr.mxu0 0.0
      %4884 = vmatpush1.msra.mxu0 0.0
      %4885 = vmatprep.subr.mxu0 0.0
      %4886 = vmatpush1.msra.mxu0 0.0
      %4887 = vmatprep.subr.mxu0 0.0
      %4888 = vmatpush1.msra.mxu0 0.0
      %4889 = vmatprep.subr.mxu0 0.0
      %4890 = vmatpush1.msra.mxu0 0.0
      %4891 = vmatprep.subr.mxu0 0.0
      %4892 = vmatpush1.msra.mxu0 0.0
      %4893 = vmatprep.subr.mxu0 0.0
      %4894 = vmatpush1.msra.mxu0 0.0
      %4895 = vmatprep.subr.mxu0 0.0
      %4896 = vmatpush1.msra.mxu0 0.0
      %4897 = vmatprep.subr.mxu0 0.0
      %4898 = vmatpush1.msra.mxu0 0.0
      %4899 = vmatprep.subr.mxu0 0.0
      %4900 = vmatpush1.msra.mxu0 0.0
      %4901 = vmatprep.subr.mxu0 0.0
      %4902 = vmatpush1.msra.mxu0 0.0
      %4903 = vmatprep.subr.mxu0 0.0
      %4904 = vmatpush1.msra.mxu0 0.0
      %4905 = vmatprep.subr.mxu0 0.0
      %4906 = vmatpush1.msra.mxu0 0.0
      %4907 = vmatprep.subr.mxu0 0.0
      %4908 = vmatpush1.msra.mxu0 0.0
      %4909 = vmatprep.subr.mxu0 0.0
      %4910 = vmatpush1.msra.mxu0 0.0
      %4911 = vmatprep.subr.mxu0 0.0
      %4912 = vmatpush1.msra.mxu0 0.0
      %4913 = vmatprep.subr.mxu0 0.0
      %4914 = vmatpush1.msra.mxu0 0.0
      %4915 = vmatprep.subr.mxu0 0.0
      %4916 = vmatpush1.msra.mxu0 0.0
      %4917 = vmatprep.subr.mxu0 0.0
      %4918 = vmatpush1.msra.mxu0 0.0
      %4919 = vmatprep.subr.mxu0 0.0
      %4920 = vmatpush1.msra.mxu0 0.0
      %4921 = vmatprep.mubr.f32.mxu0 0.0
      %4922 = vmatmul.mubr.f32.gmra.mrb[0].mxu0 %v4852
      %v4923 = vpop.f32.mrb[0].mxu0
      %v4924 = vadd.f32 %v4845, %v4923
      %v4925 = vpop.f32.mrb[0].mxu0
      %4926 = vmatprep.mubr.f32.mxu0 0.0
      %4927 = vmatmul.mubr.f32.gmra.mrb[0].mxu0 %v4855
      %v4928 = vpop.f32.mrb[0].mxu0
      %v4929 = vadd.f32 %v4847, %v4928
      %v4930 = vpop.f32.mrb[0].mxu0
      %4931 = vdwg.mxu0
      %vm4932 = vcmask 7168
      %4933 = vst.msk [vmem:[%s683] sm:$0xff] %vm4932, %v4924
      %vm4934 = vcmask 1024
      %4935 = vst.msk [vmem:[%s683 + $0x8] sm:$0x3] %vm4934, %v4929
      %p4936 = scmp.lt.s32.totalorder %s33, 1
      %s4937 = scalar_select %p4936, %s33, 1
      %s4938 = smul.addr %s4937, 2
      %s4939 = smul.addr %s4938, 8
      %s4940 = scalar_lea.vmem %s22, %s4939
      // Predicated region
      $region109: #{movinet_forward.1} parent=107 // pred_check
        %p4941 = pneg %p518
      $region110: #{movinet_forward.1} parent=107 // pred_check_branch
        %4943 = sbr.rel (%p4941) target = $region112
      $region111: #{movinet_forward.1} parent=107 // pred_region
        _
      $region112: #{movinet_forward.1} parent=107 // pred_fallthru
        _
    $region108: #{movinet_forward.1} parent=5 // pred_fallthru
      _
    %p4944 = scmp.le.s32.totalorder 2, %s28
    // Predicated region
    $region113: #{movinet_forward.1} parent=5 // pred_check
      %p4945 = pneg %p4944
    $region114: #{movinet_forward.1} parent=5 // pred_check_branch
      %4947 = sbr.rel (%p4945) target = $region116
    $region115: #{movinet_forward.1} parent=5 // pred_region
      %s4948 = ssub.s32 %s28, 2
      // Predicated region
      $region117: #{movinet_forward.1} parent=115 // pred_check
        %p4949 = pneg %p524
      $region118: #{movinet_forward.1} parent=115 // pred_check_branch
        %4951 = sbr.rel (%p4949) target = $region120
      $region119: #{movinet_forward.1} parent=115 // pred_region
        %p4952 = scmp.lt.s32.totalorder %s34, 1
        %s4953 = scalar_select %p4952, %s34, 1
        %s4954 = smul.addr %s4953, 2
        %s4955 = smul.addr %s4954, 8
        %s4956 = scalar_lea.vmem %s22, %s4955
      $region120: #{movinet_forward.1} parent=115 // pred_fallthru
        _
    $region116: #{movinet_forward.1} parent=5 // pred_fallthru
      _
  $region6: #{movinet_forward.1} parent=0 // loop_footer
    %s32 = sadd.s32 1, %s28
  $region7: #{movinet_forward.1} parent=0 // loop_footer_branch
    %27 = sbr.rel target = $region3
  $region8: #{movinet_forward.1} parent=0 // loop_exit
    _

</llo_original>
